<compile_context>
chip_gen: v7x
topology: tpu7x:2x2x1
jax: 0.10.0
libtpu: 0.0.40
codegen_flags: <defaults>
</compile_context>

<pallas_src>
import functools

import jax
import jax.numpy as jnp
from jax.experimental import pallas as pl
from jax.experimental.pallas import tpu as pltpu


def _round_up(x, m):
    return ((x + m - 1) // m) * m


# ---------------------------------------------------------------------------
# Recurrent LSTM kernel.  Grid = (direction, time-block).  Consumes precomputed
# input-projection gates (bf16), does only  h @ W_hh^T + nonlinearities on the
# serial path.  h/c live in f32 VMEM scratch across time blocks.
# ---------------------------------------------------------------------------
def _lstm_rec_kernel(gin_ref, whh_ref, hseq_ref, hfin_ref, h_sc, c_sc,
                     *, tc, t_total):
    tb = pl.program_id(1)           # time-block axis (axis 0 = direction)

    @pl.when(tb == 0)
    def _():
        # Module's initial hidden/cell states are zeros (per direction).
        h_sc[...] = jnp.zeros_like(h_sc)
        c_sc[...] = jnp.zeros_like(c_sc)

    H = h_sc.shape[-1]
    # f32 copy of the recurrent weight (interpret-safe f32 MXU operands).
    whh = whh_ref[0].astype(jnp.float32)          # (H, 4H)

    # Carry h/c in vregs across the unrolled in-block steps.
    h = h_sc[...]
    c = c_sc[...]

    masked = (t_total % tc) != 0
    t_base = tb * tc
    for s in range(tc):                           # static, fully unrolled
        gates = gin_ref[0, s].astype(jnp.float32) + jnp.dot(
            h, whh, preferred_element_type=jnp.float32)          # (B, 4H) f32
        i_g = jax.nn.sigmoid(gates[:, 0 * H:1 * H])
        f_g = jax.nn.sigmoid(gates[:, 1 * H:2 * H])
        g_g = jnp.tanh(gates[:, 2 * H:3 * H])
        o_g = jax.nn.sigmoid(gates[:, 3 * H:4 * H])
        c_new = f_g * c + i_g * g_g
        h_new = o_g * jnp.tanh(c_new)
        if masked:
            valid = (t_base + s) < t_total        # ragged last time block
            h = jnp.where(valid, h_new, h)
            c = jnp.where(valid, c_new, c)
        else:
            h, c = h_new, c_new
        hseq_ref[0, s] = h.astype(hseq_ref.dtype)

    h_sc[...] = h
    c_sc[...] = c

    @pl.when(tb == pl.num_programs(1) - 1)
    def _():
        # Constant-index output block across the time axis: written exactly once
        # (last time block) and flushed when the direction block changes / ends.
        hfin_ref[0] = h


def _pick_time_block(T, B, H, *, vmem_budget_bytes=26 << 20, unroll_cap=16):
    """VMEM-budgeted time-block size and an explicit vmem limit."""
    G4 = 4 * H
    # Per-timestep cost of the pipelined blocks (double-buffered):
    per_step = 2 * (B * G4 * 2)          # gin (bf16)
    per_step += 2 * (B * H * 2)          # hseq out (bf16)
    fixed = 2 * (H * G4 * 2)             # W_hh (bf16) block, double-buffered
    fixed += H * G4 * 4                  # in-kernel f32 copy of W_hh
    fixed += 2 * (B * H * 4)             # h / c f32 scratch
    fixed += 2 * (B * H * 4)             # h_final output block
    avail = max(vmem_budget_bytes - fixed, per_step)
    tc = int(max(1, min(unroll_cap, avail // per_step, T)))
    # vreg-pressure heuristic: a (B,4H) f32 gate tile at large H forces spills if
    # the unrolled in-block loop is too long.
    gate_vregs = (B * G4 * 4) // 4096
    if gate_vregs > 32:
        tc = max(1, min(tc, 4))
    elif gate_vregs > 16:
        tc = max(1, min(tc, 8))
    est = fixed + tc * per_step
    vmem_limit = int(min(64 << 20, max(32 << 20, 2 * est)))
    return tc, vmem_limit


def lstm_recurrent(gates_in, whh_t):
    """gates_in: (D, T, B, 4H) bf16 — x@W_ih^T + b, already time-flipped for the
    backward direction.  whh_t: (D, H, 4H) bf16.
    Returns (h_seq (D, T, B, H) bf16, h_final (D, B, H) f32)."""
    D, T, B, G4 = gates_in.shape
    H = G4 // 4
    tc, vmem_limit = _pick_time_block(T, B, H)
    nb = pl.cdiv(T, tc)
    T_pad = nb * tc
    if T_pad != T:
        gates_in = jnp.pad(gates_in, ((0, 0), (0, T_pad - T), (0, 0), (0, 0)))

    grid_spec = pltpu.PrefetchScalarGridSpec(
        num_scalar_prefetch=0,
        grid=(D, nb),
        in_specs=[
            pl.BlockSpec((1, tc, B, G4), lambda d, t: (d, t, 0, 0)),  # gates
            pl.BlockSpec((1, H, G4), lambda d, t: (d, 0, 0)),         # W_hh^T
        ],
        out_specs=[
            pl.BlockSpec((1, tc, B, H), lambda d, t: (d, t, 0, 0)),   # h per step
            pl.BlockSpec((1, B, H), lambda d, t: (d, 0, 0)),          # final h
        ],
        scratch_shapes=[
            pltpu.VMEM((B, H), jnp.float32),    # h state
            pltpu.VMEM((B, H), jnp.float32),    # c state
        ],
    )

    kernel = functools.partial(_lstm_rec_kernel, tc=tc, t_total=T)
    h_seq, h_fin = pl.pallas_call(
        kernel,
        out_shape=(
            jax.ShapeDtypeStruct((D, T_pad, B, H), jnp.bfloat16),
            jax.ShapeDtypeStruct((D, B, H), jnp.float32),
        ),
        grid_spec=grid_spec,
        compiler_params=pltpu.CompilerParams(
            # direction -> TensorCores on v7x; time axis is the serial recurrence
            dimension_semantics=("parallel", "arbitrary"),
            vmem_limit_bytes=vmem_limit),
    )(gates_in, whh_t)
    if T_pad != T:
        h_seq = h_seq[:, :T]
    return h_seq, h_fin


# ---------------------------------------------------------------------------
# Linear + LogSoftmax(dim=1) head: F-reduction tiled, accumulating directly
# into the (constant-index) f32 output block; bias + masking of padded entity
# columns + log-softmax fused on the last reduction step.
# ---------------------------------------------------------------------------
def _head_kernel(h_ref, w_ref, b_ref, out_ref, *, e_valid):
    k = pl.program_id(0)

    @pl.when(k == 0)
    def _():
        out_ref[...] = jnp.zeros_like(out_ref)

    out_ref[...] += jnp.dot(h_ref[...], w_ref[...].astype(jnp.float32),
                            preferred_element_type=jnp.float32)

    @pl.when(k == pl.num_programs(0) - 1)
    def _():
        logits = out_ref[...] + b_ref[...]
        if e_valid < logits.shape[1]:
            col = jax.lax.broadcasted_iota(jnp.int32, logits.shape, 1)
            logits = jnp.where(col < e_valid, logits, jnp.float32(-1e30))
        m = jnp.max(logits, axis=1, keepdims=True)
        z = logits - m
        lse = jnp.log(jnp.sum(jnp.exp(z), axis=1, keepdims=True))
        out_ref[...] = z - lse


def _pick_f_tile(F):
    for cand in (1024, 512, 256, 128):
        if F % cand == 0 and F // cand > 1:
            return cand
    return F


def linear_logsoftmax(h_flat, w1_t, b1, *, e_valid):
    """h_flat: (B, F) f32, w1_t: (F, E_pad) bf16, b1: (1, E_pad) f32 ->
    (B, E_pad) f32 log-probs (padded entity columns ~ -inf)."""
    B, F = h_flat.shape
    E = w1_t.shape[1]
    tf = _pick_f_tile(F)
    nk = F // tf
    est = 2 * (B * tf * 4) + 2 * (tf * E * 2) + tf * E * 4 + 2 * (B * E * 4)
    vmem_limit = int(min(64 << 20, max(32 << 20, 2 * est)))

    grid_spec = pltpu.PrefetchScalarGridSpec(
        num_scalar_prefetch=0,
        grid=(nk,),
        in_specs=[
            pl.BlockSpec((B, tf), lambda k: (0, k)),
            pl.BlockSpec((tf, E), lambda k: (k, 0)),
            pl.BlockSpec((1, E), lambda k: (0, 0)),
        ],
        out_specs=pl.BlockSpec((B, E), lambda k: (0, 0)),
    )
    return pl.pallas_call(
        functools.partial(_head_kernel, e_valid=e_valid),
        out_shape=jax.ShapeDtypeStruct((B, E), jnp.float32),
        grid_spec=grid_spec,
        compiler_params=pltpu.CompilerParams(
            dimension_semantics=("arbitrary",),
            vmem_limit_bytes=vmem_limit),
    )(h_flat, w1_t, b1)


# ---------------------------------------------------------------------------
# Parameters: padded + pre-transposed bf16 weights for the kernels, plus
# logical f32 copies for the pure-JAX reference used in the self-test.
# ---------------------------------------------------------------------------
def init_params(key, *, vocab_size, embedding_size, hidden_units,
                num_layers, bidir, num_entities):
    D = 2 if bidir else 1
    H = hidden_units
    H_pad = _round_up(H, 128)           # lane-dense gate slices / h stores
    E_pad = _round_up(num_entities, 128)

    keys = iter(jax.random.split(key, 3 + num_layers * D * 4))
    emb = jax.random.normal(next(keys), (vocab_size, embedding_size), jnp.float32)

    k = 1.0 / (hidden_units ** 0.5)
    lstm_pad, lstm_ref = [], []
    for layer in range(num_layers):
        in_log = embedding_size if layer == 0 else H * D
        dirs_pad, dirs_ref = [], []
        for _ in range(D):
            w_ih = jax.random.uniform(next(keys), (4 * H, in_log), jnp.float32, -k, k)
            w_hh = jax.random.uniform(next(keys), (4 * H, H), jnp.float32, -k, k)
            b_ih = jax.random.uniform(next(keys), (4 * H,), jnp.float32, -k, k)
            b_hh = jax.random.uniform(next(keys), (4 * H,), jnp.float32, -k, k)
            # Round matmul weights to bf16 once so kernel and reference use
            # identical parameter values.
            w_ih = w_ih.astype(jnp.bfloat16).astype(jnp.float32)
            w_hh = w_hh.astype(jnp.bfloat16).astype(jnp.float32)
            b = b_ih + b_hh
            dirs_ref.append((w_ih, w_hh, b))

            # --- padded, pre-transposed kernel copies (zero padding keeps the
            #     padded h lanes exactly zero through the recurrence) ---
            if layer == 0:
                in_pad = in_log
                w_ih_p = w_ih.reshape(4, H, in_log)
                w_ih_p = jnp.pad(w_ih_p, ((0, 0), (0, H_pad - H), (0, 0)))
                w_ih_p = w_ih_p.reshape(4 * H_pad, in_pad)
            else:
                in_pad = D * H_pad
                w_ih_p = w_ih.reshape(4, H, D, H)
                w_ih_p = jnp.pad(w_ih_p, ((0, 0), (0, H_pad - H),
                                          (0, 0), (0, H_pad - H)))
                w_ih_p = w_ih_p.reshape(4 * H_pad, in_pad)
            w_hh_p = w_hh.reshape(4, H, H)
            w_hh_p = jnp.pad(w_hh_p, ((0, 0), (0, H_pad - H), (0, H_pad - H)))
            w_hh_p = w_hh_p.reshape(4 * H_pad, H_pad)
            b_p = jnp.pad(b.reshape(4, H), ((0, 0), (0, H_pad - H))).reshape(4 * H_pad)

            dirs_pad.append(dict(
                wih_t=w_ih_p.T.astype(jnp.bfloat16),      # (in_pad, 4H_pad)
                whh_t=w_hh_p.T.astype(jnp.bfloat16),      # (H_pad, 4H_pad)
                bias=b_p.reshape(1, -1),                  # (1, 4H_pad) f32
            ))
        lstm_pad.append(dirs_pad)
        lstm_ref.append(dirs_ref)

    F_log = H * D * num_layers
    F_pad = H_pad * D * num_layers
    kl = 1.0 / (F_log ** 0.5)
    w1 = jax.random.uniform(next(keys), (num_entities, F_log), jnp.float32, -kl, kl)
    b1 = jax.random.uniform(next(keys), (num_entities,), jnp.float32, -kl, kl)
    w1 = w1.astype(jnp.bfloat16).astype(jnp.float32)

    w1_p = w1.reshape(num_entities, num_layers * D, H)
    w1_p = jnp.pad(w1_p, ((0, E_pad - num_entities), (0, 0), (0, H_pad - H)))
    w1_p = w1_p.reshape(E_pad, F_pad)
    b1_p = jnp.pad(b1, (0, E_pad - num_entities))

    params = dict(embedding=emb, lstm=lstm_pad,
                  w1_t=w1_p.T.astype(jnp.bfloat16),       # (F_pad, E_pad)
                  b1=b1_p.reshape(1, -1))                 # (1, E_pad)
    ref_params = dict(embedding=emb, lstm=lstm_ref, w1=w1, b1=b1)
    return params, ref_params


# ---------------------------------------------------------------------------
# Full forward pass (glue in plain JAX, serial/fused hot paths in Pallas)
# ---------------------------------------------------------------------------
@functools.partial(jax.jit, static_argnames=("num_entities",))
def rnn_model_forward(queries, params, *, num_entities):
    B_log, T = queries.shape
    B = _round_up(max(B_log, 8), 8)     # sublane-aligned batch

    q = queries.astype(jnp.int32)
    if B != B_log:
        q = jnp.pad(q, ((0, B - B_log), (0, 0)))

    # Embedding lookup (data-dependent gather) kept as XLA glue.
    # TODO(synk): could be fused via PrefetchScalarGridSpec + pl.Element rows.
    emb = jnp.take(params["embedding"], q, axis=0)          # (B, T, Ein) f32

    layer_in = emb
    h_finals = []                       # PyTorch h_n order: l0d0, l0d1, l1d0, ...
    for li, dirs in enumerate(params["lstm"]):
        x = layer_in.astype(jnp.float32)
        eq = "bte,eg->tbg" if li == 0 else "tbe,eg->tbg"
        gin_list, whh_list = [], []
        for d, p in enumerate(dirs):
            # Hoisted input projection for ALL timesteps at once (off the serial
            # path); emitted as a bf16 stream into the recurrent kernel.
            g = jnp.einsum(eq, x, p["wih_t"].astype(jnp.float32),
                           preferred_element_type=jnp.float32) + p["bias"]
            g = g.astype(jnp.bfloat16)                       # (T, B, 4H_pad)
            if d == 1:
                g = jnp.flip(g, axis=0)   # run the backward direction "forward"
            gin_list.append(g)
            whh_list.append(p["whh_t"])

        h_seq, h_fin = lstm_recurrent(jnp.stack(gin_list, axis=0),
                                      jnp.stack(whh_list, axis=0))
        seqs = [h_seq[0]]
        if len(dirs) == 2:
            seqs.append(jnp.flip(h_seq[1], axis=0))          # undo the time flip
        layer_in = seqs[0] if len(seqs) == 1 else jnp.concatenate(seqs, axis=-1)
        for d in range(len(dirs)):
            h_finals.append(h_fin[d])

    # h_t.transpose(0,1).view(B, -1): per-batch concat of final hiddens in order.
    h_flat = jnp.concatenate(h_finals, axis=-1)              # (B, L*D*H_pad) f32
    out = linear_logsoftmax(h_flat, params["w1_t"], params["b1"],
                            e_valid=num_entities)
    return out[:B_log, :num_entities]


# ---------------------------------------------------------------------------
# Pure-JAX reference (mirrors the PyTorch module, with the same bf16 rounding
# points as the kernel pipeline) — used only for the self-test.
# ---------------------------------------------------------------------------
def _lstm_layer_ref(x_seq, w_ih, w_hh, b, reverse):
    T, B, _ = x_seq.shape
    H = w_hh.shape[1]
    gin = jnp.einsum("tbi,gi->tbg", x_seq, w_ih) + b
    gin = gin.astype(jnp.bfloat16).astype(jnp.float32)       # match bf16 gate stream
    h = jnp.zeros((B, H), jnp.float32)
    c = jnp.zeros((B, H), jnp.float32)
    hs = [None] * T
    order = range(T - 1, -1, -1) if reverse else range(T)
    for t in order:
        g = gin[t] + h @ w_hh.T
        i = jax.nn.sigmoid(g[:, :H])
        f = jax.nn.sigmoid(g[:, H:2 * H])
        gg = jnp.tanh(g[:, 2 * H:3 * H])
        o = jax.nn.sigmoid(g[:, 3 * H:])
        c = f * c + i * gg
        h = o * jnp.tanh(c)
        hs[t] = h
    return jnp.stack(hs, axis=0), h


def rnn_model_reference(queries, ref_params):
    emb = jnp.take(ref_params["embedding"], queries.astype(jnp.int32), axis=0)
    x = jnp.transpose(emb, (1, 0, 2))                        # (T, B, Ein)
    h_finals = []
    for dirs in ref_params["lstm"]:
        outs = []
        for d, (w_ih, w_hh, b) in enumerate(dirs):
            h_seq, h_fin = _lstm_layer_ref(x, w_ih, w_hh, b, reverse=(d == 1))
            outs.append(h_seq.astype(jnp.bfloat16).astype(jnp.float32))
            h_finals.append(h_fin)
        x = outs[0] if len(outs) == 1 else jnp.concatenate(outs, axis=-1)
    h_flat = jnp.concatenate(h_finals, axis=-1)
    logits = h_flat @ ref_params["w1"].T + ref_params["b1"]
    return jax.nn.log_softmax(logits, axis=1)


if __name__ == "__main__":
    # Small config consistent with the module's forward pass.
    vocab_size = 64
    embedding_size = 16
    hidden_units = 32
    num_layers = 2
    bidir = True
    batch_size = 2
    seq_len = 8
    num_entities = 8

    key = jax.random.PRNGKey(0)
    k_param, k_q = jax.random.split(key)
    params, ref_params = init_params(k_param,
                                     vocab_size=vocab_size,
                                     embedding_size=embedding_size,
                                     hidden_units=hidden_units,
                                     num_layers=num_layers,
                                     bidir=bidir,
                                     num_entities=num_entities)

    queries = jax.random.randint(k_q, (batch_size, seq_len), 0, vocab_size,
                                 dtype=jnp.int32)

    out = rnn_model_forward(queries, params, num_entities=num_entities)
    out = jax.block_until_ready(out)
    assert out.shape == (batch_size, num_entities), out.shape
    assert out.dtype == jnp.float32
    # log-softmax rows must exponentiate-and-sum to ~1
    assert jnp.allclose(jnp.sum(jnp.exp(out), axis=1), 1.0, atol=1e-4)

    # Numerical check vs. a pure-JAX reference with matching bf16 rounding.
    ref = rnn_model_reference(queries, ref_params)
    max_err = float(jnp.max(jnp.abs(out - ref)))
    assert max_err < 2e-2, f"mismatch vs reference, max_err={max_err}"

    print("KERNEL_OK")
</pallas_src>

<mosaic_0001>
module attributes {stable_mosaic.version = 11 : i64} {
  func.func @_lstm_rec_kernel(%arg0: i32, %arg1: i32, %arg2: memref<1x8x8x512xbf16, #tpu.memory_space<vmem>>, %arg3: memref<1x128x512xbf16, #tpu.memory_space<vmem>>, %arg4: memref<1x8x8x128xbf16, #tpu.memory_space<vmem>>, %arg5: memref<1x8x128xf32, #tpu.memory_space<vmem>>, %arg6: memref<8x128xf32, #tpu.memory_space<vmem>>, %arg7: memref<8x128xf32, #tpu.memory_space<vmem>>) attributes {dimension_semantics = [#tpu.dimension_semantics<parallel>, #tpu.dimension_semantics<arbitrary>], iteration_bounds = array<i64: 2, 1>, scalar_prefetch = 0 : i64, scratch_operands = 2 : i64, tpu.core_type = #tpu.core_type<tc>, window_params = [{transform_indices = @transform_0, window_bounds = array<i64: 1, 8, 8, 512>}, {transform_indices = @transform_1, window_bounds = array<i64: 1, 128, 512>}, {transform_indices = @transform_2, window_bounds = array<i64: 1, 8, 8, 128>}, {transform_indices = @transform_3, window_bounds = array<i64: 1, 8, 128>}]} {
    %c0_i32 = arith.constant 0 : i32
    %0 = arith.cmpi eq, %arg1, %c0_i32 : i32
    %1 = arith.extui %0 : i1 to i32
    %c0_i32_0 = arith.constant 0 : i32
    %2 = arith.cmpi ne, %1, %c0_i32_0 : i32
    scf.if %2 {
      %cst_101 = arith.constant 0.000000e+00 : f32
      %285 = vector.broadcast %cst_101 : f32 to vector<8x128xf32>
      %c0_102 = arith.constant 0 : index
      %c0_103 = arith.constant 0 : index
      %286 = vector.load %arg6[%c0_102, %c0_103] : memref<8x128xf32, #tpu.memory_space<vmem>>, vector<8x128xf32>
      tpu.vector_store %arg6[%c0_102, %c0_103], %285 {strides = array<i32>} : memref<8x128xf32, #tpu.memory_space<vmem>>, vector<8x128xf32>,
      %cst_104 = arith.constant 0.000000e+00 : f32
      %287 = vector.broadcast %cst_104 : f32 to vector<8x128xf32>
      %c0_105 = arith.constant 0 : index
      %c0_106 = arith.constant 0 : index
      %288 = vector.load %arg7[%c0_105, %c0_106] : memref<8x128xf32, #tpu.memory_space<vmem>>, vector<8x128xf32>
      tpu.vector_store %arg7[%c0_105, %c0_106], %287 {strides = array<i32>} : memref<8x128xf32, #tpu.memory_space<vmem>>, vector<8x128xf32>,
    } else {
    }
    %c0 = arith.constant 0 : index
    %c0_1 = arith.constant 0 : index
    %c0_2 = arith.constant 0 : index
    %3 = vector.load %arg3[%c0, %c0_1, %c0_2] : memref<1x128x512xbf16, #tpu.memory_space<vmem>>, vector<1x128x512xbf16>
    %4 = vector.shape_cast %3 : vector<1x128x512xbf16> to vector<128x512xbf16>
    %5 = arith.extf %4 : vector<128x512xbf16> to vector<128x512xf32>
    %c0_3 = arith.constant 0 : index
    %c0_4 = arith.constant 0 : index
    %6 = vector.load %arg6[%c0_3, %c0_4] : memref<8x128xf32, #tpu.memory_space<vmem>>, vector<8x128xf32>
    %c0_5 = arith.constant 0 : index
    %c0_6 = arith.constant 0 : index
    %7 = vector.load %arg7[%c0_5, %c0_6] : memref<8x128xf32, #tpu.memory_space<vmem>>, vector<8x128xf32>
    %c0_7 = arith.constant 0 : index
    %c0_8 = arith.constant 0 : index
    %c0_9 = arith.constant 0 : index
    %c0_10 = arith.constant 0 : index
    %8 = vector.load %arg2[%c0_7, %c0_8, %c0_9, %c0_10] : memref<1x8x8x512xbf16, #tpu.memory_space<vmem>>, vector<1x1x8x512xbf16>
    %9 = vector.shape_cast %8 : vector<1x1x8x512xbf16> to vector<8x512xbf16>
    %10 = arith.extf %9 : vector<8x512xbf16> to vector<8x512xf32>
    %cst = arith.constant dense<0.000000e+00> : vector<8x512xf32>
    %11 = tpu.matmul %6, %5, %cst {dimension_numbers = #tpu.dot_dimension_numbers<[1], [0], [0], [1], [0, 0, 1, 1], [], []>} : vector<8x128xf32>, vector<128x512xf32>, vector<8x512xf32> -> vector<8x512xf32>
    %12 = arith.addf %10, %11 : vector<8x512xf32>
    %13 = vector.extract_strided_slice %12 {offsets = [0, 0], sizes = [8, 128], strides = [1, 1]} : vector<8x512xf32> to vector<8x128xf32>
    %14 = arith.negf %13 : vector<8x128xf32>
    %15 = math.exp %14 : vector<8x128xf32>
    %cst_11 = arith.constant 1.000000e+00 : f32
    %16 = vector.broadcast %cst_11 : f32 to vector<8x128xf32>
    %17 = arith.addf %16, %15 : vector<8x128xf32>
    %18 = arith.divf %16, %17 : vector<8x128xf32>
    %19 = vector.extract_strided_slice %12 {offsets = [0, 128], sizes = [8, 128], strides = [1, 1]} : vector<8x512xf32> to vector<8x128xf32>
    %20 = arith.negf %19 : vector<8x128xf32>
    %21 = math.exp %20 : vector<8x128xf32>
    %cst_12 = arith.constant 1.000000e+00 : f32
    %22 = vector.broadcast %cst_12 : f32 to vector<8x128xf32>
    %23 = arith.addf %22, %21 : vector<8x128xf32>
    %24 = arith.divf %22, %23 : vector<8x128xf32>
    %25 = vector.extract_strided_slice %12 {offsets = [0, 256], sizes = [8, 128], strides = [1, 1]} : vector<8x512xf32> to vector<8x128xf32>
    %26 = math.tanh %25 : vector<8x128xf32>
    %27 = vector.extract_strided_slice %12 {offsets = [0, 384], sizes = [8, 128], strides = [1, 1]} : vector<8x512xf32> to vector<8x128xf32>
    %28 = arith.negf %27 : vector<8x128xf32>
    %29 = math.exp %28 : vector<8x128xf32>
    %cst_13 = arith.constant 1.000000e+00 : f32
    %30 = vector.broadcast %cst_13 : f32 to vector<8x128xf32>
    %31 = arith.addf %30, %29 : vector<8x128xf32>
    %32 = arith.divf %30, %31 : vector<8x128xf32>
    %33 = arith.mulf %24, %7 : vector<8x128xf32>
    %34 = arith.mulf %18, %26 : vector<8x128xf32>
    %35 = arith.addf %33, %34 : vector<8x128xf32>
    %36 = math.tanh %35 : vector<8x128xf32>
    %37 = arith.mulf %32, %36 : vector<8x128xf32>
    %38 = arith.truncf %37 : vector<8x128xf32> to vector<8x128xbf16>
    %c0_14 = arith.constant 0 : index
    %c0_15 = arith.constant 0 : index
    %c0_16 = arith.constant 0 : index
    %c0_17 = arith.constant 0 : index
    %39 = vector.load %arg4[%c0_14, %c0_15, %c0_16, %c0_17] : memref<1x8x8x128xbf16, #tpu.memory_space<vmem>>, vector<1x1x8x128xbf16>
    %40 = vector.shape_cast %39 : vector<1x1x8x128xbf16> to vector<8x128xbf16>
    %41 = vector.shape_cast %38 : vector<8x128xbf16> to vector<1x1x8x128xbf16>
    tpu.vector_store %arg4[%c0_14, %c0_15, %c0_16, %c0_17], %41 {strides = array<i32>} : memref<1x8x8x128xbf16, #tpu.memory_space<vmem>>, vector<1x1x8x128xbf16>,
    %c0_18 = arith.constant 0 : index
    %c1 = arith.constant 1 : index
    %c0_19 = arith.constant 0 : index
    %c0_20 = arith.constant 0 : index
    %42 = vector.load %arg2[%c0_18, %c1, %c0_19, %c0_20] : memref<1x8x8x512xbf16, #tpu.memory_space<vmem>>, vector<1x1x8x512xbf16>
    %43 = vector.shape_cast %42 : vector<1x1x8x512xbf16> to vector<8x512xbf16>
    %44 = arith.extf %43 : vector<8x512xbf16> to vector<8x512xf32>
    %cst_21 = arith.constant dense<0.000000e+00> : vector<8x512xf32>
    %45 = tpu.matmul %37, %5, %cst_21 {dimension_numbers = #tpu.dot_dimension_numbers<[1], [0], [0], [1], [0, 0, 1, 1], [], []>} : vector<8x128xf32>, vector<128x512xf32>, vector<8x512xf32> -> vector<8x512xf32>
    %46 = arith.addf %44, %45 : vector<8x512xf32>
    %47 = vector.extract_strided_slice %46 {offsets = [0, 0], sizes = [8, 128], strides = [1, 1]} : vector<8x512xf32> to vector<8x128xf32>
    %48 = arith.negf %47 : vector<8x128xf32>
    %49 = math.exp %48 : vector<8x128xf32>
    %cst_22 = arith.constant 1.000000e+00 : f32
    %50 = vector.broadcast %cst_22 : f32 to vector<8x128xf32>
    %51 = arith.addf %50, %49 : vector<8x128xf32>
    %52 = arith.divf %50, %51 : vector<8x128xf32>
    %53 = vector.extract_strided_slice %46 {offsets = [0, 128], sizes = [8, 128], strides = [1, 1]} : vector<8x512xf32> to vector<8x128xf32>
    %54 = arith.negf %53 : vector<8x128xf32>
    %55 = math.exp %54 : vector<8x128xf32>
    %cst_23 = arith.constant 1.000000e+00 : f32
    %56 = vector.broadcast %cst_23 : f32 to vector<8x128xf32>
    %57 = arith.addf %56, %55 : vector<8x128xf32>
    %58 = arith.divf %56, %57 : vector<8x128xf32>
    %59 = vector.extract_strided_slice %46 {offsets = [0, 256], sizes = [8, 128], strides = [1, 1]} : vector<8x512xf32> to vector<8x128xf32>
    %60 = math.tanh %59 : vector<8x128xf32>
    %61 = vector.extract_strided_slice %46 {offsets = [0, 384], sizes = [8, 128], strides = [1, 1]} : vector<8x512xf32> to vector<8x128xf32>
    %62 = arith.negf %61 : vector<8x128xf32>
    %63 = math.exp %62 : vector<8x128xf32>
    %cst_24 = arith.constant 1.000000e+00 : f32
    %64 = vector.broadcast %cst_24 : f32 to vector<8x128xf32>
    %65 = arith.addf %64, %63 : vector<8x128xf32>
    %66 = arith.divf %64, %65 : vector<8x128xf32>
    %67 = arith.mulf %58, %35 : vector<8x128xf32>
    %68 = arith.mulf %52, %60 : vector<8x128xf32>
    %69 = arith.addf %67, %68 : vector<8x128xf32>
    %70 = math.tanh %69 : vector<8x128xf32>
    %71 = arith.mulf %66, %70 : vector<8x128xf32>
    %72 = arith.truncf %71 : vector<8x128xf32> to vector<8x128xbf16>
    %c0_25 = arith.constant 0 : index
    %c1_26 = arith.constant 1 : index
    %c0_27 = arith.constant 0 : index
    %c0_28 = arith.constant 0 : index
    %73 = vector.load %arg4[%c0_25, %c1_26, %c0_27, %c0_28] : memref<1x8x8x128xbf16, #tpu.memory_space<vmem>>, vector<1x1x8x128xbf16>
    %74 = vector.shape_cast %73 : vector<1x1x8x128xbf16> to vector<8x128xbf16>
    %75 = vector.shape_cast %72 : vector<8x128xbf16> to vector<1x1x8x128xbf16>
    tpu.vector_store %arg4[%c0_25, %c1_26, %c0_27, %c0_28], %75 {strides = array<i32>} : memref<1x8x8x128xbf16, #tpu.memory_space<vmem>>, vector<1x1x8x128xbf16>,
    %c0_29 = arith.constant 0 : index
    %c2 = arith.constant 2 : index
    %c0_30 = arith.constant 0 : index
    %c0_31 = arith.constant 0 : index
    %76 = vector.load %arg2[%c0_29, %c2, %c0_30, %c0_31] : memref<1x8x8x512xbf16, #tpu.memory_space<vmem>>, vector<1x1x8x512xbf16>
    %77 = vector.shape_cast %76 : vector<1x1x8x512xbf16> to vector<8x512xbf16>
    %78 = arith.extf %77 : vector<8x512xbf16> to vector<8x512xf32>
    %cst_32 = arith.constant dense<0.000000e+00> : vector<8x512xf32>
    %79 = tpu.matmul %71, %5, %cst_32 {dimension_numbers = #tpu.dot_dimension_numbers<[1], [0], [0], [1], [0, 0, 1, 1], [], []>} : vector<8x128xf32>, vector<128x512xf32>, vector<8x512xf32> -> vector<8x512xf32>
    %80 = arith.addf %78, %79 : vector<8x512xf32>
    %81 = vector.extract_strided_slice %80 {offsets = [0, 0], sizes = [8, 128], strides = [1, 1]} : vector<8x512xf32> to vector<8x128xf32>
    %82 = arith.negf %81 : vector<8x128xf32>
    %83 = math.exp %82 : vector<8x128xf32>
    %cst_33 = arith.constant 1.000000e+00 : f32
    %84 = vector.broadcast %cst_33 : f32 to vector<8x128xf32>
    %85 = arith.addf %84, %83 : vector<8x128xf32>
    %86 = arith.divf %84, %85 : vector<8x128xf32>
    %87 = vector.extract_strided_slice %80 {offsets = [0, 128], sizes = [8, 128], strides = [1, 1]} : vector<8x512xf32> to vector<8x128xf32>
    %88 = arith.negf %87 : vector<8x128xf32>
    %89 = math.exp %88 : vector<8x128xf32>
    %cst_34 = arith.constant 1.000000e+00 : f32
    %90 = vector.broadcast %cst_34 : f32 to vector<8x128xf32>
    %91 = arith.addf %90, %89 : vector<8x128xf32>
    %92 = arith.divf %90, %91 : vector<8x128xf32>
    %93 = vector.extract_strided_slice %80 {offsets = [0, 256], sizes = [8, 128], strides = [1, 1]} : vector<8x512xf32> to vector<8x128xf32>
    %94 = math.tanh %93 : vector<8x128xf32>
    %95 = vector.extract_strided_slice %80 {offsets = [0, 384], sizes = [8, 128], strides = [1, 1]} : vector<8x512xf32> to vector<8x128xf32>
    %96 = arith.negf %95 : vector<8x128xf32>
    %97 = math.exp %96 : vector<8x128xf32>
    %cst_35 = arith.constant 1.000000e+00 : f32
    %98 = vector.broadcast %cst_35 : f32 to vector<8x128xf32>
    %99 = arith.addf %98, %97 : vector<8x128xf32>
    %100 = arith.divf %98, %99 : vector<8x128xf32>
    %101 = arith.mulf %92, %69 : vector<8x128xf32>
    %102 = arith.mulf %86, %94 : vector<8x128xf32>
    %103 = arith.addf %101, %102 : vector<8x128xf32>
    %104 = math.tanh %103 : vector<8x128xf32>
    %105 = arith.mulf %100, %104 : vector<8x128xf32>
    %106 = arith.truncf %105 : vector<8x128xf32> to vector<8x128xbf16>
    %c0_36 = arith.constant 0 : index
    %c2_37 = arith.constant 2 : index
    %c0_38 = arith.constant 0 : index
    %c0_39 = arith.constant 0 : index
    %107 = vector.load %arg4[%c0_36, %c2_37, %c0_38, %c0_39] : memref<1x8x8x128xbf16, #tpu.memory_space<vmem>>, vector<1x1x8x128xbf16>
    %108 = vector.shape_cast %107 : vector<1x1x8x128xbf16> to vector<8x128xbf16>
    %109 = vector.shape_cast %106 : vector<8x128xbf16> to vector<1x1x8x128xbf16>
    tpu.vector_store %arg4[%c0_36, %c2_37, %c0_38, %c0_39], %109 {strides = array<i32>} : memref<1x8x8x128xbf16, #tpu.memory_space<vmem>>, vector<1x1x8x128xbf16>,
    %c0_40 = arith.constant 0 : index
    %c3 = arith.constant 3 : index
    %c0_41 = arith.constant 0 : index
    %c0_42 = arith.constant 0 : index
    %110 = vector.load %arg2[%c0_40, %c3, %c0_41, %c0_42] : memref<1x8x8x512xbf16, #tpu.memory_space<vmem>>, vector<1x1x8x512xbf16>
    %111 = vector.shape_cast %110 : vector<1x1x8x512xbf16> to vector<8x512xbf16>
    %112 = arith.extf %111 : vector<8x512xbf16> to vector<8x512xf32>
    %cst_43 = arith.constant dense<0.000000e+00> : vector<8x512xf32>
    %113 = tpu.matmul %105, %5, %cst_43 {dimension_numbers = #tpu.dot_dimension_numbers<[1], [0], [0], [1], [0, 0, 1, 1], [], []>} : vector<8x128xf32>, vector<128x512xf32>, vector<8x512xf32> -> vector<8x512xf32>
    %114 = arith.addf %112, %113 : vector<8x512xf32>
    %115 = vector.extract_strided_slice %114 {offsets = [0, 0], sizes = [8, 128], strides = [1, 1]} : vector<8x512xf32> to vector<8x128xf32>
    %116 = arith.negf %115 : vector<8x128xf32>
    %117 = math.exp %116 : vector<8x128xf32>
    %cst_44 = arith.constant 1.000000e+00 : f32
    %118 = vector.broadcast %cst_44 : f32 to vector<8x128xf32>
    %119 = arith.addf %118, %117 : vector<8x128xf32>
    %120 = arith.divf %118, %119 : vector<8x128xf32>
    %121 = vector.extract_strided_slice %114 {offsets = [0, 128], sizes = [8, 128], strides = [1, 1]} : vector<8x512xf32> to vector<8x128xf32>
    %122 = arith.negf %121 : vector<8x128xf32>
    %123 = math.exp %122 : vector<8x128xf32>
    %cst_45 = arith.constant 1.000000e+00 : f32
    %124 = vector.broadcast %cst_45 : f32 to vector<8x128xf32>
    %125 = arith.addf %124, %123 : vector<8x128xf32>
    %126 = arith.divf %124, %125 : vector<8x128xf32>
    %127 = vector.extract_strided_slice %114 {offsets = [0, 256], sizes = [8, 128], strides = [1, 1]} : vector<8x512xf32> to vector<8x128xf32>
    %128 = math.tanh %127 : vector<8x128xf32>
    %129 = vector.extract_strided_slice %114 {offsets = [0, 384], sizes = [8, 128], strides = [1, 1]} : vector<8x512xf32> to vector<8x128xf32>
    %130 = arith.negf %129 : vector<8x128xf32>
    %131 = math.exp %130 : vector<8x128xf32>
    %cst_46 = arith.constant 1.000000e+00 : f32
    %132 = vector.broadcast %cst_46 : f32 to vector<8x128xf32>
    %133 = arith.addf %132, %131 : vector<8x128xf32>
    %134 = arith.divf %132, %133 : vector<8x128xf32>
    %135 = arith.mulf %126, %103 : vector<8x128xf32>
    %136 = arith.mulf %120, %128 : vector<8x128xf32>
    %137 = arith.addf %135, %136 : vector<8x128xf32>
    %138 = math.tanh %137 : vector<8x128xf32>
    %139 = arith.mulf %134, %138 : vector<8x128xf32>
    %140 = arith.truncf %139 : vector<8x128xf32> to vector<8x128xbf16>
    %c0_47 = arith.constant 0 : index
    %c3_48 = arith.constant 3 : index
    %c0_49 = arith.constant 0 : index
    %c0_50 = arith.constant 0 : index
    %141 = vector.load %arg4[%c0_47, %c3_48, %c0_49, %c0_50] : memref<1x8x8x128xbf16, #tpu.memory_space<vmem>>, vector<1x1x8x128xbf16>
    %142 = vector.shape_cast %141 : vector<1x1x8x128xbf16> to vector<8x128xbf16>
    %143 = vector.shape_cast %140 : vector<8x128xbf16> to vector<1x1x8x128xbf16>
    tpu.vector_store %arg4[%c0_47, %c3_48, %c0_49, %c0_50], %143 {strides = array<i32>} : memref<1x8x8x128xbf16, #tpu.memory_space<vmem>>, vector<1x1x8x128xbf16>,
    %c0_51 = arith.constant 0 : index
    %c4 = arith.constant 4 : index
    %c0_52 = arith.constant 0 : index
    %c0_53 = arith.constant 0 : index
    %144 = vector.load %arg2[%c0_51, %c4, %c0_52, %c0_53] : memref<1x8x8x512xbf16, #tpu.memory_space<vmem>>, vector<1x1x8x512xbf16>
    %145 = vector.shape_cast %144 : vector<1x1x8x512xbf16> to vector<8x512xbf16>
    %146 = arith.extf %145 : vector<8x512xbf16> to vector<8x512xf32>
    %cst_54 = arith.constant dense<0.000000e+00> : vector<8x512xf32>
    %147 = tpu.matmul %139, %5, %cst_54 {dimension_numbers = #tpu.dot_dimension_numbers<[1], [0], [0], [1], [0, 0, 1, 1], [], []>} : vector<8x128xf32>, vector<128x512xf32>, vector<8x512xf32> -> vector<8x512xf32>
    %148 = arith.addf %146, %147 : vector<8x512xf32>
    %149 = vector.extract_strided_slice %148 {offsets = [0, 0], sizes = [8, 128], strides = [1, 1]} : vector<8x512xf32> to vector<8x128xf32>
    %150 = arith.negf %149 : vector<8x128xf32>
    %151 = math.exp %150 : vector<8x128xf32>
    %cst_55 = arith.constant 1.000000e+00 : f32
    %152 = vector.broadcast %cst_55 : f32 to vector<8x128xf32>
    %153 = arith.addf %152, %151 : vector<8x128xf32>
    %154 = arith.divf %152, %153 : vector<8x128xf32>
    %155 = vector.extract_strided_slice %148 {offsets = [0, 128], sizes = [8, 128], strides = [1, 1]} : vector<8x512xf32> to vector<8x128xf32>
    %156 = arith.negf %155 : vector<8x128xf32>
    %157 = math.exp %156 : vector<8x128xf32>
    %cst_56 = arith.constant 1.000000e+00 : f32
    %158 = vector.broadcast %cst_56 : f32 to vector<8x128xf32>
    %159 = arith.addf %158, %157 : vector<8x128xf32>
    %160 = arith.divf %158, %159 : vector<8x128xf32>
    %161 = vector.extract_strided_slice %148 {offsets = [0, 256], sizes = [8, 128], strides = [1, 1]} : vector<8x512xf32> to vector<8x128xf32>
    %162 = math.tanh %161 : vector<8x128xf32>
    %163 = vector.extract_strided_slice %148 {offsets = [0, 384], sizes = [8, 128], strides = [1, 1]} : vector<8x512xf32> to vector<8x128xf32>
    %164 = arith.negf %163 : vector<8x128xf32>
    %165 = math.exp %164 : vector<8x128xf32>
    %cst_57 = arith.constant 1.000000e+00 : f32
    %166 = vector.broadcast %cst_57 : f32 to vector<8x128xf32>
    %167 = arith.addf %166, %165 : vector<8x128xf32>
    %168 = arith.divf %166, %167 : vector<8x128xf32>
    %169 = arith.mulf %160, %137 : vector<8x128xf32>
    %170 = arith.mulf %154, %162 : vector<8x128xf32>
    %171 = arith.addf %169, %170 : vector<8x128xf32>
    %172 = math.tanh %171 : vector<8x128xf32>
    %173 = arith.mulf %168, %172 : vector<8x128xf32>
    %174 = arith.truncf %173 : vector<8x128xf32> to vector<8x128xbf16>
    %c0_58 = arith.constant 0 : index
    %c4_59 = arith.constant 4 : index
    %c0_60 = arith.constant 0 : index
    %c0_61 = arith.constant 0 : index
    %175 = vector.load %arg4[%c0_58, %c4_59, %c0_60, %c0_61] : memref<1x8x8x128xbf16, #tpu.memory_space<vmem>>, vector<1x1x8x128xbf16>
    %176 = vector.shape_cast %175 : vector<1x1x8x128xbf16> to vector<8x128xbf16>
    %177 = vector.shape_cast %174 : vector<8x128xbf16> to vector<1x1x8x128xbf16>
    tpu.vector_store %arg4[%c0_58, %c4_59, %c0_60, %c0_61], %177 {strides = array<i32>} : memref<1x8x8x128xbf16, #tpu.memory_space<vmem>>, vector<1x1x8x128xbf16>,
    %c0_62 = arith.constant 0 : index
    %c5 = arith.constant 5 : index
    %c0_63 = arith.constant 0 : index
    %c0_64 = arith.constant 0 : index
    %178 = vector.load %arg2[%c0_62, %c5, %c0_63, %c0_64] : memref<1x8x8x512xbf16, #tpu.memory_space<vmem>>, vector<1x1x8x512xbf16>
    %179 = vector.shape_cast %178 : vector<1x1x8x512xbf16> to vector<8x512xbf16>
    %180 = arith.extf %179 : vector<8x512xbf16> to vector<8x512xf32>
    %cst_65 = arith.constant dense<0.000000e+00> : vector<8x512xf32>
    %181 = tpu.matmul %173, %5, %cst_65 {dimension_numbers = #tpu.dot_dimension_numbers<[1], [0], [0], [1], [0, 0, 1, 1], [], []>} : vector<8x128xf32>, vector<128x512xf32>, vector<8x512xf32> -> vector<8x512xf32>
    %182 = arith.addf %180, %181 : vector<8x512xf32>
    %183 = vector.extract_strided_slice %182 {offsets = [0, 0], sizes = [8, 128], strides = [1, 1]} : vector<8x512xf32> to vector<8x128xf32>
    %184 = arith.negf %183 : vector<8x128xf32>
    %185 = math.exp %184 : vector<8x128xf32>
    %cst_66 = arith.constant 1.000000e+00 : f32
    %186 = vector.broadcast %cst_66 : f32 to vector<8x128xf32>
    %187 = arith.addf %186, %185 : vector<8x128xf32>
    %188 = arith.divf %186, %187 : vector<8x128xf32>
    %189 = vector.extract_strided_slice %182 {offsets = [0, 128], sizes = [8, 128], strides = [1, 1]} : vector<8x512xf32> to vector<8x128xf32>
    %190 = arith.negf %189 : vector<8x128xf32>
    %191 = math.exp %190 : vector<8x128xf32>
    %cst_67 = arith.constant 1.000000e+00 : f32
    %192 = vector.broadcast %cst_67 : f32 to vector<8x128xf32>
    %193 = arith.addf %192, %191 : vector<8x128xf32>
    %194 = arith.divf %192, %193 : vector<8x128xf32>
    %195 = vector.extract_strided_slice %182 {offsets = [0, 256], sizes = [8, 128], strides = [1, 1]} : vector<8x512xf32> to vector<8x128xf32>
    %196 = math.tanh %195 : vector<8x128xf32>
    %197 = vector.extract_strided_slice %182 {offsets = [0, 384], sizes = [8, 128], strides = [1, 1]} : vector<8x512xf32> to vector<8x128xf32>
    %198 = arith.negf %197 : vector<8x128xf32>
    %199 = math.exp %198 : vector<8x128xf32>
    %cst_68 = arith.constant 1.000000e+00 : f32
    %200 = vector.broadcast %cst_68 : f32 to vector<8x128xf32>
    %201 = arith.addf %200, %199 : vector<8x128xf32>
    %202 = arith.divf %200, %201 : vector<8x128xf32>
    %203 = arith.mulf %194, %171 : vector<8x128xf32>
    %204 = arith.mulf %188, %196 : vector<8x128xf32>
    %205 = arith.addf %203, %204 : vector<8x128xf32>
    %206 = math.tanh %205 : vector<8x128xf32>
    %207 = arith.mulf %202, %206 : vector<8x128xf32>
    %208 = arith.truncf %207 : vector<8x128xf32> to vector<8x128xbf16>
    %c0_69 = arith.constant 0 : index
    %c5_70 = arith.constant 5 : index
    %c0_71 = arith.constant 0 : index
    %c0_72 = arith.constant 0 : index
    %209 = vector.load %arg4[%c0_69, %c5_70, %c0_71, %c0_72] : memref<1x8x8x128xbf16, #tpu.memory_space<vmem>>, vector<1x1x8x128xbf16>
    %210 = vector.shape_cast %209 : vector<1x1x8x128xbf16> to vector<8x128xbf16>
    %211 = vector.shape_cast %208 : vector<8x128xbf16> to vector<1x1x8x128xbf16>
    tpu.vector_store %arg4[%c0_69, %c5_70, %c0_71, %c0_72], %211 {strides = array<i32>} : memref<1x8x8x128xbf16, #tpu.memory_space<vmem>>, vector<1x1x8x128xbf16>,
    %c0_73 = arith.constant 0 : index
    %c6 = arith.constant 6 : index
    %c0_74 = arith.constant 0 : index
    %c0_75 = arith.constant 0 : index
    %212 = vector.load %arg2[%c0_73, %c6, %c0_74, %c0_75] : memref<1x8x8x512xbf16, #tpu.memory_space<vmem>>, vector<1x1x8x512xbf16>
    %213 = vector.shape_cast %212 : vector<1x1x8x512xbf16> to vector<8x512xbf16>
    %214 = arith.extf %213 : vector<8x512xbf16> to vector<8x512xf32>
    %cst_76 = arith.constant dense<0.000000e+00> : vector<8x512xf32>
    %215 = tpu.matmul %207, %5, %cst_76 {dimension_numbers = #tpu.dot_dimension_numbers<[1], [0], [0], [1], [0, 0, 1, 1], [], []>} : vector<8x128xf32>, vector<128x512xf32>, vector<8x512xf32> -> vector<8x512xf32>
    %216 = arith.addf %214, %215 : vector<8x512xf32>
    %217 = vector.extract_strided_slice %216 {offsets = [0, 0], sizes = [8, 128], strides = [1, 1]} : vector<8x512xf32> to vector<8x128xf32>
    %218 = arith.negf %217 : vector<8x128xf32>
    %219 = math.exp %218 : vector<8x128xf32>
    %cst_77 = arith.constant 1.000000e+00 : f32
    %220 = vector.broadcast %cst_77 : f32 to vector<8x128xf32>
    %221 = arith.addf %220, %219 : vector<8x128xf32>
    %222 = arith.divf %220, %221 : vector<8x128xf32>
    %223 = vector.extract_strided_slice %216 {offsets = [0, 128], sizes = [8, 128], strides = [1, 1]} : vector<8x512xf32> to vector<8x128xf32>
    %224 = arith.negf %223 : vector<8x128xf32>
    %225 = math.exp %224 : vector<8x128xf32>
    %cst_78 = arith.constant 1.000000e+00 : f32
    %226 = vector.broadcast %cst_78 : f32 to vector<8x128xf32>
    %227 = arith.addf %226, %225 : vector<8x128xf32>
    %228 = arith.divf %226, %227 : vector<8x128xf32>
    %229 = vector.extract_strided_slice %216 {offsets = [0, 256], sizes = [8, 128], strides = [1, 1]} : vector<8x512xf32> to vector<8x128xf32>
    %230 = math.tanh %229 : vector<8x128xf32>
    %231 = vector.extract_strided_slice %216 {offsets = [0, 384], sizes = [8, 128], strides = [1, 1]} : vector<8x512xf32> to vector<8x128xf32>
    %232 = arith.negf %231 : vector<8x128xf32>
    %233 = math.exp %232 : vector<8x128xf32>
    %cst_79 = arith.constant 1.000000e+00 : f32
    %234 = vector.broadcast %cst_79 : f32 to vector<8x128xf32>
    %235 = arith.addf %234, %233 : vector<8x128xf32>
    %236 = arith.divf %234, %235 : vector<8x128xf32>
    %237 = arith.mulf %228, %205 : vector<8x128xf32>
    %238 = arith.mulf %222, %230 : vector<8x128xf32>
    %239 = arith.addf %237, %238 : vector<8x128xf32>
    %240 = math.tanh %239 : vector<8x128xf32>
    %241 = arith.mulf %236, %240 : vector<8x128xf32>
    %242 = arith.truncf %241 : vector<8x128xf32> to vector<8x128xbf16>
    %c0_80 = arith.constant 0 : index
    %c6_81 = arith.constant 6 : index
    %c0_82 = arith.constant 0 : index
    %c0_83 = arith.constant 0 : index
    %243 = vector.load %arg4[%c0_80, %c6_81, %c0_82, %c0_83] : memref<1x8x8x128xbf16, #tpu.memory_space<vmem>>, vector<1x1x8x128xbf16>
    %244 = vector.shape_cast %243 : vector<1x1x8x128xbf16> to vector<8x128xbf16>
    %245 = vector.shape_cast %242 : vector<8x128xbf16> to vector<1x1x8x128xbf16>
    tpu.vector_store %arg4[%c0_80, %c6_81, %c0_82, %c0_83], %245 {strides = array<i32>} : memref<1x8x8x128xbf16, #tpu.memory_space<vmem>>, vector<1x1x8x128xbf16>,
    %c0_84 = arith.constant 0 : index
    %c7 = arith.constant 7 : index
    %c0_85 = arith.constant 0 : index
    %c0_86 = arith.constant 0 : index
    %246 = vector.load %arg2[%c0_84, %c7, %c0_85, %c0_86] : memref<1x8x8x512xbf16, #tpu.memory_space<vmem>>, vector<1x1x8x512xbf16>
    %247 = vector.shape_cast %246 : vector<1x1x8x512xbf16> to vector<8x512xbf16>
    %248 = arith.extf %247 : vector<8x512xbf16> to vector<8x512xf32>
    %cst_87 = arith.constant dense<0.000000e+00> : vector<8x512xf32>
    %249 = tpu.matmul %241, %5, %cst_87 {dimension_numbers = #tpu.dot_dimension_numbers<[1], [0], [0], [1], [0, 0, 1, 1], [], []>} : vector<8x128xf32>, vector<128x512xf32>, vector<8x512xf32> -> vector<8x512xf32>
    %250 = arith.addf %248, %249 : vector<8x512xf32>
    %251 = vector.extract_strided_slice %250 {offsets = [0, 0], sizes = [8, 128], strides = [1, 1]} : vector<8x512xf32> to vector<8x128xf32>
    %252 = arith.negf %251 : vector<8x128xf32>
    %253 = math.exp %252 : vector<8x128xf32>
    %cst_88 = arith.constant 1.000000e+00 : f32
    %254 = vector.broadcast %cst_88 : f32 to vector<8x128xf32>
    %255 = arith.addf %254, %253 : vector<8x128xf32>
    %256 = arith.divf %254, %255 : vector<8x128xf32>
    %257 = vector.extract_strided_slice %250 {offsets = [0, 128], sizes = [8, 128], strides = [1, 1]} : vector<8x512xf32> to vector<8x128xf32>
    %258 = arith.negf %257 : vector<8x128xf32>
    %259 = math.exp %258 : vector<8x128xf32>
    %cst_89 = arith.constant 1.000000e+00 : f32
    %260 = vector.broadcast %cst_89 : f32 to vector<8x128xf32>
    %261 = arith.addf %260, %259 : vector<8x128xf32>
    %262 = arith.divf %260, %261 : vector<8x128xf32>
    %263 = vector.extract_strided_slice %250 {offsets = [0, 256], sizes = [8, 128], strides = [1, 1]} : vector<8x512xf32> to vector<8x128xf32>
    %264 = math.tanh %263 : vector<8x128xf32>
    %265 = vector.extract_strided_slice %250 {offsets = [0, 384], sizes = [8, 128], strides = [1, 1]} : vector<8x512xf32> to vector<8x128xf32>
    %266 = arith.negf %265 : vector<8x128xf32>
    %267 = math.exp %266 : vector<8x128xf32>
    %cst_90 = arith.constant 1.000000e+00 : f32
    %268 = vector.broadcast %cst_90 : f32 to vector<8x128xf32>
    %269 = arith.addf %268, %267 : vector<8x128xf32>
    %270 = arith.divf %268, %269 : vector<8x128xf32>
    %271 = arith.mulf %262, %239 : vector<8x128xf32>
    %272 = arith.mulf %256, %264 : vector<8x128xf32>
    %273 = arith.addf %271, %272 : vector<8x128xf32>
    %274 = math.tanh %273 : vector<8x128xf32>
    %275 = arith.mulf %270, %274 : vector<8x128xf32>
    %276 = arith.truncf %275 : vector<8x128xf32> to vector<8x128xbf16>
    %c0_91 = arith.constant 0 : index
    %c7_92 = arith.constant 7 : index
    %c0_93 = arith.constant 0 : index
    %c0_94 = arith.constant 0 : index
    %277 = vector.load %arg4[%c0_91, %c7_92, %c0_93, %c0_94] : memref<1x8x8x128xbf16, #tpu.memory_space<vmem>>, vector<1x1x8x128xbf16>
    %278 = vector.shape_cast %277 : vector<1x1x8x128xbf16> to vector<8x128xbf16>
    %279 = vector.shape_cast %276 : vector<8x128xbf16> to vector<1x1x8x128xbf16>
    tpu.vector_store %arg4[%c0_91, %c7_92, %c0_93, %c0_94], %279 {strides = array<i32>} : memref<1x8x8x128xbf16, #tpu.memory_space<vmem>>, vector<1x1x8x128xbf16>,
    %c0_95 = arith.constant 0 : index
    %c0_96 = arith.constant 0 : index
    %280 = vector.load %arg6[%c0_95, %c0_96] : memref<8x128xf32, #tpu.memory_space<vmem>>, vector<8x128xf32>
    tpu.vector_store %arg6[%c0_95, %c0_96], %275 {strides = array<i32>} : memref<8x128xf32, #tpu.memory_space<vmem>>, vector<8x128xf32>,
    %c0_97 = arith.constant 0 : index
    %c0_98 = arith.constant 0 : index
    %281 = vector.load %arg7[%c0_97, %c0_98] : memref<8x128xf32, #tpu.memory_space<vmem>>, vector<8x128xf32>
    tpu.vector_store %arg7[%c0_97, %c0_98], %273 {strides = array<i32>} : memref<8x128xf32, #tpu.memory_space<vmem>>, vector<8x128xf32>,
    %c0_i32_99 = arith.constant 0 : i32
    %282 = arith.cmpi eq, %arg1, %c0_i32_99 : i32
    %283 = arith.extui %282 : i1 to i32
    %c0_i32_100 = arith.constant 0 : i32
    %284 = arith.cmpi ne, %283, %c0_i32_100 : i32
    scf.if %284 {
      %c0_101 = arith.constant 0 : index
      %c0_102 = arith.constant 0 : index
      %c0_103 = arith.constant 0 : index
      %285 = vector.load %arg5[%c0_101, %c0_102, %c0_103] : memref<1x8x128xf32, #tpu.memory_space<vmem>>, vector<1x8x128xf32>
      %286 = vector.shape_cast %285 : vector<1x8x128xf32> to vector<8x128xf32>
      %287 = vector.shape_cast %275 : vector<8x128xf32> to vector<1x8x128xf32>
      tpu.vector_store %arg5[%c0_101, %c0_102, %c0_103], %287 {strides = array<i32>} : memref<1x8x128xf32, #tpu.memory_space<vmem>>, vector<1x8x128xf32>,
    } else {
    }
    return
  }
  func.func @transform_0(%arg0: i32, %arg1: i32) -> (i32, i32, i32, i32) {
    %c0_i32 = arith.constant 0 : i32
    %c0_i32_0 = arith.constant 0 : i32
    %c0_i32_1 = arith.constant 0 : i32
    return %arg0, %arg1, %c0_i32, %c0_i32_0 : i32, i32, i32, i32
  }
  func.func @transform_1(%arg0: i32, %arg1: i32) -> (i32, i32, i32) {
    %c0_i32 = arith.constant 0 : i32
    %c0_i32_0 = arith.constant 0 : i32
    %c0_i32_1 = arith.constant 0 : i32
    return %arg0, %c0_i32, %c0_i32_0 : i32, i32, i32
  }
  func.func @transform_2(%arg0: i32, %arg1: i32) -> (i32, i32, i32, i32) {
    %c0_i32 = arith.constant 0 : i32
    %c0_i32_0 = arith.constant 0 : i32
    %c0_i32_1 = arith.constant 0 : i32
    return %arg0, %arg1, %c0_i32, %c0_i32_0 : i32, i32, i32, i32
  }
  func.func @transform_3(%arg0: i32, %arg1: i32) -> (i32, i32, i32) {
    %c0_i32 = arith.constant 0 : i32
    %c0_i32_0 = arith.constant 0 : i32
    %c0_i32_1 = arith.constant 0 : i32
    return %arg0, %c0_i32, %c0_i32_0 : i32, i32, i32
  }
}

module attributes {stable_mosaic.version = 11 : i64} {
  func.func @_head_kernel(%arg0: i32, %arg1: memref<8x256xf32, #tpu.memory_space<vmem>>, %arg2: memref<256x128xbf16, #tpu.memory_space<vmem>>, %arg3: memref<1x128xf32, #tpu.memory_space<vmem>>, %arg4: memref<8x128xf32, #tpu.memory_space<vmem>>) attributes {dimension_semantics = [#tpu.dimension_semantics<arbitrary>], iteration_bounds = array<i64: 2>, scalar_prefetch = 0 : i64, scratch_operands = 0 : i64, tpu.core_type = #tpu.core_type<tc>, window_params = [{transform_indices = @transform_0, window_bounds = array<i64: 8, 256>}, {transform_indices = @transform_1, window_bounds = array<i64: 256, 128>}, {pipeline_mode = #tpu.pipeline_mode<synchronous>, transform_indices = @transform_2, window_bounds = array<i64: 1, 128>}, {pipeline_mode = #tpu.pipeline_mode<synchronous>, transform_indices = @transform_3, window_bounds = array<i64: 8, 128>}]} {
    %c0_i32 = arith.constant 0 : i32
    %0 = arith.cmpi eq, %arg0, %c0_i32 : i32
    %1 = arith.extui %0 : i1 to i32
    %c0_i32_0 = arith.constant 0 : i32
    %2 = arith.cmpi ne, %1, %c0_i32_0 : i32
    scf.if %2 {
      %cst_9 = arith.constant 0.000000e+00 : f32
      %13 = vector.broadcast %cst_9 : f32 to vector<8x128xf32>
      %c0_10 = arith.constant 0 : index
      %c0_11 = arith.constant 0 : index
      %14 = vector.load %arg4[%c0_10, %c0_11] : memref<8x128xf32, #tpu.memory_space<vmem>>, vector<8x128xf32>
      tpu.vector_store %arg4[%c0_10, %c0_11], %13 {strides = array<i32>} : memref<8x128xf32, #tpu.memory_space<vmem>>, vector<8x128xf32>,
    } else {
    }
    %c0 = arith.constant 0 : index
    %c0_1 = arith.constant 0 : index
    %3 = vector.load %arg4[%c0, %c0_1] : memref<8x128xf32, #tpu.memory_space<vmem>>, vector<8x128xf32>
    %c0_2 = arith.constant 0 : index
    %c0_3 = arith.constant 0 : index
    %4 = vector.load %arg1[%c0_2, %c0_3] : memref<8x256xf32, #tpu.memory_space<vmem>>, vector<8x256xf32>
    %c0_4 = arith.constant 0 : index
    %c0_5 = arith.constant 0 : index
    %5 = vector.load %arg2[%c0_4, %c0_5] : memref<256x128xbf16, #tpu.memory_space<vmem>>, vector<256x128xbf16>
    %6 = arith.extf %5 : vector<256x128xbf16> to vector<256x128xf32>
    %cst = arith.constant dense<0.000000e+00> : vector<8x128xf32>
    %7 = tpu.matmul %4, %6, %cst {dimension_numbers = #tpu.dot_dimension_numbers<[1], [0], [0], [1], [0, 0, 1, 1], [], []>} : vector<8x256xf32>, vector<256x128xf32>, vector<8x128xf32> -> vector<8x128xf32>
    %8 = arith.addf %3, %7 : vector<8x128xf32>
    %c0_6 = arith.constant 0 : index
    %c0_7 = arith.constant 0 : index
    %9 = vector.load %arg4[%c0_6, %c0_7] : memref<8x128xf32, #tpu.memory_space<vmem>>, vector<8x128xf32>
    tpu.vector_store %arg4[%c0_6, %c0_7], %8 {strides = array<i32>} : memref<8x128xf32, #tpu.memory_space<vmem>>, vector<8x128xf32>,
    %c1_i32 = arith.constant 1 : i32
    %10 = arith.cmpi eq, %arg0, %c1_i32 : i32
    %11 = arith.extui %10 : i1 to i32
    %c0_i32_8 = arith.constant 0 : i32
    %12 = arith.cmpi ne, %11, %c0_i32_8 : i32
    scf.if %12 {
      %c0_9 = arith.constant 0 : index
      %c0_10 = arith.constant 0 : index
      %13 = vector.load %arg4[%c0_9, %c0_10] : memref<8x128xf32, #tpu.memory_space<vmem>>, vector<8x128xf32>
      %c0_11 = arith.constant 0 : index
      %c0_12 = arith.constant 0 : index
      %14 = vector.load %arg3[%c0_11, %c0_12] : memref<1x128xf32, #tpu.memory_space<vmem>>, vector<1x128xf32>
      %15 = vector.broadcast %14 : vector<1x128xf32> to vector<8x128xf32>
      %16 = arith.addf %13, %15 : vector<8x128xf32>
      %17 = tpu.iota {dimensions = array<i32: 1>} : vector<8x128xi32>
      %c8_i32 = arith.constant 8 : i32
      %18 = vector.broadcast %c8_i32 : i32 to vector<8x128xi32>
      %19 = arith.cmpi slt, %17, %18 : vector<8x128xi32>
      %cst_13 = arith.constant -1.000000e+30 : f32
      %20 = vector.broadcast %cst_13 : f32 to vector<8x128xf32>
      %21 = arith.select %19, %16, %20 : vector<8x128xi1>, vector<8x128xf32>
      %cst_14 = arith.constant dense<0xFF800000> : vector<8xf32>
      %22 = vector.multi_reduction <maximumf>, %21, %cst_14 [1] : vector<8x128xf32> to vector<8xf32>
      %23 = vector.shape_cast %22 : vector<8xf32> to vector<8x1xf32>
      %24 = vector.broadcast %23 : vector<8x1xf32> to vector<8x128xf32>
      %25 = arith.subf %21, %24 : vector<8x128xf32>
      %26 = math.exp %25 : vector<8x128xf32>
      %cst_15 = arith.constant dense<0.000000e+00> : vector<8xf32>
      %27 = vector.multi_reduction <add>, %26, %cst_15 [1] : vector<8x128xf32> to vector<8xf32>
      %28 = vector.shape_cast %27 : vector<8xf32> to vector<8x1xf32>
      %29 = math.log %28 : vector<8x1xf32>
      %30 = vector.broadcast %29 : vector<8x1xf32> to vector<8x128xf32>
      %31 = arith.subf %25, %30 : vector<8x128xf32>
      %c0_16 = arith.constant 0 : index
      %c0_17 = arith.constant 0 : index
      %32 = vector.load %arg4[%c0_16, %c0_17] : memref<8x128xf32, #tpu.memory_space<vmem>>, vector<8x128xf32>
      tpu.vector_store %arg4[%c0_16, %c0_17], %31 {strides = array<i32>} : memref<8x128xf32, #tpu.memory_space<vmem>>, vector<8x128xf32>,
    } else {
    }
    return
  }
  func.func @transform_0(%arg0: i32) -> (i32, i32) {
    %c0_i32 = arith.constant 0 : i32
    %c0_i32_0 = arith.constant 0 : i32
    return %c0_i32, %arg0 : i32, i32
  }
  func.func @transform_1(%arg0: i32) -> (i32, i32) {
    %c0_i32 = arith.constant 0 : i32
    %c0_i32_0 = arith.constant 0 : i32
    return %arg0, %c0_i32 : i32, i32
  }
  func.func @transform_2(%arg0: i32) -> (i32, i32) {
    %c0_i32 = arith.constant 0 : i32
    %c0_i32_0 = arith.constant 0 : i32
    %c0_i32_1 = arith.constant 0 : i32
    return %c0_i32, %c0_i32_0 : i32, i32
  }
  func.func @transform_3(%arg0: i32) -> (i32, i32) {
    %c0_i32 = arith.constant 0 : i32
    %c0_i32_0 = arith.constant 0 : i32
    %c0_i32_1 = arith.constant 0 : i32
    return %c0_i32, %c0_i32_0 : i32, i32
  }
}

module attributes {stable_mosaic.version = 11 : i64} {
  func.func @_lstm_rec_kernel(%arg0: i32, %arg1: i32, %arg2: memref<1x8x8x512xbf16, #tpu.memory_space<vmem>>, %arg3: memref<1x128x512xbf16, #tpu.memory_space<vmem>>, %arg4: memref<1x8x8x128xbf16, #tpu.memory_space<vmem>>, %arg5: memref<1x8x128xf32, #tpu.memory_space<vmem>>, %arg6: memref<8x128xf32, #tpu.memory_space<vmem>>, %arg7: memref<8x128xf32, #tpu.memory_space<vmem>>) attributes {dimension_semantics = [#tpu.dimension_semantics<parallel>, #tpu.dimension_semantics<arbitrary>], iteration_bounds = array<i64: 2, 1>, scalar_prefetch = 0 : i64, scratch_operands = 2 : i64, tpu.core_type = #tpu.core_type<tc>, window_params = [{transform_indices = @transform_0, window_bounds = array<i64: 1, 8, 8, 512>}, {transform_indices = @transform_1, window_bounds = array<i64: 1, 128, 512>}, {transform_indices = @transform_2, window_bounds = array<i64: 1, 8, 8, 128>}, {transform_indices = @transform_3, window_bounds = array<i64: 1, 8, 128>}]} {
    %c0_i32 = arith.constant 0 : i32
    %0 = arith.cmpi eq, %arg1, %c0_i32 : i32
    %1 = arith.extui %0 : i1 to i32
    %c0_i32_0 = arith.constant 0 : i32
    %2 = arith.cmpi ne, %1, %c0_i32_0 : i32
    scf.if %2 {
      %cst_101 = arith.constant 0.000000e+00 : f32
      %285 = vector.broadcast %cst_101 : f32 to vector<8x128xf32>
      %c0_102 = arith.constant 0 : index
      %c0_103 = arith.constant 0 : index
      %286 = vector.load %arg6[%c0_102, %c0_103] : memref<8x128xf32, #tpu.memory_space<vmem>>, vector<8x128xf32>
      tpu.vector_store %arg6[%c0_102, %c0_103], %285 {strides = array<i32>} : memref<8x128xf32, #tpu.memory_space<vmem>>, vector<8x128xf32>,
      %cst_104 = arith.constant 0.000000e+00 : f32
      %287 = vector.broadcast %cst_104 : f32 to vector<8x128xf32>
      %c0_105 = arith.constant 0 : index
      %c0_106 = arith.constant 0 : index
      %288 = vector.load %arg7[%c0_105, %c0_106] : memref<8x128xf32, #tpu.memory_space<vmem>>, vector<8x128xf32>
      tpu.vector_store %arg7[%c0_105, %c0_106], %287 {strides = array<i32>} : memref<8x128xf32, #tpu.memory_space<vmem>>, vector<8x128xf32>,
    } else {
    }
    %c0 = arith.constant 0 : index
    %c0_1 = arith.constant 0 : index
    %c0_2 = arith.constant 0 : index
    %3 = vector.load %arg3[%c0, %c0_1, %c0_2] : memref<1x128x512xbf16, #tpu.memory_space<vmem>>, vector<1x128x512xbf16>
    %4 = vector.shape_cast %3 : vector<1x128x512xbf16> to vector<128x512xbf16>
    %5 = arith.extf %4 : vector<128x512xbf16> to vector<128x512xf32>
    %c0_3 = arith.constant 0 : index
    %c0_4 = arith.constant 0 : index
    %6 = vector.load %arg6[%c0_3, %c0_4] : memref<8x128xf32, #tpu.memory_space<vmem>>, vector<8x128xf32>
    %c0_5 = arith.constant 0 : index
    %c0_6 = arith.constant 0 : index
    %7 = vector.load %arg7[%c0_5, %c0_6] : memref<8x128xf32, #tpu.memory_space<vmem>>, vector<8x128xf32>
    %c0_7 = arith.constant 0 : index
    %c0_8 = arith.constant 0 : index
    %c0_9 = arith.constant 0 : index
    %c0_10 = arith.constant 0 : index
    %8 = vector.load %arg2[%c0_7, %c0_8, %c0_9, %c0_10] : memref<1x8x8x512xbf16, #tpu.memory_space<vmem>>, vector<1x1x8x512xbf16>
    %9 = vector.shape_cast %8 : vector<1x1x8x512xbf16> to vector<8x512xbf16>
    %10 = arith.extf %9 : vector<8x512xbf16> to vector<8x512xf32>
    %cst = arith.constant dense<0.000000e+00> : vector<8x512xf32>
    %11 = tpu.matmul %6, %5, %cst {dimension_numbers = #tpu.dot_dimension_numbers<[1], [0], [0], [1], [0, 0, 1, 1], [], []>} : vector<8x128xf32>, vector<128x512xf32>, vector<8x512xf32> -> vector<8x512xf32>
    %12 = arith.addf %10, %11 : vector<8x512xf32>
    %13 = vector.extract_strided_slice %12 {offsets = [0, 0], sizes = [8, 128], strides = [1, 1]} : vector<8x512xf32> to vector<8x128xf32>
    %14 = arith.negf %13 : vector<8x128xf32>
    %15 = math.exp %14 : vector<8x128xf32>
    %cst_11 = arith.constant 1.000000e+00 : f32
    %16 = vector.broadcast %cst_11 : f32 to vector<8x128xf32>
    %17 = arith.addf %16, %15 : vector<8x128xf32>
    %18 = arith.divf %16, %17 : vector<8x128xf32>
    %19 = vector.extract_strided_slice %12 {offsets = [0, 128], sizes = [8, 128], strides = [1, 1]} : vector<8x512xf32> to vector<8x128xf32>
    %20 = arith.negf %19 : vector<8x128xf32>
    %21 = math.exp %20 : vector<8x128xf32>
    %cst_12 = arith.constant 1.000000e+00 : f32
    %22 = vector.broadcast %cst_12 : f32 to vector<8x128xf32>
    %23 = arith.addf %22, %21 : vector<8x128xf32>
    %24 = arith.divf %22, %23 : vector<8x128xf32>
    %25 = vector.extract_strided_slice %12 {offsets = [0, 256], sizes = [8, 128], strides = [1, 1]} : vector<8x512xf32> to vector<8x128xf32>
    %26 = math.tanh %25 : vector<8x128xf32>
    %27 = vector.extract_strided_slice %12 {offsets = [0, 384], sizes = [8, 128], strides = [1, 1]} : vector<8x512xf32> to vector<8x128xf32>
    %28 = arith.negf %27 : vector<8x128xf32>
    %29 = math.exp %28 : vector<8x128xf32>
    %cst_13 = arith.constant 1.000000e+00 : f32
    %30 = vector.broadcast %cst_13 : f32 to vector<8x128xf32>
    %31 = arith.addf %30, %29 : vector<8x128xf32>
    %32 = arith.divf %30, %31 : vector<8x128xf32>
    %33 = arith.mulf %24, %7 : vector<8x128xf32>
    %34 = arith.mulf %18, %26 : vector<8x128xf32>
    %35 = arith.addf %33, %34 : vector<8x128xf32>
    %36 = math.tanh %35 : vector<8x128xf32>
    %37 = arith.mulf %32, %36 : vector<8x128xf32>
    %38 = arith.truncf %37 : vector<8x128xf32> to vector<8x128xbf16>
    %c0_14 = arith.constant 0 : index
    %c0_15 = arith.constant 0 : index
    %c0_16 = arith.constant 0 : index
    %c0_17 = arith.constant 0 : index
    %39 = vector.load %arg4[%c0_14, %c0_15, %c0_16, %c0_17] : memref<1x8x8x128xbf16, #tpu.memory_space<vmem>>, vector<1x1x8x128xbf16>
    %40 = vector.shape_cast %39 : vector<1x1x8x128xbf16> to vector<8x128xbf16>
    %41 = vector.shape_cast %38 : vector<8x128xbf16> to vector<1x1x8x128xbf16>
    tpu.vector_store %arg4[%c0_14, %c0_15, %c0_16, %c0_17], %41 {strides = array<i32>} : memref<1x8x8x128xbf16, #tpu.memory_space<vmem>>, vector<1x1x8x128xbf16>,
    %c0_18 = arith.constant 0 : index
    %c1 = arith.constant 1 : index
    %c0_19 = arith.constant 0 : index
    %c0_20 = arith.constant 0 : index
    %42 = vector.load %arg2[%c0_18, %c1, %c0_19, %c0_20] : memref<1x8x8x512xbf16, #tpu.memory_space<vmem>>, vector<1x1x8x512xbf16>
    %43 = vector.shape_cast %42 : vector<1x1x8x512xbf16> to vector<8x512xbf16>
    %44 = arith.extf %43 : vector<8x512xbf16> to vector<8x512xf32>
    %cst_21 = arith.constant dense<0.000000e+00> : vector<8x512xf32>
    %45 = tpu.matmul %37, %5, %cst_21 {dimension_numbers = #tpu.dot_dimension_numbers<[1], [0], [0], [1], [0, 0, 1, 1], [], []>} : vector<8x128xf32>, vector<128x512xf32>, vector<8x512xf32> -> vector<8x512xf32>
    %46 = arith.addf %44, %45 : vector<8x512xf32>
    %47 = vector.extract_strided_slice %46 {offsets = [0, 0], sizes = [8, 128], strides = [1, 1]} : vector<8x512xf32> to vector<8x128xf32>
    %48 = arith.negf %47 : vector<8x128xf32>
    %49 = math.exp %48 : vector<8x128xf32>
    %cst_22 = arith.constant 1.000000e+00 : f32
    %50 = vector.broadcast %cst_22 : f32 to vector<8x128xf32>
    %51 = arith.addf %50, %49 : vector<8x128xf32>
    %52 = arith.divf %50, %51 : vector<8x128xf32>
    %53 = vector.extract_strided_slice %46 {offsets = [0, 128], sizes = [8, 128], strides = [1, 1]} : vector<8x512xf32> to vector<8x128xf32>
    %54 = arith.negf %53 : vector<8x128xf32>
    %55 = math.exp %54 : vector<8x128xf32>
    %cst_23 = arith.constant 1.000000e+00 : f32
    %56 = vector.broadcast %cst_23 : f32 to vector<8x128xf32>
    %57 = arith.addf %56, %55 : vector<8x128xf32>
    %58 = arith.divf %56, %57 : vector<8x128xf32>
    %59 = vector.extract_strided_slice %46 {offsets = [0, 256], sizes = [8, 128], strides = [1, 1]} : vector<8x512xf32> to vector<8x128xf32>
    %60 = math.tanh %59 : vector<8x128xf32>
    %61 = vector.extract_strided_slice %46 {offsets = [0, 384], sizes = [8, 128], strides = [1, 1]} : vector<8x512xf32> to vector<8x128xf32>
    %62 = arith.negf %61 : vector<8x128xf32>
    %63 = math.exp %62 : vector<8x128xf32>
    %cst_24 = arith.constant 1.000000e+00 : f32
    %64 = vector.broadcast %cst_24 : f32 to vector<8x128xf32>
    %65 = arith.addf %64, %63 : vector<8x128xf32>
    %66 = arith.divf %64, %65 : vector<8x128xf32>
    %67 = arith.mulf %58, %35 : vector<8x128xf32>
    %68 = arith.mulf %52, %60 : vector<8x128xf32>
    %69 = arith.addf %67, %68 : vector<8x128xf32>
    %70 = math.tanh %69 : vector<8x128xf32>
    %71 = arith.mulf %66, %70 : vector<8x128xf32>
    %72 = arith.truncf %71 : vector<8x128xf32> to vector<8x128xbf16>
    %c0_25 = arith.constant 0 : index
    %c1_26 = arith.constant 1 : index
    %c0_27 = arith.constant 0 : index
    %c0_28 = arith.constant 0 : index
    %73 = vector.load %arg4[%c0_25, %c1_26, %c0_27, %c0_28] : memref<1x8x8x128xbf16, #tpu.memory_space<vmem>>, vector<1x1x8x128xbf16>
    %74 = vector.shape_cast %73 : vector<1x1x8x128xbf16> to vector<8x128xbf16>
    %75 = vector.shape_cast %72 : vector<8x128xbf16> to vector<1x1x8x128xbf16>
    tpu.vector_store %arg4[%c0_25, %c1_26, %c0_27, %c0_28], %75 {strides = array<i32>} : memref<1x8x8x128xbf16, #tpu.memory_space<vmem>>, vector<1x1x8x128xbf16>,
    %c0_29 = arith.constant 0 : index
    %c2 = arith.constant 2 : index
    %c0_30 = arith.constant 0 : index
    %c0_31 = arith.constant 0 : index
    %76 = vector.load %arg2[%c0_29, %c2, %c0_30, %c0_31] : memref<1x8x8x512xbf16, #tpu.memory_space<vmem>>, vector<1x1x8x512xbf16>
    %77 = vector.shape_cast %76 : vector<1x1x8x512xbf16> to vector<8x512xbf16>
    %78 = arith.extf %77 : vector<8x512xbf16> to vector<8x512xf32>
    %cst_32 = arith.constant dense<0.000000e+00> : vector<8x512xf32>
    %79 = tpu.matmul %71, %5, %cst_32 {dimension_numbers = #tpu.dot_dimension_numbers<[1], [0], [0], [1], [0, 0, 1, 1], [], []>} : vector<8x128xf32>, vector<128x512xf32>, vector<8x512xf32> -> vector<8x512xf32>
    %80 = arith.addf %78, %79 : vector<8x512xf32>
    %81 = vector.extract_strided_slice %80 {offsets = [0, 0], sizes = [8, 128], strides = [1, 1]} : vector<8x512xf32> to vector<8x128xf32>
    %82 = arith.negf %81 : vector<8x128xf32>
    %83 = math.exp %82 : vector<8x128xf32>
    %cst_33 = arith.constant 1.000000e+00 : f32
    %84 = vector.broadcast %cst_33 : f32 to vector<8x128xf32>
    %85 = arith.addf %84, %83 : vector<8x128xf32>
    %86 = arith.divf %84, %85 : vector<8x128xf32>
    %87 = vector.extract_strided_slice %80 {offsets = [0, 128], sizes = [8, 128], strides = [1, 1]} : vector<8x512xf32> to vector<8x128xf32>
    %88 = arith.negf %87 : vector<8x128xf32>
    %89 = math.exp %88 : vector<8x128xf32>
    %cst_34 = arith.constant 1.000000e+00 : f32
    %90 = vector.broadcast %cst_34 : f32 to vector<8x128xf32>
    %91 = arith.addf %90, %89 : vector<8x128xf32>
    %92 = arith.divf %90, %91 : vector<8x128xf32>
    %93 = vector.extract_strided_slice %80 {offsets = [0, 256], sizes = [8, 128], strides = [1, 1]} : vector<8x512xf32> to vector<8x128xf32>
    %94 = math.tanh %93 : vector<8x128xf32>
    %95 = vector.extract_strided_slice %80 {offsets = [0, 384], sizes = [8, 128], strides = [1, 1]} : vector<8x512xf32> to vector<8x128xf32>
    %96 = arith.negf %95 : vector<8x128xf32>
    %97 = math.exp %96 : vector<8x128xf32>
    %cst_35 = arith.constant 1.000000e+00 : f32
    %98 = vector.broadcast %cst_35 : f32 to vector<8x128xf32>
    %99 = arith.addf %98, %97 : vector<8x128xf32>
    %100 = arith.divf %98, %99 : vector<8x128xf32>
    %101 = arith.mulf %92, %69 : vector<8x128xf32>
    %102 = arith.mulf %86, %94 : vector<8x128xf32>
    %103 = arith.addf %101, %102 : vector<8x128xf32>
    %104 = math.tanh %103 : vector<8x128xf32>
    %105 = arith.mulf %100, %104 : vector<8x128xf32>
    %106 = arith.truncf %105 : vector<8x128xf32> to vector<8x128xbf16>
    %c0_36 = arith.constant 0 : index
    %c2_37 = arith.constant 2 : index
    %c0_38 = arith.constant 0 : index
    %c0_39 = arith.constant 0 : index
    %107 = vector.load %arg4[%c0_36, %c2_37, %c0_38, %c0_39] : memref<1x8x8x128xbf16, #tpu.memory_space<vmem>>, vector<1x1x8x128xbf16>
    %108 = vector.shape_cast %107 : vector<1x1x8x128xbf16> to vector<8x128xbf16>
    %109 = vector.shape_cast %106 : vector<8x128xbf16> to vector<1x1x8x128xbf16>
    tpu.vector_store %arg4[%c0_36, %c2_37, %c0_38, %c0_39], %109 {strides = array<i32>} : memref<1x8x8x128xbf16, #tpu.memory_space<vmem>>, vector<1x1x8x128xbf16>,
    %c0_40 = arith.constant 0 : index
    %c3 = arith.constant 3 : index
    %c0_41 = arith.constant 0 : index
    %c0_42 = arith.constant 0 : index
    %110 = vector.load %arg2[%c0_40, %c3, %c0_41, %c0_42] : memref<1x8x8x512xbf16, #tpu.memory_space<vmem>>, vector<1x1x8x512xbf16>
    %111 = vector.shape_cast %110 : vector<1x1x8x512xbf16> to vector<8x512xbf16>
    %112 = arith.extf %111 : vector<8x512xbf16> to vector<8x512xf32>
    %cst_43 = arith.constant dense<0.000000e+00> : vector<8x512xf32>
    %113 = tpu.matmul %105, %5, %cst_43 {dimension_numbers = #tpu.dot_dimension_numbers<[1], [0], [0], [1], [0, 0, 1, 1], [], []>} : vector<8x128xf32>, vector<128x512xf32>, vector<8x512xf32> -> vector<8x512xf32>
    %114 = arith.addf %112, %113 : vector<8x512xf32>
    %115 = vector.extract_strided_slice %114 {offsets = [0, 0], sizes = [8, 128], strides = [1, 1]} : vector<8x512xf32> to vector<8x128xf32>
    %116 = arith.negf %115 : vector<8x128xf32>
    %117 = math.exp %116 : vector<8x128xf32>
    %cst_44 = arith.constant 1.000000e+00 : f32
    %118 = vector.broadcast %cst_44 : f32 to vector<8x128xf32>
    %119 = arith.addf %118, %117 : vector<8x128xf32>
    %120 = arith.divf %118, %119 : vector<8x128xf32>
    %121 = vector.extract_strided_slice %114 {offsets = [0, 128], sizes = [8, 128], strides = [1, 1]} : vector<8x512xf32> to vector<8x128xf32>
    %122 = arith.negf %121 : vector<8x128xf32>
    %123 = math.exp %122 : vector<8x128xf32>
    %cst_45 = arith.constant 1.000000e+00 : f32
    %124 = vector.broadcast %cst_45 : f32 to vector<8x128xf32>
    %125 = arith.addf %124, %123 : vector<8x128xf32>
    %126 = arith.divf %124, %125 : vector<8x128xf32>
    %127 = vector.extract_strided_slice %114 {offsets = [0, 256], sizes = [8, 128], strides = [1, 1]} : vector<8x512xf32> to vector<8x128xf32>
    %128 = math.tanh %127 : vector<8x128xf32>
    %129 = vector.extract_strided_slice %114 {offsets = [0, 384], sizes = [8, 128], strides = [1, 1]} : vector<8x512xf32> to vector<8x128xf32>
    %130 = arith.negf %129 : vector<8x128xf32>
    %131 = math.exp %130 : vector<8x128xf32>
    %cst_46 = arith.constant 1.000000e+00 : f32
    %132 = vector.broadcast %cst_46 : f32 to vector<8x128xf32>
    %133 = arith.addf %132, %131 : vector<8x128xf32>
    %134 = arith.divf %132, %133 : vector<8x128xf32>
    %135 = arith.mulf %126, %103 : vector<8x128xf32>
    %136 = arith.mulf %120, %128 : vector<8x128xf32>
    %137 = arith.addf %135, %136 : vector<8x128xf32>
    %138 = math.tanh %137 : vector<8x128xf32>
    %139 = arith.mulf %134, %138 : vector<8x128xf32>
    %140 = arith.truncf %139 : vector<8x128xf32> to vector<8x128xbf16>
    %c0_47 = arith.constant 0 : index
    %c3_48 = arith.constant 3 : index
    %c0_49 = arith.constant 0 : index
    %c0_50 = arith.constant 0 : index
    %141 = vector.load %arg4[%c0_47, %c3_48, %c0_49, %c0_50] : memref<1x8x8x128xbf16, #tpu.memory_space<vmem>>, vector<1x1x8x128xbf16>
    %142 = vector.shape_cast %141 : vector<1x1x8x128xbf16> to vector<8x128xbf16>
    %143 = vector.shape_cast %140 : vector<8x128xbf16> to vector<1x1x8x128xbf16>
    tpu.vector_store %arg4[%c0_47, %c3_48, %c0_49, %c0_50], %143 {strides = array<i32>} : memref<1x8x8x128xbf16, #tpu.memory_space<vmem>>, vector<1x1x8x128xbf16>,
    %c0_51 = arith.constant 0 : index
    %c4 = arith.constant 4 : index
    %c0_52 = arith.constant 0 : index
    %c0_53 = arith.constant 0 : index
    %144 = vector.load %arg2[%c0_51, %c4, %c0_52, %c0_53] : memref<1x8x8x512xbf16, #tpu.memory_space<vmem>>, vector<1x1x8x512xbf16>
    %145 = vector.shape_cast %144 : vector<1x1x8x512xbf16> to vector<8x512xbf16>
    %146 = arith.extf %145 : vector<8x512xbf16> to vector<8x512xf32>
    %cst_54 = arith.constant dense<0.000000e+00> : vector<8x512xf32>
    %147 = tpu.matmul %139, %5, %cst_54 {dimension_numbers = #tpu.dot_dimension_numbers<[1], [0], [0], [1], [0, 0, 1, 1], [], []>} : vector<8x128xf32>, vector<128x512xf32>, vector<8x512xf32> -> vector<8x512xf32>
    %148 = arith.addf %146, %147 : vector<8x512xf32>
    %149 = vector.extract_strided_slice %148 {offsets = [0, 0], sizes = [8, 128], strides = [1, 1]} : vector<8x512xf32> to vector<8x128xf32>
    %150 = arith.negf %149 : vector<8x128xf32>
    %151 = math.exp %150 : vector<8x128xf32>
    %cst_55 = arith.constant 1.000000e+00 : f32
    %152 = vector.broadcast %cst_55 : f32 to vector<8x128xf32>
    %153 = arith.addf %152, %151 : vector<8x128xf32>
    %154 = arith.divf %152, %153 : vector<8x128xf32>
    %155 = vector.extract_strided_slice %148 {offsets = [0, 128], sizes = [8, 128], strides = [1, 1]} : vector<8x512xf32> to vector<8x128xf32>
    %156 = arith.negf %155 : vector<8x128xf32>
    %157 = math.exp %156 : vector<8x128xf32>
    %cst_56 = arith.constant 1.000000e+00 : f32
    %158 = vector.broadcast %cst_56 : f32 to vector<8x128xf32>
    %159 = arith.addf %158, %157 : vector<8x128xf32>
    %160 = arith.divf %158, %159 : vector<8x128xf32>
    %161 = vector.extract_strided_slice %148 {offsets = [0, 256], sizes = [8, 128], strides = [1, 1]} : vector<8x512xf32> to vector<8x128xf32>
    %162 = math.tanh %161 : vector<8x128xf32>
    %163 = vector.extract_strided_slice %148 {offsets = [0, 384], sizes = [8, 128], strides = [1, 1]} : vector<8x512xf32> to vector<8x128xf32>
    %164 = arith.negf %163 : vector<8x128xf32>
    %165 = math.exp %164 : vector<8x128xf32>
    %cst_57 = arith.constant 1.000000e+00 : f32
    %166 = vector.broadcast %cst_57 : f32 to vector<8x128xf32>
    %167 = arith.addf %166, %165 : vector<8x128xf32>
    %168 = arith.divf %166, %167 : vector<8x128xf32>
    %169 = arith.mulf %160, %137 : vector<8x128xf32>
    %170 = arith.mulf %154, %162 : vector<8x128xf32>
    %171 = arith.addf %169, %170 : vector<8x128xf32>
    %172 = math.tanh %171 : vector<8x128xf32>
    %173 = arith.mulf %168, %172 : vector<8x128xf32>
    %174 = arith.truncf %173 : vector<8x128xf32> to vector<8x128xbf16>
    %c0_58 = arith.constant 0 : index
    %c4_59 = arith.constant 4 : index
    %c0_60 = arith.constant 0 : index
    %c0_61 = arith.constant 0 : index
    %175 = vector.load %arg4[%c0_58, %c4_59, %c0_60, %c0_61] : memref<1x8x8x128xbf16, #tpu.memory_space<vmem>>, vector<1x1x8x128xbf16>
    %176 = vector.shape_cast %175 : vector<1x1x8x128xbf16> to vector<8x128xbf16>
    %177 = vector.shape_cast %174 : vector<8x128xbf16> to vector<1x1x8x128xbf16>
    tpu.vector_store %arg4[%c0_58, %c4_59, %c0_60, %c0_61], %177 {strides = array<i32>} : memref<1x8x8x128xbf16, #tpu.memory_space<vmem>>, vector<1x1x8x128xbf16>,
    %c0_62 = arith.constant 0 : index
    %c5 = arith.constant 5 : index
    %c0_63 = arith.constant 0 : index
    %c0_64 = arith.constant 0 : index
    %178 = vector.load %arg2[%c0_62, %c5, %c0_63, %c0_64] : memref<1x8x8x512xbf16, #tpu.memory_space<vmem>>, vector<1x1x8x512xbf16>
    %179 = vector.shape_cast %178 : vector<1x1x8x512xbf16> to vector<8x512xbf16>
    %180 = arith.extf %179 : vector<8x512xbf16> to vector<8x512xf32>
    %cst_65 = arith.constant dense<0.000000e+00> : vector<8x512xf32>
    %181 = tpu.matmul %173, %5, %cst_65 {dimension_numbers = #tpu.dot_dimension_numbers<[1], [0], [0], [1], [0, 0, 1, 1], [], []>} : vector<8x128xf32>, vector<128x512xf32>, vector<8x512xf32> -> vector<8x512xf32>
    %182 = arith.addf %180, %181 : vector<8x512xf32>
    %183 = vector.extract_strided_slice %182 {offsets = [0, 0], sizes = [8, 128], strides = [1, 1]} : vector<8x512xf32> to vector<8x128xf32>
    %184 = arith.negf %183 : vector<8x128xf32>
    %185 = math.exp %184 : vector<8x128xf32>
    %cst_66 = arith.constant 1.000000e+00 : f32
    %186 = vector.broadcast %cst_66 : f32 to vector<8x128xf32>
    %187 = arith.addf %186, %185 : vector<8x128xf32>
    %188 = arith.divf %186, %187 : vector<8x128xf32>
    %189 = vector.extract_strided_slice %182 {offsets = [0, 128], sizes = [8, 128], strides = [1, 1]} : vector<8x512xf32> to vector<8x128xf32>
    %190 = arith.negf %189 : vector<8x128xf32>
    %191 = math.exp %190 : vector<8x128xf32>
    %cst_67 = arith.constant 1.000000e+00 : f32
    %192 = vector.broadcast %cst_67 : f32 to vector<8x128xf32>
    %193 = arith.addf %192, %191 : vector<8x128xf32>
    %194 = arith.divf %192, %193 : vector<8x128xf32>
    %195 = vector.extract_strided_slice %182 {offsets = [0, 256], sizes = [8, 128], strides = [1, 1]} : vector<8x512xf32> to vector<8x128xf32>
    %196 = math.tanh %195 : vector<8x128xf32>
    %197 = vector.extract_strided_slice %182 {offsets = [0, 384], sizes = [8, 128], strides = [1, 1]} : vector<8x512xf32> to vector<8x128xf32>
    %198 = arith.negf %197 : vector<8x128xf32>
    %199 = math.exp %198 : vector<8x128xf32>
    %cst_68 = arith.constant 1.000000e+00 : f32
    %200 = vector.broadcast %cst_68 : f32 to vector<8x128xf32>
    %201 = arith.addf %200, %199 : vector<8x128xf32>
    %202 = arith.divf %200, %201 : vector<8x128xf32>
    %203 = arith.mulf %194, %171 : vector<8x128xf32>
    %204 = arith.mulf %188, %196 : vector<8x128xf32>
    %205 = arith.addf %203, %204 : vector<8x128xf32>
    %206 = math.tanh %205 : vector<8x128xf32>
    %207 = arith.mulf %202, %206 : vector<8x128xf32>
    %208 = arith.truncf %207 : vector<8x128xf32> to vector<8x128xbf16>
    %c0_69 = arith.constant 0 : index
    %c5_70 = arith.constant 5 : index
    %c0_71 = arith.constant 0 : index
    %c0_72 = arith.constant 0 : index
    %209 = vector.load %arg4[%c0_69, %c5_70, %c0_71, %c0_72] : memref<1x8x8x128xbf16, #tpu.memory_space<vmem>>, vector<1x1x8x128xbf16>
    %210 = vector.shape_cast %209 : vector<1x1x8x128xbf16> to vector<8x128xbf16>
    %211 = vector.shape_cast %208 : vector<8x128xbf16> to vector<1x1x8x128xbf16>
    tpu.vector_store %arg4[%c0_69, %c5_70, %c0_71, %c0_72], %211 {strides = array<i32>} : memref<1x8x8x128xbf16, #tpu.memory_space<vmem>>, vector<1x1x8x128xbf16>,
    %c0_73 = arith.constant 0 : index
    %c6 = arith.constant 6 : index
    %c0_74 = arith.constant 0 : index
    %c0_75 = arith.constant 0 : index
    %212 = vector.load %arg2[%c0_73, %c6, %c0_74, %c0_75] : memref<1x8x8x512xbf16, #tpu.memory_space<vmem>>, vector<1x1x8x512xbf16>
    %213 = vector.shape_cast %212 : vector<1x1x8x512xbf16> to vector<8x512xbf16>
    %214 = arith.extf %213 : vector<8x512xbf16> to vector<8x512xf32>
    %cst_76 = arith.constant dense<0.000000e+00> : vector<8x512xf32>
    %215 = tpu.matmul %207, %5, %cst_76 {dimension_numbers = #tpu.dot_dimension_numbers<[1], [0], [0], [1], [0, 0, 1, 1], [], []>} : vector<8x128xf32>, vector<128x512xf32>, vector<8x512xf32> -> vector<8x512xf32>
    %216 = arith.addf %214, %215 : vector<8x512xf32>
    %217 = vector.extract_strided_slice %216 {offsets = [0, 0], sizes = [8, 128], strides = [1, 1]} : vector<8x512xf32> to vector<8x128xf32>
    %218 = arith.negf %217 : vector<8x128xf32>
    %219 = math.exp %218 : vector<8x128xf32>
    %cst_77 = arith.constant 1.000000e+00 : f32
    %220 = vector.broadcast %cst_77 : f32 to vector<8x128xf32>
    %221 = arith.addf %220, %219 : vector<8x128xf32>
    %222 = arith.divf %220, %221 : vector<8x128xf32>
    %223 = vector.extract_strided_slice %216 {offsets = [0, 128], sizes = [8, 128], strides = [1, 1]} : vector<8x512xf32> to vector<8x128xf32>
    %224 = arith.negf %223 : vector<8x128xf32>
    %225 = math.exp %224 : vector<8x128xf32>
    %cst_78 = arith.constant 1.000000e+00 : f32
    %226 = vector.broadcast %cst_78 : f32 to vector<8x128xf32>
    %227 = arith.addf %226, %225 : vector<8x128xf32>
    %228 = arith.divf %226, %227 : vector<8x128xf32>
    %229 = vector.extract_strided_slice %216 {offsets = [0, 256], sizes = [8, 128], strides = [1, 1]} : vector<8x512xf32> to vector<8x128xf32>
    %230 = math.tanh %229 : vector<8x128xf32>
    %231 = vector.extract_strided_slice %216 {offsets = [0, 384], sizes = [8, 128], strides = [1, 1]} : vector<8x512xf32> to vector<8x128xf32>
    %232 = arith.negf %231 : vector<8x128xf32>
    %233 = math.exp %232 : vector<8x128xf32>
    %cst_79 = arith.constant 1.000000e+00 : f32
    %234 = vector.broadcast %cst_79 : f32 to vector<8x128xf32>
    %235 = arith.addf %234, %233 : vector<8x128xf32>
    %236 = arith.divf %234, %235 : vector<8x128xf32>
    %237 = arith.mulf %228, %205 : vector<8x128xf32>
    %238 = arith.mulf %222, %230 : vector<8x128xf32>
    %239 = arith.addf %237, %238 : vector<8x128xf32>
    %240 = math.tanh %239 : vector<8x128xf32>
    %241 = arith.mulf %236, %240 : vector<8x128xf32>
    %242 = arith.truncf %241 : vector<8x128xf32> to vector<8x128xbf16>
    %c0_80 = arith.constant 0 : index
    %c6_81 = arith.constant 6 : index
    %c0_82 = arith.constant 0 : index
    %c0_83 = arith.constant 0 : index
    %243 = vector.load %arg4[%c0_80, %c6_81, %c0_82, %c0_83] : memref<1x8x8x128xbf16, #tpu.memory_space<vmem>>, vector<1x1x8x128xbf16>
    %244 = vector.shape_cast %243 : vector<1x1x8x128xbf16> to vector<8x128xbf16>
    %245 = vector.shape_cast %242 : vector<8x128xbf16> to vector<1x1x8x128xbf16>
    tpu.vector_store %arg4[%c0_80, %c6_81, %c0_82, %c0_83], %245 {strides = array<i32>} : memref<1x8x8x128xbf16, #tpu.memory_space<vmem>>, vector<1x1x8x128xbf16>,
    %c0_84 = arith.constant 0 : index
    %c7 = arith.constant 7 : index
    %c0_85 = arith.constant 0 : index
    %c0_86 = arith.constant 0 : index
    %246 = vector.load %arg2[%c0_84, %c7, %c0_85, %c0_86] : memref<1x8x8x512xbf16, #tpu.memory_space<vmem>>, vector<1x1x8x512xbf16>
    %247 = vector.shape_cast %246 : vector<1x1x8x512xbf16> to vector<8x512xbf16>
    %248 = arith.extf %247 : vector<8x512xbf16> to vector<8x512xf32>
    %cst_87 = arith.constant dense<0.000000e+00> : vector<8x512xf32>
    %249 = tpu.matmul %241, %5, %cst_87 {dimension_numbers = #tpu.dot_dimension_numbers<[1], [0], [0], [1], [0, 0, 1, 1], [], []>} : vector<8x128xf32>, vector<128x512xf32>, vector<8x512xf32> -> vector<8x512xf32>
    %250 = arith.addf %248, %249 : vector<8x512xf32>
    %251 = vector.extract_strided_slice %250 {offsets = [0, 0], sizes = [8, 128], strides = [1, 1]} : vector<8x512xf32> to vector<8x128xf32>
    %252 = arith.negf %251 : vector<8x128xf32>
    %253 = math.exp %252 : vector<8x128xf32>
    %cst_88 = arith.constant 1.000000e+00 : f32
    %254 = vector.broadcast %cst_88 : f32 to vector<8x128xf32>
    %255 = arith.addf %254, %253 : vector<8x128xf32>
    %256 = arith.divf %254, %255 : vector<8x128xf32>
    %257 = vector.extract_strided_slice %250 {offsets = [0, 128], sizes = [8, 128], strides = [1, 1]} : vector<8x512xf32> to vector<8x128xf32>
    %258 = arith.negf %257 : vector<8x128xf32>
    %259 = math.exp %258 : vector<8x128xf32>
    %cst_89 = arith.constant 1.000000e+00 : f32
    %260 = vector.broadcast %cst_89 : f32 to vector<8x128xf32>
    %261 = arith.addf %260, %259 : vector<8x128xf32>
    %262 = arith.divf %260, %261 : vector<8x128xf32>
    %263 = vector.extract_strided_slice %250 {offsets = [0, 256], sizes = [8, 128], strides = [1, 1]} : vector<8x512xf32> to vector<8x128xf32>
    %264 = math.tanh %263 : vector<8x128xf32>
    %265 = vector.extract_strided_slice %250 {offsets = [0, 384], sizes = [8, 128], strides = [1, 1]} : vector<8x512xf32> to vector<8x128xf32>
    %266 = arith.negf %265 : vector<8x128xf32>
    %267 = math.exp %266 : vector<8x128xf32>
    %cst_90 = arith.constant 1.000000e+00 : f32
    %268 = vector.broadcast %cst_90 : f32 to vector<8x128xf32>
    %269 = arith.addf %268, %267 : vector<8x128xf32>
    %270 = arith.divf %268, %269 : vector<8x128xf32>
    %271 = arith.mulf %262, %239 : vector<8x128xf32>
    %272 = arith.mulf %256, %264 : vector<8x128xf32>
    %273 = arith.addf %271, %272 : vector<8x128xf32>
    %274 = math.tanh %273 : vector<8x128xf32>
    %275 = arith.mulf %270, %274 : vector<8x128xf32>
    %276 = arith.truncf %275 : vector<8x128xf32> to vector<8x128xbf16>
    %c0_91 = arith.constant 0 : index
    %c7_92 = arith.constant 7 : index
    %c0_93 = arith.constant 0 : index
    %c0_94 = arith.constant 0 : index
    %277 = vector.load %arg4[%c0_91, %c7_92, %c0_93, %c0_94] : memref<1x8x8x128xbf16, #tpu.memory_space<vmem>>, vector<1x1x8x128xbf16>
    %278 = vector.shape_cast %277 : vector<1x1x8x128xbf16> to vector<8x128xbf16>
    %279 = vector.shape_cast %276 : vector<8x128xbf16> to vector<1x1x8x128xbf16>
    tpu.vector_store %arg4[%c0_91, %c7_92, %c0_93, %c0_94], %279 {strides = array<i32>} : memref<1x8x8x128xbf16, #tpu.memory_space<vmem>>, vector<1x1x8x128xbf16>,
    %c0_95 = arith.constant 0 : index
    %c0_96 = arith.constant 0 : index
    %280 = vector.load %arg6[%c0_95, %c0_96] : memref<8x128xf32, #tpu.memory_space<vmem>>, vector<8x128xf32>
    tpu.vector_store %arg6[%c0_95, %c0_96], %275 {strides = array<i32>} : memref<8x128xf32, #tpu.memory_space<vmem>>, vector<8x128xf32>,
    %c0_97 = arith.constant 0 : index
    %c0_98 = arith.constant 0 : index
    %281 = vector.load %arg7[%c0_97, %c0_98] : memref<8x128xf32, #tpu.memory_space<vmem>>, vector<8x128xf32>
    tpu.vector_store %arg7[%c0_97, %c0_98], %273 {strides = array<i32>} : memref<8x128xf32, #tpu.memory_space<vmem>>, vector<8x128xf32>,
    %c0_i32_99 = arith.constant 0 : i32
    %282 = arith.cmpi eq, %arg1, %c0_i32_99 : i32
    %283 = arith.extui %282 : i1 to i32
    %c0_i32_100 = arith.constant 0 : i32
    %284 = arith.cmpi ne, %283, %c0_i32_100 : i32
    scf.if %284 {
      %c0_101 = arith.constant 0 : index
      %c0_102 = arith.constant 0 : index
      %c0_103 = arith.constant 0 : index
      %285 = vector.load %arg5[%c0_101, %c0_102, %c0_103] : memref<1x8x128xf32, #tpu.memory_space<vmem>>, vector<1x8x128xf32>
      %286 = vector.shape_cast %285 : vector<1x8x128xf32> to vector<8x128xf32>
      %287 = vector.shape_cast %275 : vector<8x128xf32> to vector<1x8x128xf32>
      tpu.vector_store %arg5[%c0_101, %c0_102, %c0_103], %287 {strides = array<i32>} : memref<1x8x128xf32, #tpu.memory_space<vmem>>, vector<1x8x128xf32>,
    } else {
    }
    return
  }
  func.func @transform_0(%arg0: i32, %arg1: i32) -> (i32, i32, i32, i32) {
    %c0_i32 = arith.constant 0 : i32
    %c0_i32_0 = arith.constant 0 : i32
    %c0_i32_1 = arith.constant 0 : i32
    return %arg0, %arg1, %c0_i32, %c0_i32_0 : i32, i32, i32, i32
  }
  func.func @transform_1(%arg0: i32, %arg1: i32) -> (i32, i32, i32) {
    %c0_i32 = arith.constant 0 : i32
    %c0_i32_0 = arith.constant 0 : i32
    %c0_i32_1 = arith.constant 0 : i32
    return %arg0, %c0_i32, %c0_i32_0 : i32, i32, i32
  }
  func.func @transform_2(%arg0: i32, %arg1: i32) -> (i32, i32, i32, i32) {
    %c0_i32 = arith.constant 0 : i32
    %c0_i32_0 = arith.constant 0 : i32
    %c0_i32_1 = arith.constant 0 : i32
    return %arg0, %arg1, %c0_i32, %c0_i32_0 : i32, i32, i32, i32
  }
  func.func @transform_3(%arg0: i32, %arg1: i32) -> (i32, i32, i32) {
    %c0_i32 = arith.constant 0 : i32
    %c0_i32_0 = arith.constant 0 : i32
    %c0_i32_1 = arith.constant 0 : i32
    return %arg0, %c0_i32, %c0_i32_0 : i32, i32, i32
  }
}

</mosaic_0001>

<llo_original>
// kernel: rnn_model_forward.5
$region0: #{rnn_model_forward.5}
  #allocation0 [shape = 'u32[]', space=smem, size = 0x4, offset = 0x4, fixed_abs, tag = 'smem constant byte address 0x4 - core index']
  #allocation1 [shape = 'u32[144,128]{1,0:T(1,128)}', space=vmem, size = 0x12000, scoped, tag = 'internal scratch']
  %s0 = inlined_call_operand.vmem [shape: f32[8,512], index: 0, kind: input, shape index: {}]
  %s1 = inlined_call_operand.vmem [shape: bf16[512,128], index: 1, kind: input, shape index: {}]
  %s2 = inlined_call_operand.vmem [shape: f32[1,128], index: 2, kind: input, shape index: {}]
  %s3 = inlined_call_operand.vmem [shape: f32[8,128], index: 3, kind: output, shape index: {}]
  %s4 = sld [smem:[#allocation0]]
  $region53: #{rnn_model_forward.5} parent=0
    _
  %s6 = ssub.s32 1, %s4
  %s7 = scalar_select 0, %s6, %s4
  loop: start=0, step=1, limit=4
  $region2: #{rnn_model_forward.5} parent=0 // loop_pre_header
    _
  $region3: #{rnn_model_forward.5} parent=0 // loop_header
    %s9 = sphi 0, %s13
    %p10 = scmp.ge.s32.totalorder %s9, 4
    %s19 = sphi 0, %s21
    %s22 = sphi 0, %s19
    %s23 = sphi 0, %s22
    %s39 = sphi 0, %s23
    %s45 = sphi 0, %s47
    %s48 = sphi 0, %s45
    %s49 = sphi 0, %s48
    %s65 = sphi 0, %s49
    %s69 = sphi 0, %s69
    %s71 = sphi 0, %s69
    %s72 = sphi 0, %s71
    %s86 = sphi 0, %s72
    %s90 = sphi 0, %s90
    %s92 = sphi 0, %s90
    %s93 = sphi 0, %s92
    %s107 = sphi 0, %s93
  $region4: #{rnn_model_forward.5} parent=0 // loop_header_branch
    %12 = sbr.rel (%p10) target = $region8
  $region5: #{rnn_model_forward.5} parent=0 // loop_body
    %s14 = ssub.s32 %s9, 1
    %s15 = ssub.s32 %s9, 2
    %s16 = sadd.s32 %s9, 1
    %s17 = ssub.s32 %s9, %s16
    %p18 = scmp.eq.s32.totalorder %s17, 0
    %s20 = sadd.s32 %s19, 1
    %s21 = scalar_select %p18, %s19, %s20
    %p24 = pneg %p18
    %p25 = scmp.eq.s32.totalorder %s9, 1
    %p26 = por %p24, %p25
    %p27 = scmp.ne.s32.totalorder %s19, %s22
    %p28 = scmp.eq.s32.totalorder %s9, 0
    %p29 = por %p27, %p28
    %p30 = scmp.ne.s32.totalorder %s19, %s22
    %p31 = scmp.eq.s32.totalorder %s14, 1
    %p32 = por %p30, %p31
    %p33 = scmp.ne.s32.totalorder %s22, %s23
    %p34 = scmp.eq.s32.totalorder %s14, 0
    %p35 = por %p33, %p34
    %p36 = scmp.ne.s32.totalorder %s22, %s23
    %p37 = scmp.eq.s32.totalorder %s15, 1
    %p38 = por %p36, %p37
    %p40 = scmp.ne.s32.totalorder %s23, %s39
    %p41 = scmp.eq.s32.totalorder %s15, 0
    %p42 = por %p40, %p41
    %s43 = ssub.s32 %s9, %s16
    %p44 = scmp.eq.s32.totalorder %s43, 0
    %s46 = sadd.s32 %s45, 1
    %s47 = scalar_select %p44, %s45, %s46
    %p50 = pneg %p44
    %p51 = scmp.eq.s32.totalorder %s9, 1
    %p52 = por %p50, %p51
    %p53 = scmp.ne.s32.totalorder %s45, %s48
    %p54 = scmp.eq.s32.totalorder %s9, 0
    %p55 = por %p53, %p54
    %p56 = scmp.ne.s32.totalorder %s45, %s48
    %p57 = scmp.eq.s32.totalorder %s14, 1
    %p58 = por %p56, %p57
    %p59 = scmp.ne.s32.totalorder %s48, %s49
    %p60 = scmp.eq.s32.totalorder %s14, 0
    %p61 = por %p59, %p60
    %p62 = scmp.ne.s32.totalorder %s48, %s49
    %p63 = scmp.eq.s32.totalorder %s15, 1
    %p64 = por %p62, %p63
    %p66 = scmp.ne.s32.totalorder %s49, %s65
    %p67 = scmp.eq.s32.totalorder %s15, 0
    %p68 = por %p66, %p67
    %s70 = sadd.s32 %s69, 1
    %p73 = scmp.eq.s32.totalorder %s9, 1
    %p74 = scmp.ne.s32.totalorder %s69, %s71
    %p75 = scmp.eq.s32.totalorder %s9, 0
    %p76 = por %p74, %p75
    %p77 = scmp.ne.s32.totalorder %s69, %s71
    %p78 = scmp.eq.s32.totalorder %s14, 1
    %p79 = por %p77, %p78
    %p80 = scmp.ne.s32.totalorder %s71, %s72
    %p81 = scmp.eq.s32.totalorder %s14, 0
    %p82 = por %p80, %p81
    %p83 = scmp.ne.s32.totalorder %s71, %s72
    %p84 = scmp.eq.s32.totalorder %s15, 1
    %p85 = por %p83, %p84
    %p87 = scmp.ne.s32.totalorder %s72, %s86
    %p88 = scmp.eq.s32.totalorder %s15, 0
    %p89 = por %p87, %p88
    %s91 = sadd.s32 %s90, 1
    %p94 = scmp.eq.s32.totalorder %s9, 1
    %p95 = scmp.ne.s32.totalorder %s90, %s92
    %p96 = scmp.eq.s32.totalorder %s9, 0
    %p97 = por %p95, %p96
    %p98 = scmp.ne.s32.totalorder %s90, %s92
    %p99 = scmp.eq.s32.totalorder %s14, 1
    %p100 = por %p98, %p99
    %p101 = scmp.ne.s32.totalorder %s92, %s93
    %p102 = scmp.eq.s32.totalorder %s14, 0
    %p103 = por %p101, %p102
    %p104 = scmp.ne.s32.totalorder %s92, %s93
    %p105 = scmp.eq.s32.totalorder %s15, 1
    %p106 = por %p104, %p105
    %p108 = scmp.ne.s32.totalorder %s93, %s107
    %p109 = scmp.eq.s32.totalorder %s15, 0
    %p110 = por %p108, %p109
    %p111 = scmp.le.s32.totalorder 1, %s9
    %p112 = scmp.lt.s32.totalorder %s9, 3
    %p113 = pnand %p111, %p112
    %p114 = pneg %p113
    // Predicated region
    $region9: #{rnn_model_forward.5} parent=5 // pred_check
      _
    $region10: #{rnn_model_forward.5} parent=5 // pred_check_branch
      %116 = sbr.rel (%p113) target = $region12
    $region11: #{rnn_model_forward.5} parent=5 // pred_region
      %s117 = ssub.s32 %s9, 1
      // Predicated region
      $region13: #{rnn_model_forward.5} parent=11 // pred_check
        %p118 = pneg %p82
      $region14: #{rnn_model_forward.5} parent=11 // pred_check_branch
        %120 = sbr.rel (%p118) target = $region16
      $region15: #{rnn_model_forward.5} parent=11 // pred_region
        _
      $region16: #{rnn_model_forward.5} parent=11 // pred_fallthru
        _
    $region12: #{rnn_model_forward.5} parent=5 // pred_fallthru
      _
    %p121 = scmp.lt.s32.totalorder %s9, 2
    // Predicated region
    $region17: #{rnn_model_forward.5} parent=5 // pred_check
      %p122 = pneg %p121
    $region18: #{rnn_model_forward.5} parent=5 // pred_check_branch
      %124 = sbr.rel (%p122) target = $region20
    $region19: #{rnn_model_forward.5} parent=5 // pred_region
      // Predicated region
      $region21: #{rnn_model_forward.5} parent=19 // pred_check
        %p125 = pneg %p29
      $region22: #{rnn_model_forward.5} parent=19 // pred_check_branch
        %127 = sbr.rel (%p125) target = $region24
      $region23: #{rnn_model_forward.5} parent=19 // pred_region
        %s128 = smul.u32 2, %s9
        %p129 = scmp.lt.s32.totalorder %s128, 3
        %s130 = scalar_select %p129, %s128, 3
        %s131 = smul.addr %s130, 8
        %s132 = scalar_lea.vmem %s0, %s131
        %s133 = smul.u32 2, %s9
      $region24: #{rnn_model_forward.5} parent=19 // pred_fallthru
        _
      // Predicated region
      $region25: #{rnn_model_forward.5} parent=19 // pred_check
        %p134 = pneg %p55
      $region26: #{rnn_model_forward.5} parent=19 // pred_check_branch
        %136 = sbr.rel (%p134) target = $region28
      $region27: #{rnn_model_forward.5} parent=19 // pred_region
        %s137 = smul.u32 32, %s9
        %p138 = scmp.lt.s32.totalorder %s137, 63
        %s139 = scalar_select %p138, %s137, 63
        %s140 = smul.addr %s139, 4
        %s141 = scalar_lea.vmem %s1, %s140
        %s142 = smul.u32 32, %s9
      $region28: #{rnn_model_forward.5} parent=19 // pred_fallthru
        _
    $region20: #{rnn_model_forward.5} parent=5 // pred_fallthru
      _
    %p143 = scmp.le.s32.totalorder 1, %s9
    %p144 = scmp.lt.s32.totalorder %s9, 3
    %p145 = pnand %p143, %p144
    %p146 = pneg %p145
    // Predicated region
    $region29: #{rnn_model_forward.5} parent=5 // pred_check
      _
    $region30: #{rnn_model_forward.5} parent=5 // pred_check_branch
      %148 = sbr.rel (%p145) target = $region32
    $region31: #{rnn_model_forward.5} parent=5 // pred_region
      %s149 = ssub.s32 %s9, 1
      %s150 = smul.u32 2, %s14
      %p151 = scmp.lt.s32.totalorder %s150, 3
      %s152 = scalar_select %p151, %s150, 3
      %s153 = smul.addr %s152, 8
      %s154 = scalar_lea.vmem %s0, %s153
      %p155 = pneg %p35
      %p156 = pneg %p32
      %s157 = smul.u32 32, %s14
      %p158 = scmp.lt.s32.totalorder %s157, 63
      %s159 = scalar_select %p158, %s157, 63
      %s160 = smul.addr %s159, 4
      %s161 = scalar_lea.vmem %s1, %s160
      %p162 = pneg %p61
      %p163 = pneg %p58
      %p164 = pneg %p82
      %p165 = pneg %p79
      %p166 = pneg %p103
      %p167 = pneg %p100
      %s168 = smul.u32 2, %s14
      %p169 = scmp.lt.s32.totalorder %s168, 3
      %s170 = scalar_select %p169, %s168, 3
      %s171 = smul.addr %s170, 8
      %s172 = scalar_lea.vmem %s0, %s171
      %s173 = smul.u32 2, %s14
      %s174 = smul.u32 32, %s14
      %p175 = scmp.lt.s32.totalorder %s174, 63
      %s176 = scalar_select %p175, %s174, 63
      %s177 = smul.addr %s176, 4
      %s178 = scalar_lea.vmem %s1, %s177
      %s179 = smul.u32 32, %s14
      %p180 = scmp.eq.s32.totalorder %s14, 0
      // Predicated region
      $region33: #{rnn_model_forward.5} parent=31 // pred_check
        %p181 = pneg %p180
      $region34: #{rnn_model_forward.5} parent=31 // pred_check_branch
        %183 = sbr.rel (%p181) target = $region36
      $region35: #{rnn_model_forward.5} parent=31 // pred_region
        %184 = vst [vmem:[%s3] sm:$0xff] 0.0
      $region36: #{rnn_model_forward.5} parent=31 // pred_fallthru
        _
      %v185 = vld [vmem:[%s3] sm:$0xff]
      %v186 = vld [vmem:[%s172] sm:$0xff]
      %v187 = vld [vmem:[%s172 + $0x8] sm:$0xff]
      %v188 = vld [vmem:[%s178] sm:$0xf]
      %v189 = vld [vmem:[%s178 + $0x4] sm:$0xf]
      %v190 = vld [vmem:[%s178 + $0x8] sm:$0xf]
      %v191 = vld [vmem:[%s178 + $0xc] sm:$0xf]
      %v192 = vld [vmem:[%s178 + $0x10] sm:$0xf]
      %v193 = vld [vmem:[%s178 + $0x14] sm:$0xf]
      %v194 = vld [vmem:[%s178 + $0x18] sm:$0xf]
      %v195 = vld [vmem:[%s178 + $0x1c] sm:$0xf]
      %v196 = vld [vmem:[%s178 + $0x20] sm:$0xf]
      %v197 = vld [vmem:[%s178 + $0x24] sm:$0xf]
      %v198 = vld [vmem:[%s178 + $0x28] sm:$0xf]
      %v199 = vld [vmem:[%s178 + $0x2c] sm:$0xf]
      %v200 = vld [vmem:[%s178 + $0x30] sm:$0xf]
      %v201 = vld [vmem:[%s178 + $0x34] sm:$0xf]
      %v202 = vld [vmem:[%s178 + $0x38] sm:$0xf]
      %v203 = vld [vmem:[%s178 + $0x3c] sm:$0xf]
      %v204 = vld [vmem:[%s178 + $0x40] sm:$0xf]
      %v205 = vld [vmem:[%s178 + $0x44] sm:$0xf]
      %v206 = vld [vmem:[%s178 + $0x48] sm:$0xf]
      %v207 = vld [vmem:[%s178 + $0x4c] sm:$0xf]
      %v208 = vld [vmem:[%s178 + $0x50] sm:$0xf]
      %v209 = vld [vmem:[%s178 + $0x54] sm:$0xf]
      %v210 = vld [vmem:[%s178 + $0x58] sm:$0xf]
      %v211 = vld [vmem:[%s178 + $0x5c] sm:$0xf]
      %v212 = vld [vmem:[%s178 + $0x60] sm:$0xf]
      %v213 = vld [vmem:[%s178 + $0x64] sm:$0xf]
      %v214 = vld [vmem:[%s178 + $0x68] sm:$0xf]
      %v215 = vld [vmem:[%s178 + $0x6c] sm:$0xf]
      %v216 = vld [vmem:[%s178 + $0x70] sm:$0xf]
      %v217 = vld [vmem:[%s178 + $0x74] sm:$0xf]
      %v218 = vld [vmem:[%s178 + $0x78] sm:$0xf]
      %v219 = vld [vmem:[%s178 + $0x7c] sm:$0xf]
      %v220 = vunpack.c.l.bf16 %v188
      %v221 = vunpack.c.l.bf16 %v189
      %v222 = vunpack.c.l.bf16 %v190
      %v223 = vunpack.c.l.bf16 %v191
      %v224 = vunpack.c.l.bf16 %v192
      %v225 = vunpack.c.l.bf16 %v193
      %v226 = vunpack.c.l.bf16 %v194
      %v227 = vunpack.c.l.bf16 %v195
      %v228 = vunpack.c.l.bf16 %v196
      %v229 = vunpack.c.l.bf16 %v197
      %v230 = vunpack.c.l.bf16 %v198
      %v231 = vunpack.c.l.bf16 %v199
      %v232 = vunpack.c.l.bf16 %v200
      %v233 = vunpack.c.l.bf16 %v201
      %v234 = vunpack.c.l.bf16 %v202
      %v235 = vunpack.c.l.bf16 %v203
      %v236 = vunpack.c.l.bf16 %v204
      %v237 = vunpack.c.l.bf16 %v205
      %v238 = vunpack.c.l.bf16 %v206
      %v239 = vunpack.c.l.bf16 %v207
      %v240 = vunpack.c.l.bf16 %v208
      %v241 = vunpack.c.l.bf16 %v209
      %v242 = vunpack.c.l.bf16 %v210
      %v243 = vunpack.c.l.bf16 %v211
      %v244 = vunpack.c.l.bf16 %v212
      %v245 = vunpack.c.l.bf16 %v213
      %v246 = vunpack.c.l.bf16 %v214
      %v247 = vunpack.c.l.bf16 %v215
      %v248 = vunpack.c.l.bf16 %v216
      %v249 = vunpack.c.l.bf16 %v217
      %v250 = vunpack.c.l.bf16 %v218
      %v251 = vunpack.c.l.bf16 %v219
      %252 = vmatprep.subr.mxu0 0.0
      %253 = vmatpush1.msra.mxu0 %v220
      %254 = vmatprep.subr.mxu0 0.0
      %255 = vmatpush1.msra.mxu0 %v221
      %256 = vmatprep.subr.mxu0 0.0
      %257 = vmatpush1.msra.mxu0 %v222
      %258 = vmatprep.subr.mxu0 0.0
      %259 = vmatpush1.msra.mxu0 %v223
      %260 = vmatprep.subr.mxu0 0.0
      %261 = vmatpush1.msra.mxu0 %v224
      %262 = vmatprep.subr.mxu0 0.0
      %263 = vmatpush1.msra.mxu0 %v225
      %264 = vmatprep.subr.mxu0 0.0
      %265 = vmatpush1.msra.mxu0 %v226
      %266 = vmatprep.subr.mxu0 0.0
      %267 = vmatpush1.msra.mxu0 %v227
      %268 = vmatprep.subr.mxu0 0.0
      %269 = vmatpush1.msra.mxu0 %v228
      %270 = vmatprep.subr.mxu0 0.0
      %271 = vmatpush1.msra.mxu0 %v229
      %272 = vmatprep.subr.mxu0 0.0
      %273 = vmatpush1.msra.mxu0 %v230
      %274 = vmatprep.subr.mxu0 0.0
      %275 = vmatpush1.msra.mxu0 %v231
      %276 = vmatprep.subr.mxu0 0.0
      %277 = vmatpush1.msra.mxu0 %v232
      %278 = vmatprep.subr.mxu0 0.0
      %279 = vmatpush1.msra.mxu0 %v233
      %280 = vmatprep.subr.mxu0 0.0
      %281 = vmatpush1.msra.mxu0 %v234
      %282 = vmatprep.subr.mxu0 0.0
      %283 = vmatpush1.msra.mxu0 %v235
      %284 = vmatprep.subr.mxu0 0.0
      %285 = vmatpush1.msra.mxu0 %v236
      %286 = vmatprep.subr.mxu0 0.0
      %287 = vmatpush1.msra.mxu0 %v237
      %288 = vmatprep.subr.mxu0 0.0
      %289 = vmatpush1.msra.mxu0 %v238
      %290 = vmatprep.subr.mxu0 0.0
      %291 = vmatpush1.msra.mxu0 %v239
      %292 = vmatprep.subr.mxu0 0.0
      %293 = vmatpush1.msra.mxu0 %v240
      %294 = vmatprep.subr.mxu0 0.0
      %295 = vmatpush1.msra.mxu0 %v241
      %296 = vmatprep.subr.mxu0 0.0
      %297 = vmatpush1.msra.mxu0 %v242
      %298 = vmatprep.subr.mxu0 0.0
      %299 = vmatpush1.msra.mxu0 %v243
      %300 = vmatprep.subr.mxu0 0.0
      %301 = vmatpush1.msra.mxu0 %v244
      %302 = vmatprep.subr.mxu0 0.0
      %303 = vmatpush1.msra.mxu0 %v245
      %304 = vmatprep.subr.mxu0 0.0
      %305 = vmatpush1.msra.mxu0 %v246
      %306 = vmatprep.subr.mxu0 0.0
      %307 = vmatpush1.msra.mxu0 %v247
      %308 = vmatprep.subr.mxu0 0.0
      %309 = vmatpush1.msra.mxu0 %v248
      %310 = vmatprep.subr.mxu0 0.0
      %311 = vmatpush1.msra.mxu0 %v249
      %312 = vmatprep.subr.mxu0 0.0
      %313 = vmatpush1.msra.mxu0 %v250
      %314 = vmatprep.subr.mxu0 0.0
      %315 = vmatpush1.msra.mxu0 %v251
      %316 = vmatprep.mubr.f32.mxu0 %v187
      %317 = vmatmul.mubr.f32.gmra.mrb[0].mxu0 %v186
      %v318 = vpop.f32.mrb[0].mxu0
      %v319 = vadd.f32 0.0, %v318
      %v320 = vpop.f32.mrb[0].mxu0
      %321 = vdwg.mxu0
      %v322 = vadd.f32 %v185, %v319
      %323 = vst [vmem:[%s3] sm:$0xff] %v322
      %p324 = scmp.eq.s32.totalorder %s14, 1
      // Predicated region
      $region37: #{rnn_model_forward.5} parent=31 // pred_check
        %p325 = pneg %p324
      $region38: #{rnn_model_forward.5} parent=31 // pred_check_branch
        %327 = sbr.rel (%p325) target = $region40
      $region39: #{rnn_model_forward.5} parent=31 // pred_region
        %v328 = vld [vmem:[%s3] sm:$0xff]
        %v329 = vld [vmem:[%s2] sm:$0x1]
        %v331 = vlaneseq
        %v332 = vshrl.u32 %v331, 7
        %v333 = vsub.s32 0, %v332
        %v334 = vrot.slane %v329, %v333
        %v336 = vadd.f32 %v328, %v334
        %v337 = vlaneseq
        %v338 = vand.u32 %v337, 127
        %vm339 = vcmp.lt.s32.totalorder %v338, 8
        %v340 = vsel %vm339, %v336, -1e+30
        %341 = vmax.xlane.f32.xlu0 %v340
        %v342 = vpop.xlane.xlu0 %341
        %v343 = vsub.f32 %v340, %v342
        %v344 = vmul.f32 %v343, 1.442695
        %v345 = vpow.pop %v344
        %346 = vadd.xlane.f32.xlu0 %v345
        %v347 = vpop.xlane.xlu0 %346
        %v348 = vlog2.pop %v347
        %v349 = vmul.f32 %v348, 0.6931472
        %v350 = vsub.f32 %v343, %v349
        %351 = vst [vmem:[%s3] sm:$0xff] %v350
      $region40: #{rnn_model_forward.5} parent=31 // pred_fallthru
        _
      // Predicated region
      $region41: #{rnn_model_forward.5} parent=31 // pred_check
        %p352 = pneg %p100
      $region42: #{rnn_model_forward.5} parent=31 // pred_check_branch
        %354 = sbr.rel (%p352) target = $region44
      $region43: #{rnn_model_forward.5} parent=31 // pred_region
        _
      $region44: #{rnn_model_forward.5} parent=31 // pred_fallthru
        _
      // Predicated region
      $region45: #{rnn_model_forward.5} parent=31 // pred_check
        %p355 = pneg %p100
      $region46: #{rnn_model_forward.5} parent=31 // pred_check_branch
        %357 = sbr.rel (%p355) target = $region48
      $region47: #{rnn_model_forward.5} parent=31 // pred_region
        _
      $region48: #{rnn_model_forward.5} parent=31 // pred_fallthru
        _
    $region32: #{rnn_model_forward.5} parent=5 // pred_fallthru
      _
    %p358 = scmp.le.s32.totalorder 2, %s9
    // Predicated region
    $region49: #{rnn_model_forward.5} parent=5 // pred_check
      %p359 = pneg %p358
    $region50: #{rnn_model_forward.5} parent=5 // pred_check_branch
      %361 = sbr.rel (%p359) target = $region52
    $region51: #{rnn_model_forward.5} parent=5 // pred_region
      %s362 = ssub.s32 %s9, 2
    $region52: #{rnn_model_forward.5} parent=5 // pred_fallthru
      _
  $region6: #{rnn_model_forward.5} parent=0 // loop_footer
    %s13 = sadd.s32 1, %s9
  $region7: #{rnn_model_forward.5} parent=0 // loop_footer_branch
    %8 = sbr.rel target = $region3
  $region8: #{rnn_model_forward.5} parent=0 // loop_exit
    _

// kernel: rnn_model_forward.3
$region0: #{rnn_model_forward.3}
  #allocation0 [shape = 'u32[]', space=smem, size = 0x4, offset = 0x4, fixed_abs, tag = 'smem constant byte address 0x4 - core index']
  #allocation1 [shape = 'u32[144,128]{1,0:T(1,128)}', space=vmem, size = 0x12000, scoped, tag = 'internal scratch']
  #allocation2 [shape = 'f32[8,128]{1,0:T(8,128)}', space=vmem, size = 0x1000, scoped, tag = 'scratch operand']
  #allocation3 [shape = 'f32[8,128]{1,0:T(8,128)}', space=vmem, size = 0x1000, scoped, tag = 'scratch operand']
  %s0 = inlined_call_operand.vmem [shape: bf16[2,8,8,512], index: 0, kind: input, shape index: {}]
  %s1 = inlined_call_operand.vmem [shape: bf16[2,128,512], index: 1, kind: input, shape index: {}]
  %s2 = inlined_call_operand.vmem [shape: bf16[2,8,8,128], index: 2, kind: output, shape index: {0}]
  %s3 = inlined_call_operand.vmem [shape: f32[2,8,128], index: 3, kind: output, shape index: {1}]
  %4 = xla_tuple %s2, %s3
  %s5 = sld [smem:[#allocation0]]
  $region57: #{rnn_model_forward.3} parent=0
    _
  %s7 = ssub.s32 1, %s5
  %s8 = scalar_select 0, %s7, %s5
  loop: start=0, step=1, limit=4
  $region2: #{rnn_model_forward.3} parent=0 // loop_pre_header
    _
  $region3: #{rnn_model_forward.3} parent=0 // loop_header
    %s10 = sphi 0, %s14
    %p11 = scmp.ge.s32.totalorder %s10, 4
    %s17 = sphi 0, %s29
    %s18 = sphi 0, %s25
    %s19 = sphi 0, %s17
    %s20 = sphi 0, %s18
    %s21 = sphi 0, %s19
    %s22 = sphi 0, %s20
    %s34 = sphi 0, %s36
    %s37 = sphi 0, %s34
    %s38 = sphi 0, %s37
    %s54 = sphi 0, %s38
    %s60 = sphi 0, %s62
    %s63 = sphi 0, %s60
    %s64 = sphi 0, %s63
    %s80 = sphi 0, %s64
    %s88 = sphi 0, %s90
    %s91 = sphi 0, %s88
    %s92 = sphi 0, %s91
    %s108 = sphi 0, %s92
    %s114 = sphi 0, %s116
    %s117 = sphi 0, %s114
    %s118 = sphi 0, %s117
    %s134 = sphi 0, %s118
  $region4: #{rnn_model_forward.3} parent=0 // loop_header_branch
    %13 = sbr.rel (%p11) target = $region8
  $region5: #{rnn_model_forward.3} parent=0 // loop_body
    %s15 = ssub.s32 %s10, 1
    %s16 = ssub.s32 %s10, 2
    %s23 = sadd.s32 1, %s18
    %p24 = scmp.ge.s32.totalorder %s23, 1
    %s25 = scalar_select %p24, 0, %s23
    %s26 = sadd.s32 1, %s17
    %s27 = scalar_select %p24, %s26, %s17
    %p28 = scmp.ge.s32.totalorder %s27, 2
    %s29 = scalar_select %p28, 0, %s27
    %s30 = ssub.s32 %s17, %s29
    %s31 = ssub.s32 %s18, %s25
    %s32 = sor.u32 %s30, %s31
    %p33 = scmp.eq.s32.totalorder %s32, 0
    %s35 = sadd.s32 %s34, 1
    %s36 = scalar_select %p33, %s34, %s35
    %p39 = pneg %p33
    %p40 = scmp.eq.s32.totalorder %s10, 1
    %p41 = por %p39, %p40
    %p42 = scmp.ne.s32.totalorder %s34, %s37
    %p43 = scmp.eq.s32.totalorder %s10, 0
    %p44 = por %p42, %p43
    %p45 = scmp.ne.s32.totalorder %s34, %s37
    %p46 = scmp.eq.s32.totalorder %s15, 1
    %p47 = por %p45, %p46
    %p48 = scmp.ne.s32.totalorder %s37, %s38
    %p49 = scmp.eq.s32.totalorder %s15, 0
    %p50 = por %p48, %p49
    %p51 = scmp.ne.s32.totalorder %s37, %s38
    %p52 = scmp.eq.s32.totalorder %s16, 1
    %p53 = por %p51, %p52
    %p55 = scmp.ne.s32.totalorder %s38, %s54
    %p56 = scmp.eq.s32.totalorder %s16, 0
    %p57 = por %p55, %p56
    %s58 = ssub.s32 %s17, %s29
    %p59 = scmp.eq.s32.totalorder %s58, 0
    %s61 = sadd.s32 %s60, 1
    %s62 = scalar_select %p59, %s60, %s61
    %p65 = pneg %p59
    %p66 = scmp.eq.s32.totalorder %s10, 1
    %p67 = por %p65, %p66
    %p68 = scmp.ne.s32.totalorder %s60, %s63
    %p69 = scmp.eq.s32.totalorder %s10, 0
    %p70 = por %p68, %p69
    %p71 = scmp.ne.s32.totalorder %s60, %s63
    %p72 = scmp.eq.s32.totalorder %s15, 1
    %p73 = por %p71, %p72
    %p74 = scmp.ne.s32.totalorder %s63, %s64
    %p75 = scmp.eq.s32.totalorder %s15, 0
    %p76 = por %p74, %p75
    %p77 = scmp.ne.s32.totalorder %s63, %s64
    %p78 = scmp.eq.s32.totalorder %s16, 1
    %p79 = por %p77, %p78
    %p81 = scmp.ne.s32.totalorder %s64, %s80
    %p82 = scmp.eq.s32.totalorder %s16, 0
    %p83 = por %p81, %p82
    %s84 = ssub.s32 %s17, %s29
    %s85 = ssub.s32 %s18, %s25
    %s86 = sor.u32 %s84, %s85
    %p87 = scmp.eq.s32.totalorder %s86, 0
    %s89 = sadd.s32 %s88, 1
    %s90 = scalar_select %p87, %s88, %s89
    %p93 = pneg %p87
    %p94 = scmp.eq.s32.totalorder %s10, 1
    %p95 = por %p93, %p94
    %p96 = scmp.ne.s32.totalorder %s88, %s91
    %p97 = scmp.eq.s32.totalorder %s10, 0
    %p98 = por %p96, %p97
    %p99 = scmp.ne.s32.totalorder %s88, %s91
    %p100 = scmp.eq.s32.totalorder %s15, 1
    %p101 = por %p99, %p100
    %p102 = scmp.ne.s32.totalorder %s91, %s92
    %p103 = scmp.eq.s32.totalorder %s15, 0
    %p104 = por %p102, %p103
    %p105 = scmp.ne.s32.totalorder %s91, %s92
    %p106 = scmp.eq.s32.totalorder %s16, 1
    %p107 = por %p105, %p106
    %p109 = scmp.ne.s32.totalorder %s92, %s108
    %p110 = scmp.eq.s32.totalorder %s16, 0
    %p111 = por %p109, %p110
    %s112 = ssub.s32 %s17, %s29
    %p113 = scmp.eq.s32.totalorder %s112, 0
    %s115 = sadd.s32 %s114, 1
    %s116 = scalar_select %p113, %s114, %s115
    %p119 = pneg %p113
    %p120 = scmp.eq.s32.totalorder %s10, 1
    %p121 = por %p119, %p120
    %p122 = scmp.ne.s32.totalorder %s114, %s117
    %p123 = scmp.eq.s32.totalorder %s10, 0
    %p124 = por %p122, %p123
    %p125 = scmp.ne.s32.totalorder %s114, %s117
    %p126 = scmp.eq.s32.totalorder %s15, 1
    %p127 = por %p125, %p126
    %p128 = scmp.ne.s32.totalorder %s117, %s118
    %p129 = scmp.eq.s32.totalorder %s15, 0
    %p130 = por %p128, %p129
    %p131 = scmp.ne.s32.totalorder %s117, %s118
    %p132 = scmp.eq.s32.totalorder %s16, 1
    %p133 = por %p131, %p132
    %p135 = scmp.ne.s32.totalorder %s118, %s134
    %p136 = scmp.eq.s32.totalorder %s16, 0
    %p137 = por %p135, %p136
    %p138 = scmp.le.s32.totalorder 1, %s10
    %p139 = scmp.lt.s32.totalorder %s10, 3
    %p140 = pnand %p138, %p139
    %p141 = pneg %p140
    // Predicated region
    $region9: #{rnn_model_forward.3} parent=5 // pred_check
      _
    $region10: #{rnn_model_forward.3} parent=5 // pred_check_branch
      %143 = sbr.rel (%p140) target = $region12
    $region11: #{rnn_model_forward.3} parent=5 // pred_region
      %s144 = ssub.s32 %s10, 1
    $region12: #{rnn_model_forward.3} parent=5 // pred_fallthru
      _
    %p145 = scmp.lt.s32.totalorder %s10, 2
    // Predicated region
    $region13: #{rnn_model_forward.3} parent=5 // pred_check
      %p146 = pneg %p145
    $region14: #{rnn_model_forward.3} parent=5 // pred_check_branch
      %148 = sbr.rel (%p146) target = $region16
    $region15: #{rnn_model_forward.3} parent=5 // pred_region
      // Predicated region
      $region17: #{rnn_model_forward.3} parent=15 // pred_check
        %p149 = pneg %p44
      $region18: #{rnn_model_forward.3} parent=15 // pred_check_branch
        %151 = sbr.rel (%p149) target = $region20
      $region19: #{rnn_model_forward.3} parent=15 // pred_region
        %s152 = smul.u32 8, %s18
        %p153 = scmp.lt.s32.totalorder %s17, 1
        %s154 = scalar_select %p153, %s17, 1
        %p155 = scmp.lt.s32.totalorder %s152, 7
        %s156 = scalar_select %p155, %s152, 7
        %s157 = smul.addr %s156, 4
        %s158 = smul.addr %s154, 32
        %s159 = sadd.s32 %s157, %s158
        %s160 = smul.addr %s159, 4
        %s161 = scalar_lea.vmem %s0, %s160
        %s162 = smul.u32 8, %s18
      $region20: #{rnn_model_forward.3} parent=15 // pred_fallthru
        _
      // Predicated region
      $region21: #{rnn_model_forward.3} parent=15 // pred_check
        %p163 = pneg %p70
      $region22: #{rnn_model_forward.3} parent=15 // pred_check_branch
        %165 = sbr.rel (%p163) target = $region24
      $region23: #{rnn_model_forward.3} parent=15 // pred_region
        %p166 = scmp.lt.s32.totalorder %s17, 1
        %s167 = scalar_select %p166, %s17, 1
        %s168 = smul.addr %s167, 64
        %s169 = smul.addr %s168, 4
        %s170 = scalar_lea.vmem %s1, %s169
      $region24: #{rnn_model_forward.3} parent=15 // pred_fallthru
        _
    $region16: #{rnn_model_forward.3} parent=5 // pred_fallthru
      _
    %p171 = scmp.le.s32.totalorder 1, %s10
    %p172 = scmp.lt.s32.totalorder %s10, 3
    %p173 = pnand %p171, %p172
    %p174 = pneg %p173
    // Predicated region
    $region25: #{rnn_model_forward.3} parent=5 // pred_check
      _
    $region26: #{rnn_model_forward.3} parent=5 // pred_check_branch
      %176 = sbr.rel (%p173) target = $region28
    $region27: #{rnn_model_forward.3} parent=5 // pred_region
      %s177 = ssub.s32 %s10, 1
      %s178 = smul.u32 8, %s20
      %p179 = scmp.lt.s32.totalorder %s19, 1
      %s180 = scalar_select %p179, %s19, 1
      %p181 = scmp.lt.s32.totalorder %s178, 7
      %s182 = scalar_select %p181, %s178, 7
      %s183 = smul.addr %s182, 4
      %s184 = smul.addr %s180, 32
      %s185 = sadd.s32 %s183, %s184
      %s186 = smul.addr %s185, 4
      %s187 = scalar_lea.vmem %s0, %s186
      %p188 = pneg %p50
      %p189 = pneg %p47
      %p190 = scmp.lt.s32.totalorder %s19, 1
      %s191 = scalar_select %p190, %s19, 1
      %s192 = smul.addr %s191, 64
      %s193 = smul.addr %s192, 4
      %s194 = scalar_lea.vmem %s1, %s193
      %p195 = pneg %p76
      %p196 = pneg %p73
      %p197 = pneg %p104
      %p198 = pneg %p101
      %s199 = smul.u32 8, %s20
      %p200 = scmp.lt.s32.totalorder %s19, 1
      %s201 = scalar_select %p200, %s19, 1
      %p202 = scmp.lt.s32.totalorder %s199, 7
      %s203 = scalar_select %p202, %s199, 7
      %s204 = smul.addr %s201, 8
      %s205 = sadd.s32 %s203, %s204
      %s206 = smul.addr %s205, 4
      %s207 = scalar_lea.vmem %s2, %s206
      %p208 = pneg %p130
      %p209 = pneg %p127
      %p210 = scmp.lt.s32.totalorder %s19, 1
      %s211 = scalar_select %p210, %s19, 1
      %s212 = smul.addr %s211, 8
      %s213 = scalar_lea.vmem %s3, %s212
      %s214 = smul.u32 8, %s20
      %p215 = scmp.lt.s32.totalorder %s19, 1
      %s216 = scalar_select %p215, %s19, 1
      %p217 = scmp.lt.s32.totalorder %s214, 7
      %s218 = scalar_select %p217, %s214, 7
      %s219 = smul.addr %s218, 4
      %s220 = smul.addr %s216, 32
      %s221 = sadd.s32 %s219, %s220
      %s222 = smul.addr %s221, 4
      %s223 = scalar_lea.vmem %s0, %s222
      %s224 = smul.u32 8, %s20
      %p225 = scmp.lt.s32.totalorder %s19, 1
      %s226 = scalar_select %p225, %s19, 1
      %s227 = smul.addr %s226, 64
      %s228 = smul.addr %s227, 4
      %s229 = scalar_lea.vmem %s1, %s228
      %s230 = smul.u32 8, %s20
      %p231 = scmp.lt.s32.totalorder %s19, 1
      %s232 = scalar_select %p231, %s19, 1
      %p233 = scmp.lt.s32.totalorder %s230, 7
      %s234 = scalar_select %p233, %s230, 7
      %s235 = smul.addr %s232, 8
      %s236 = sadd.s32 %s234, %s235
      %s237 = smul.addr %s236, 4
      %s238 = scalar_lea.vmem %s2, %s237
      %s239 = smul.u32 8, %s20
      %p240 = scmp.lt.s32.totalorder %s19, 1
      %s241 = scalar_select %p240, %s19, 1
      %s242 = smul.addr %s241, 8
      %s243 = scalar_lea.vmem %s3, %s242
      %p244 = scmp.eq.s32.totalorder %s20, 0
      // Predicated region
      $region29: #{rnn_model_forward.3} parent=27 // pred_check
        %p245 = pneg %p244
      $region30: #{rnn_model_forward.3} parent=27 // pred_check_branch
        %247 = sbr.rel (%p245) target = $region32
      $region31: #{rnn_model_forward.3} parent=27 // pred_region
        %248 = vst [vmem:[#allocation2] sm:$0xff] 0.0
        %249 = vst [vmem:[#allocation3] sm:$0xff] 0.0
      $region32: #{rnn_model_forward.3} parent=27 // pred_fallthru
        _
      %v250 = vld [vmem:[%s229] sm:$0xff]
      %v251 = vld [vmem:[%s229 + $0x8] sm:$0xff]
      %v252 = vld [vmem:[%s229 + $0x10] sm:$0xff]
      %v253 = vld [vmem:[%s229 + $0x18] sm:$0xff]
      %v254 = vld [vmem:[%s229 + $0x20] sm:$0xff]
      %v255 = vld [vmem:[%s229 + $0x28] sm:$0xff]
      %v256 = vld [vmem:[%s229 + $0x30] sm:$0xff]
      %v257 = vld [vmem:[%s229 + $0x38] sm:$0xff]
      %v258 = vld [vmem:[%s229 + $0x40] sm:$0xff]
      %v259 = vld [vmem:[%s229 + $0x48] sm:$0xff]
      %v260 = vld [vmem:[%s229 + $0x50] sm:$0xff]
      %v261 = vld [vmem:[%s229 + $0x58] sm:$0xff]
      %v262 = vld [vmem:[%s229 + $0x60] sm:$0xff]
      %v263 = vld [vmem:[%s229 + $0x68] sm:$0xff]
      %v264 = vld [vmem:[%s229 + $0x70] sm:$0xff]
      %v265 = vld [vmem:[%s229 + $0x78] sm:$0xff]
      %v266 = vld [vmem:[%s229 + $0x80] sm:$0xff]
      %v267 = vld [vmem:[%s229 + $0x88] sm:$0xff]
      %v268 = vld [vmem:[%s229 + $0x90] sm:$0xff]
      %v269 = vld [vmem:[%s229 + $0x98] sm:$0xff]
      %v270 = vld [vmem:[%s229 + $0xa0] sm:$0xff]
      %v271 = vld [vmem:[%s229 + $0xa8] sm:$0xff]
      %v272 = vld [vmem:[%s229 + $0xb0] sm:$0xff]
      %v273 = vld [vmem:[%s229 + $0xb8] sm:$0xff]
      %v274 = vld [vmem:[%s229 + $0xc0] sm:$0xff]
      %v275 = vld [vmem:[%s229 + $0xc8] sm:$0xff]
      %v276 = vld [vmem:[%s229 + $0xd0] sm:$0xff]
      %v277 = vld [vmem:[%s229 + $0xd8] sm:$0xff]
      %v278 = vld [vmem:[%s229 + $0xe0] sm:$0xff]
      %v279 = vld [vmem:[%s229 + $0xe8] sm:$0xff]
      %v280 = vld [vmem:[%s229 + $0xf0] sm:$0xff]
      %v281 = vld [vmem:[%s229 + $0xf8] sm:$0xff]
      %v282 = vunpack.c.l.bf16 %v250
      %v283 = vunpack.c.h.bf16 %v250
      %v284 = vunpack.c.l.bf16 %v251
      %v285 = vunpack.c.h.bf16 %v251
      %v286 = vunpack.c.l.bf16 %v252
      %v287 = vunpack.c.h.bf16 %v252
      %v288 = vunpack.c.l.bf16 %v253
      %v289 = vunpack.c.h.bf16 %v253
      %v290 = vunpack.c.l.bf16 %v254
      %v291 = vunpack.c.h.bf16 %v254
      %v292 = vunpack.c.l.bf16 %v255
      %v293 = vunpack.c.h.bf16 %v255
      %v294 = vunpack.c.l.bf16 %v256
      %v295 = vunpack.c.h.bf16 %v256
      %v296 = vunpack.c.l.bf16 %v257
      %v297 = vunpack.c.h.bf16 %v257
      %v298 = vunpack.c.l.bf16 %v258
      %v299 = vunpack.c.h.bf16 %v258
      %v300 = vunpack.c.l.bf16 %v259
      %v301 = vunpack.c.h.bf16 %v259
      %v302 = vunpack.c.l.bf16 %v260
      %v303 = vunpack.c.h.bf16 %v260
      %v304 = vunpack.c.l.bf16 %v261
      %v305 = vunpack.c.h.bf16 %v261
      %v306 = vunpack.c.l.bf16 %v262
      %v307 = vunpack.c.h.bf16 %v262
      %v308 = vunpack.c.l.bf16 %v263
      %v309 = vunpack.c.h.bf16 %v263
      %v310 = vunpack.c.l.bf16 %v264
      %v311 = vunpack.c.h.bf16 %v264
      %v312 = vunpack.c.l.bf16 %v265
      %v313 = vunpack.c.h.bf16 %v265
      %v314 = vunpack.c.l.bf16 %v266
      %v315 = vunpack.c.h.bf16 %v266
      %v316 = vunpack.c.l.bf16 %v267
      %v317 = vunpack.c.h.bf16 %v267
      %v318 = vunpack.c.l.bf16 %v268
      %v319 = vunpack.c.h.bf16 %v268
      %v320 = vunpack.c.l.bf16 %v269
      %v321 = vunpack.c.h.bf16 %v269
      %v322 = vunpack.c.l.bf16 %v270
      %v323 = vunpack.c.h.bf16 %v270
      %v324 = vunpack.c.l.bf16 %v271
      %v325 = vunpack.c.h.bf16 %v271
      %v326 = vunpack.c.l.bf16 %v272
      %v327 = vunpack.c.h.bf16 %v272
      %v328 = vunpack.c.l.bf16 %v273
      %v329 = vunpack.c.h.bf16 %v273
      %v330 = vunpack.c.l.bf16 %v274
      %v331 = vunpack.c.h.bf16 %v274
      %v332 = vunpack.c.l.bf16 %v275
      %v333 = vunpack.c.h.bf16 %v275
      %v334 = vunpack.c.l.bf16 %v276
      %v335 = vunpack.c.h.bf16 %v276
      %v336 = vunpack.c.l.bf16 %v277
      %v337 = vunpack.c.h.bf16 %v277
      %v338 = vunpack.c.l.bf16 %v278
      %v339 = vunpack.c.h.bf16 %v278
      %v340 = vunpack.c.l.bf16 %v279
      %v341 = vunpack.c.h.bf16 %v279
      %v342 = vunpack.c.l.bf16 %v280
      %v343 = vunpack.c.h.bf16 %v280
      %v344 = vunpack.c.l.bf16 %v281
      %v345 = vunpack.c.h.bf16 %v281
      %v346 = vld [vmem:[#allocation2] sm:$0xff]
      %v347 = vld [vmem:[#allocation3] sm:$0xff]
      %v348 = vld [vmem:[%s223] sm:$0xff]
      %v349 = vld [vmem:[%s223 + $0x8] sm:$0xff]
      %v350 = vunpack.c.l.bf16 %v348
      %v351 = vunpack.c.h.bf16 %v348
      %v352 = vunpack.c.l.bf16 %v349
      %v353 = vunpack.c.h.bf16 %v349
      %354 = vmatprep.subr.mxu0 %v283
      %355 = vmatpush1.msra.mxu0 %v282
      %356 = vmatprep.subr.mxu0 %v287
      %357 = vmatpush1.msra.mxu0 %v286
      %358 = vmatprep.subr.mxu0 %v291
      %359 = vmatpush1.msra.mxu0 %v290
      %360 = vmatprep.subr.mxu0 %v295
      %361 = vmatpush1.msra.mxu0 %v294
      %362 = vmatprep.subr.mxu0 %v299
      %363 = vmatpush1.msra.mxu0 %v298
      %364 = vmatprep.subr.mxu0 %v303
      %365 = vmatpush1.msra.mxu0 %v302
      %366 = vmatprep.subr.mxu0 %v307
      %367 = vmatpush1.msra.mxu0 %v306
      %368 = vmatprep.subr.mxu0 %v311
      %369 = vmatpush1.msra.mxu0 %v310
      %370 = vmatprep.subr.mxu0 %v315
      %371 = vmatpush1.msra.mxu0 %v314
      %372 = vmatprep.subr.mxu0 %v319
      %373 = vmatpush1.msra.mxu0 %v318
      %374 = vmatprep.subr.mxu0 %v323
      %375 = vmatpush1.msra.mxu0 %v322
      %376 = vmatprep.subr.mxu0 %v327
      %377 = vmatpush1.msra.mxu0 %v326
      %378 = vmatprep.subr.mxu0 %v331
      %379 = vmatpush1.msra.mxu0 %v330
      %380 = vmatprep.subr.mxu0 %v335
      %381 = vmatpush1.msra.mxu0 %v334
      %382 = vmatprep.subr.mxu0 %v339
      %383 = vmatpush1.msra.mxu0 %v338
      %384 = vmatprep.subr.mxu0 %v343
      %385 = vmatpush1.msra.mxu0 %v342
      %386 = vmatprep.subr.mxu0 0.0
      %387 = vmatpush1.msra.mxu0 0.0
      %388 = vmatprep.subr.mxu0 0.0
      %389 = vmatpush1.msra.mxu0 0.0
      %390 = vmatprep.subr.mxu0 0.0
      %391 = vmatpush1.msra.mxu0 0.0
      %392 = vmatprep.subr.mxu0 0.0
      %393 = vmatpush1.msra.mxu0 0.0
      %394 = vmatprep.subr.mxu0 0.0
      %395 = vmatpush1.msra.mxu0 0.0
      %396 = vmatprep.subr.mxu0 0.0
      %397 = vmatpush1.msra.mxu0 0.0
      %398 = vmatprep.subr.mxu0 0.0
      %399 = vmatpush1.msra.mxu0 0.0
      %400 = vmatprep.subr.mxu0 0.0
      %401 = vmatpush1.msra.mxu0 0.0
      %402 = vmatprep.subr.mxu0 0.0
      %403 = vmatpush1.msra.mxu0 0.0
      %404 = vmatprep.subr.mxu0 0.0
      %405 = vmatpush1.msra.mxu0 0.0
      %406 = vmatprep.subr.mxu0 0.0
      %407 = vmatpush1.msra.mxu0 0.0
      %408 = vmatprep.subr.mxu0 0.0
      %409 = vmatpush1.msra.mxu0 0.0
      %410 = vmatprep.subr.mxu0 0.0
      %411 = vmatpush1.msra.mxu0 0.0
      %412 = vmatprep.subr.mxu0 0.0
      %413 = vmatpush1.msra.mxu0 0.0
      %414 = vmatprep.subr.mxu0 0.0
      %415 = vmatpush1.msra.mxu0 0.0
      %416 = vmatprep.subr.mxu0 0.0
      %417 = vmatpush1.msra.mxu0 0.0
      %418 = vmatprep.mubr.f32.mxu0 0.0
      %419 = vmatmul.mubr.f32.gmra.mrb[0].mxu0 %v346
      %v420 = vpop.f32.mrb[0].mxu0
      %v421 = vadd.f32 0.0, %v420
      %v422 = vpop.f32.mrb[0].mxu0
      %v423 = vadd.f32 0.0, %v422
      %424 = vdwg.mxu0
      %425 = vmatprep.subr.mxu0 %v285
      %426 = vmatpush1.msra.mxu0 %v284
      %427 = vmatprep.subr.mxu0 %v289
      %428 = vmatpush1.msra.mxu0 %v288
      %429 = vmatprep.subr.mxu0 %v293
      %430 = vmatpush1.msra.mxu0 %v292
      %431 = vmatprep.subr.mxu0 %v297
      %432 = vmatpush1.msra.mxu0 %v296
      %433 = vmatprep.subr.mxu0 %v301
      %434 = vmatpush1.msra.mxu0 %v300
      %435 = vmatprep.subr.mxu0 %v305
      %436 = vmatpush1.msra.mxu0 %v304
      %437 = vmatprep.subr.mxu0 %v309
      %438 = vmatpush1.msra.mxu0 %v308
      %439 = vmatprep.subr.mxu0 %v313
      %440 = vmatpush1.msra.mxu0 %v312
      %441 = vmatprep.subr.mxu0 %v317
      %442 = vmatpush1.msra.mxu0 %v316
      %443 = vmatprep.subr.mxu0 %v321
      %444 = vmatpush1.msra.mxu0 %v320
      %445 = vmatprep.subr.mxu0 %v325
      %446 = vmatpush1.msra.mxu0 %v324
      %447 = vmatprep.subr.mxu0 %v329
      %448 = vmatpush1.msra.mxu0 %v328
      %449 = vmatprep.subr.mxu0 %v333
      %450 = vmatpush1.msra.mxu0 %v332
      %451 = vmatprep.subr.mxu0 %v337
      %452 = vmatpush1.msra.mxu0 %v336
      %453 = vmatprep.subr.mxu0 %v341
      %454 = vmatpush1.msra.mxu0 %v340
      %455 = vmatprep.subr.mxu0 %v345
      %456 = vmatpush1.msra.mxu0 %v344
      %457 = vmatprep.subr.mxu0 0.0
      %458 = vmatpush1.msra.mxu0 0.0
      %459 = vmatprep.subr.mxu0 0.0
      %460 = vmatpush1.msra.mxu0 0.0
      %461 = vmatprep.subr.mxu0 0.0
      %462 = vmatpush1.msra.mxu0 0.0
      %463 = vmatprep.subr.mxu0 0.0
      %464 = vmatpush1.msra.mxu0 0.0
      %465 = vmatprep.subr.mxu0 0.0
      %466 = vmatpush1.msra.mxu0 0.0
      %467 = vmatprep.subr.mxu0 0.0
      %468 = vmatpush1.msra.mxu0 0.0
      %469 = vmatprep.subr.mxu0 0.0
      %470 = vmatpush1.msra.mxu0 0.0
      %471 = vmatprep.subr.mxu0 0.0
      %472 = vmatpush1.msra.mxu0 0.0
      %473 = vmatprep.subr.mxu0 0.0
      %474 = vmatpush1.msra.mxu0 0.0
      %475 = vmatprep.subr.mxu0 0.0
      %476 = vmatpush1.msra.mxu0 0.0
      %477 = vmatprep.subr.mxu0 0.0
      %478 = vmatpush1.msra.mxu0 0.0
      %479 = vmatprep.subr.mxu0 0.0
      %480 = vmatpush1.msra.mxu0 0.0
      %481 = vmatprep.subr.mxu0 0.0
      %482 = vmatpush1.msra.mxu0 0.0
      %483 = vmatprep.subr.mxu0 0.0
      %484 = vmatpush1.msra.mxu0 0.0
      %485 = vmatprep.subr.mxu0 0.0
      %486 = vmatpush1.msra.mxu0 0.0
      %487 = vmatprep.subr.mxu0 0.0
      %488 = vmatpush1.msra.mxu0 0.0
      %489 = vmatprep.mubr.f32.mxu0 0.0
      %490 = vmatmul.mubr.f32.gmra.mrb[0].mxu0 %v346
      %v491 = vpop.f32.mrb[0].mxu0
      %v492 = vadd.f32 0.0, %v491
      %v493 = vpop.f32.mrb[0].mxu0
      %v494 = vadd.f32 0.0, %v493
      %495 = vdwg.mxu0
      %v496 = vadd.f32 %v350, %v421
      %v497 = vadd.f32 %v351, %v423
      %v498 = vadd.f32 %v352, %v492
      %v499 = vadd.f32 %v353, %v494
      %v500 = vxor.u32 %v496, 2147483648
      %v501 = vmul.f32 %v500, 1.442695
      %v502 = vpow.pop %v501
      %v503 = vadd.f32 %v502, 1.0
      %v504 = vrcp.pop %v503
      %v505 = vmul.f32 1.0, %v504
      %v506 = vxor.u32 %v497, 2147483648
      %v507 = vmul.f32 %v506, 1.442695
      %v508 = vpow.pop %v507
      %v509 = vadd.f32 %v508, 1.0
      %v510 = vrcp.pop %v509
      %v511 = vmul.f32 1.0, %v510
      %v512 = vtanh.pop %v498
      %v513 = vxor.u32 %v499, 2147483648
      %v514 = vmul.f32 %v513, 1.442695
      %v515 = vpow.pop %v514
      %v516 = vadd.f32 %v515, 1.0
      %v517 = vrcp.pop %v516
      %v518 = vmul.f32 1.0, %v517
      %v519 = vmul.f32 %v511, %v347
      %v520 = vmul.f32 %v505, %v512
      %v521 = vadd.f32 %v519, %v520
      %v522 = vtanh.pop %v521
      %v523 = vmul.f32 %v518, %v522
      %v524 = vpack.c.bf16 %v523, %v523
      %525 = vst [vmem:[%s238] sm:$0xf] %v524
      %s526 = scalar_lea.vmem %s223, 16
      %v527 = vld [vmem:[%s526] sm:$0xff]
      %v528 = vld [vmem:[%s526 + $0x8] sm:$0xff]
      %v529 = vunpack.c.l.bf16 %v527
      %v530 = vunpack.c.h.bf16 %v527
      %v531 = vunpack.c.l.bf16 %v528
      %v532 = vunpack.c.h.bf16 %v528
      %533 = vmatprep.subr.mxu0 %v283
      %534 = vmatpush1.msra.mxu0 %v282
      %535 = vmatprep.subr.mxu0 %v287
      %536 = vmatpush1.msra.mxu0 %v286
      %537 = vmatprep.subr.mxu0 %v291
      %538 = vmatpush1.msra.mxu0 %v290
      %539 = vmatprep.subr.mxu0 %v295
      %540 = vmatpush1.msra.mxu0 %v294
      %541 = vmatprep.subr.mxu0 %v299
      %542 = vmatpush1.msra.mxu0 %v298
      %543 = vmatprep.subr.mxu0 %v303
      %544 = vmatpush1.msra.mxu0 %v302
      %545 = vmatprep.subr.mxu0 %v307
      %546 = vmatpush1.msra.mxu0 %v306
      %547 = vmatprep.subr.mxu0 %v311
      %548 = vmatpush1.msra.mxu0 %v310
      %549 = vmatprep.subr.mxu0 %v315
      %550 = vmatpush1.msra.mxu0 %v314
      %551 = vmatprep.subr.mxu0 %v319
      %552 = vmatpush1.msra.mxu0 %v318
      %553 = vmatprep.subr.mxu0 %v323
      %554 = vmatpush1.msra.mxu0 %v322
      %555 = vmatprep.subr.mxu0 %v327
      %556 = vmatpush1.msra.mxu0 %v326
      %557 = vmatprep.subr.mxu0 %v331
      %558 = vmatpush1.msra.mxu0 %v330
      %559 = vmatprep.subr.mxu0 %v335
      %560 = vmatpush1.msra.mxu0 %v334
      %561 = vmatprep.subr.mxu0 %v339
      %562 = vmatpush1.msra.mxu0 %v338
      %563 = vmatprep.subr.mxu0 %v343
      %564 = vmatpush1.msra.mxu0 %v342
      %565 = vmatprep.subr.mxu0 0.0
      %566 = vmatpush1.msra.mxu0 0.0
      %567 = vmatprep.subr.mxu0 0.0
      %568 = vmatpush1.msra.mxu0 0.0
      %569 = vmatprep.subr.mxu0 0.0
      %570 = vmatpush1.msra.mxu0 0.0
      %571 = vmatprep.subr.mxu0 0.0
      %572 = vmatpush1.msra.mxu0 0.0
      %573 = vmatprep.subr.mxu0 0.0
      %574 = vmatpush1.msra.mxu0 0.0
      %575 = vmatprep.subr.mxu0 0.0
      %576 = vmatpush1.msra.mxu0 0.0
      %577 = vmatprep.subr.mxu0 0.0
      %578 = vmatpush1.msra.mxu0 0.0
      %579 = vmatprep.subr.mxu0 0.0
      %580 = vmatpush1.msra.mxu0 0.0
      %581 = vmatprep.subr.mxu0 0.0
      %582 = vmatpush1.msra.mxu0 0.0
      %583 = vmatprep.subr.mxu0 0.0
      %584 = vmatpush1.msra.mxu0 0.0
      %585 = vmatprep.subr.mxu0 0.0
      %586 = vmatpush1.msra.mxu0 0.0
      %587 = vmatprep.subr.mxu0 0.0
      %588 = vmatpush1.msra.mxu0 0.0
      %589 = vmatprep.subr.mxu0 0.0
      %590 = vmatpush1.msra.mxu0 0.0
      %591 = vmatprep.subr.mxu0 0.0
      %592 = vmatpush1.msra.mxu0 0.0
      %593 = vmatprep.subr.mxu0 0.0
      %594 = vmatpush1.msra.mxu0 0.0
      %595 = vmatprep.subr.mxu0 0.0
      %596 = vmatpush1.msra.mxu0 0.0
      %597 = vmatprep.mubr.f32.mxu0 0.0
      %598 = vmatmul.mubr.f32.gmra.mrb[0].mxu0 %v523
      %v599 = vpop.f32.mrb[0].mxu0
      %v600 = vadd.f32 0.0, %v599
      %v601 = vpop.f32.mrb[0].mxu0
      %v602 = vadd.f32 0.0, %v601
      %603 = vdwg.mxu0
      %604 = vmatprep.subr.mxu0 %v285
      %605 = vmatpush1.msra.mxu0 %v284
      %606 = vmatprep.subr.mxu0 %v289
      %607 = vmatpush1.msra.mxu0 %v288
      %608 = vmatprep.subr.mxu0 %v293
      %609 = vmatpush1.msra.mxu0 %v292
      %610 = vmatprep.subr.mxu0 %v297
      %611 = vmatpush1.msra.mxu0 %v296
      %612 = vmatprep.subr.mxu0 %v301
      %613 = vmatpush1.msra.mxu0 %v300
      %614 = vmatprep.subr.mxu0 %v305
      %615 = vmatpush1.msra.mxu0 %v304
      %616 = vmatprep.subr.mxu0 %v309
      %617 = vmatpush1.msra.mxu0 %v308
      %618 = vmatprep.subr.mxu0 %v313
      %619 = vmatpush1.msra.mxu0 %v312
      %620 = vmatprep.subr.mxu0 %v317
      %621 = vmatpush1.msra.mxu0 %v316
      %622 = vmatprep.subr.mxu0 %v321
      %623 = vmatpush1.msra.mxu0 %v320
      %624 = vmatprep.subr.mxu0 %v325
      %625 = vmatpush1.msra.mxu0 %v324
      %626 = vmatprep.subr.mxu0 %v329
      %627 = vmatpush1.msra.mxu0 %v328
      %628 = vmatprep.subr.mxu0 %v333
      %629 = vmatpush1.msra.mxu0 %v332
      %630 = vmatprep.subr.mxu0 %v337
      %631 = vmatpush1.msra.mxu0 %v336
      %632 = vmatprep.subr.mxu0 %v341
      %633 = vmatpush1.msra.mxu0 %v340
      %634 = vmatprep.subr.mxu0 %v345
      %635 = vmatpush1.msra.mxu0 %v344
      %636 = vmatprep.subr.mxu0 0.0
      %637 = vmatpush1.msra.mxu0 0.0
      %638 = vmatprep.subr.mxu0 0.0
      %639 = vmatpush1.msra.mxu0 0.0
      %640 = vmatprep.subr.mxu0 0.0
      %641 = vmatpush1.msra.mxu0 0.0
      %642 = vmatprep.subr.mxu0 0.0
      %643 = vmatpush1.msra.mxu0 0.0
      %644 = vmatprep.subr.mxu0 0.0
      %645 = vmatpush1.msra.mxu0 0.0
      %646 = vmatprep.subr.mxu0 0.0
      %647 = vmatpush1.msra.mxu0 0.0
      %648 = vmatprep.subr.mxu0 0.0
      %649 = vmatpush1.msra.mxu0 0.0
      %650 = vmatprep.subr.mxu0 0.0
      %651 = vmatpush1.msra.mxu0 0.0
      %652 = vmatprep.subr.mxu0 0.0
      %653 = vmatpush1.msra.mxu0 0.0
      %654 = vmatprep.subr.mxu0 0.0
      %655 = vmatpush1.msra.mxu0 0.0
      %656 = vmatprep.subr.mxu0 0.0
      %657 = vmatpush1.msra.mxu0 0.0
      %658 = vmatprep.subr.mxu0 0.0
      %659 = vmatpush1.msra.mxu0 0.0
      %660 = vmatprep.subr.mxu0 0.0
      %661 = vmatpush1.msra.mxu0 0.0
      %662 = vmatprep.subr.mxu0 0.0
      %663 = vmatpush1.msra.mxu0 0.0
      %664 = vmatprep.subr.mxu0 0.0
      %665 = vmatpush1.msra.mxu0 0.0
      %666 = vmatprep.subr.mxu0 0.0
      %667 = vmatpush1.msra.mxu0 0.0
      %668 = vmatprep.mubr.f32.mxu0 0.0
      %669 = vmatmul.mubr.f32.gmra.mrb[0].mxu0 %v523
      %v670 = vpop.f32.mrb[0].mxu0
      %v671 = vadd.f32 0.0, %v670
      %v672 = vpop.f32.mrb[0].mxu0
      %v673 = vadd.f32 0.0, %v672
      %674 = vdwg.mxu0
      %v675 = vadd.f32 %v529, %v600
      %v676 = vadd.f32 %v530, %v602
      %v677 = vadd.f32 %v531, %v671
      %v678 = vadd.f32 %v532, %v673
      %v679 = vxor.u32 %v675, 2147483648
      %v680 = vmul.f32 %v679, 1.442695
      %v681 = vpow.pop %v680
      %v682 = vadd.f32 %v681, 1.0
      %v683 = vrcp.pop %v682
      %v684 = vmul.f32 1.0, %v683
      %v685 = vxor.u32 %v676, 2147483648
      %v686 = vmul.f32 %v685, 1.442695
      %v687 = vpow.pop %v686
      %v688 = vadd.f32 %v687, 1.0
      %v689 = vrcp.pop %v688
      %v690 = vmul.f32 1.0, %v689
      %v691 = vtanh.pop %v677
      %v692 = vxor.u32 %v678, 2147483648
      %v693 = vmul.f32 %v692, 1.442695
      %v694 = vpow.pop %v693
      %v695 = vadd.f32 %v694, 1.0
      %v696 = vrcp.pop %v695
      %v697 = vmul.f32 1.0, %v696
      %v698 = vmul.f32 %v690, %v521
      %v699 = vmul.f32 %v684, %v691
      %v700 = vadd.f32 %v698, %v699
      %v701 = vtanh.pop %v700
      %v702 = vmul.f32 %v697, %v701
      %v703 = vpack.c.bf16 %v702, %v702
      %s704 = scalar_lea.vmem %s238, 4
      %705 = vst [vmem:[%s704] sm:$0xf] %v703
      %s706 = scalar_lea.vmem %s223, 32
      %v707 = vld [vmem:[%s706] sm:$0xff]
      %v708 = vld [vmem:[%s706 + $0x8] sm:$0xff]
      %v709 = vunpack.c.l.bf16 %v707
      %v710 = vunpack.c.h.bf16 %v707
      %v711 = vunpack.c.l.bf16 %v708
      %v712 = vunpack.c.h.bf16 %v708
      %713 = vmatprep.subr.mxu0 %v283
      %714 = vmatpush1.msra.mxu0 %v282
      %715 = vmatprep.subr.mxu0 %v287
      %716 = vmatpush1.msra.mxu0 %v286
      %717 = vmatprep.subr.mxu0 %v291
      %718 = vmatpush1.msra.mxu0 %v290
      %719 = vmatprep.subr.mxu0 %v295
      %720 = vmatpush1.msra.mxu0 %v294
      %721 = vmatprep.subr.mxu0 %v299
      %722 = vmatpush1.msra.mxu0 %v298
      %723 = vmatprep.subr.mxu0 %v303
      %724 = vmatpush1.msra.mxu0 %v302
      %725 = vmatprep.subr.mxu0 %v307
      %726 = vmatpush1.msra.mxu0 %v306
      %727 = vmatprep.subr.mxu0 %v311
      %728 = vmatpush1.msra.mxu0 %v310
      %729 = vmatprep.subr.mxu0 %v315
      %730 = vmatpush1.msra.mxu0 %v314
      %731 = vmatprep.subr.mxu0 %v319
      %732 = vmatpush1.msra.mxu0 %v318
      %733 = vmatprep.subr.mxu0 %v323
      %734 = vmatpush1.msra.mxu0 %v322
      %735 = vmatprep.subr.mxu0 %v327
      %736 = vmatpush1.msra.mxu0 %v326
      %737 = vmatprep.subr.mxu0 %v331
      %738 = vmatpush1.msra.mxu0 %v330
      %739 = vmatprep.subr.mxu0 %v335
      %740 = vmatpush1.msra.mxu0 %v334
      %741 = vmatprep.subr.mxu0 %v339
      %742 = vmatpush1.msra.mxu0 %v338
      %743 = vmatprep.subr.mxu0 %v343
      %744 = vmatpush1.msra.mxu0 %v342
      %745 = vmatprep.subr.mxu0 0.0
      %746 = vmatpush1.msra.mxu0 0.0
      %747 = vmatprep.subr.mxu0 0.0
      %748 = vmatpush1.msra.mxu0 0.0
      %749 = vmatprep.subr.mxu0 0.0
      %750 = vmatpush1.msra.mxu0 0.0
      %751 = vmatprep.subr.mxu0 0.0
      %752 = vmatpush1.msra.mxu0 0.0
      %753 = vmatprep.subr.mxu0 0.0
      %754 = vmatpush1.msra.mxu0 0.0
      %755 = vmatprep.subr.mxu0 0.0
      %756 = vmatpush1.msra.mxu0 0.0
      %757 = vmatprep.subr.mxu0 0.0
      %758 = vmatpush1.msra.mxu0 0.0
      %759 = vmatprep.subr.mxu0 0.0
      %760 = vmatpush1.msra.mxu0 0.0
      %761 = vmatprep.subr.mxu0 0.0
      %762 = vmatpush1.msra.mxu0 0.0
      %763 = vmatprep.subr.mxu0 0.0
      %764 = vmatpush1.msra.mxu0 0.0
      %765 = vmatprep.subr.mxu0 0.0
      %766 = vmatpush1.msra.mxu0 0.0
      %767 = vmatprep.subr.mxu0 0.0
      %768 = vmatpush1.msra.mxu0 0.0
      %769 = vmatprep.subr.mxu0 0.0
      %770 = vmatpush1.msra.mxu0 0.0
      %771 = vmatprep.subr.mxu0 0.0
      %772 = vmatpush1.msra.mxu0 0.0
      %773 = vmatprep.subr.mxu0 0.0
      %774 = vmatpush1.msra.mxu0 0.0
      %775 = vmatprep.subr.mxu0 0.0
      %776 = vmatpush1.msra.mxu0 0.0
      %777 = vmatprep.mubr.f32.mxu0 0.0
      %778 = vmatmul.mubr.f32.gmra.mrb[0].mxu0 %v702
      %v779 = vpop.f32.mrb[0].mxu0
      %v780 = vadd.f32 0.0, %v779
      %v781 = vpop.f32.mrb[0].mxu0
      %v782 = vadd.f32 0.0, %v781
      %783 = vdwg.mxu0
      %784 = vmatprep.subr.mxu0 %v285
      %785 = vmatpush1.msra.mxu0 %v284
      %786 = vmatprep.subr.mxu0 %v289
      %787 = vmatpush1.msra.mxu0 %v288
      %788 = vmatprep.subr.mxu0 %v293
      %789 = vmatpush1.msra.mxu0 %v292
      %790 = vmatprep.subr.mxu0 %v297
      %791 = vmatpush1.msra.mxu0 %v296
      %792 = vmatprep.subr.mxu0 %v301
      %793 = vmatpush1.msra.mxu0 %v300
      %794 = vmatprep.subr.mxu0 %v305
      %795 = vmatpush1.msra.mxu0 %v304
      %796 = vmatprep.subr.mxu0 %v309
      %797 = vmatpush1.msra.mxu0 %v308
      %798 = vmatprep.subr.mxu0 %v313
      %799 = vmatpush1.msra.mxu0 %v312
      %800 = vmatprep.subr.mxu0 %v317
      %801 = vmatpush1.msra.mxu0 %v316
      %802 = vmatprep.subr.mxu0 %v321
      %803 = vmatpush1.msra.mxu0 %v320
      %804 = vmatprep.subr.mxu0 %v325
      %805 = vmatpush1.msra.mxu0 %v324
      %806 = vmatprep.subr.mxu0 %v329
      %807 = vmatpush1.msra.mxu0 %v328
      %808 = vmatprep.subr.mxu0 %v333
      %809 = vmatpush1.msra.mxu0 %v332
      %810 = vmatprep.subr.mxu0 %v337
      %811 = vmatpush1.msra.mxu0 %v336
      %812 = vmatprep.subr.mxu0 %v341
      %813 = vmatpush1.msra.mxu0 %v340
      %814 = vmatprep.subr.mxu0 %v345
      %815 = vmatpush1.msra.mxu0 %v344
      %816 = vmatprep.subr.mxu0 0.0
      %817 = vmatpush1.msra.mxu0 0.0
      %818 = vmatprep.subr.mxu0 0.0
      %819 = vmatpush1.msra.mxu0 0.0
      %820 = vmatprep.subr.mxu0 0.0
      %821 = vmatpush1.msra.mxu0 0.0
      %822 = vmatprep.subr.mxu0 0.0
      %823 = vmatpush1.msra.mxu0 0.0
      %824 = vmatprep.subr.mxu0 0.0
      %825 = vmatpush1.msra.mxu0 0.0
      %826 = vmatprep.subr.mxu0 0.0
      %827 = vmatpush1.msra.mxu0 0.0
      %828 = vmatprep.subr.mxu0 0.0
      %829 = vmatpush1.msra.mxu0 0.0
      %830 = vmatprep.subr.mxu0 0.0
      %831 = vmatpush1.msra.mxu0 0.0
      %832 = vmatprep.subr.mxu0 0.0
      %833 = vmatpush1.msra.mxu0 0.0
      %834 = vmatprep.subr.mxu0 0.0
      %835 = vmatpush1.msra.mxu0 0.0
      %836 = vmatprep.subr.mxu0 0.0
      %837 = vmatpush1.msra.mxu0 0.0
      %838 = vmatprep.subr.mxu0 0.0
      %839 = vmatpush1.msra.mxu0 0.0
      %840 = vmatprep.subr.mxu0 0.0
      %841 = vmatpush1.msra.mxu0 0.0
      %842 = vmatprep.subr.mxu0 0.0
      %843 = vmatpush1.msra.mxu0 0.0
      %844 = vmatprep.subr.mxu0 0.0
      %845 = vmatpush1.msra.mxu0 0.0
      %846 = vmatprep.subr.mxu0 0.0
      %847 = vmatpush1.msra.mxu0 0.0
      %848 = vmatprep.mubr.f32.mxu0 0.0
      %849 = vmatmul.mubr.f32.gmra.mrb[0].mxu0 %v702
      %v850 = vpop.f32.mrb[0].mxu0
      %v851 = vadd.f32 0.0, %v850
      %v852 = vpop.f32.mrb[0].mxu0
      %v853 = vadd.f32 0.0, %v852
      %854 = vdwg.mxu0
      %v855 = vadd.f32 %v709, %v780
      %v856 = vadd.f32 %v710, %v782
      %v857 = vadd.f32 %v711, %v851
      %v858 = vadd.f32 %v712, %v853
      %v859 = vxor.u32 %v855, 2147483648
      %v860 = vmul.f32 %v859, 1.442695
      %v861 = vpow.pop %v860
      %v862 = vadd.f32 %v861, 1.0
      %v863 = vrcp.pop %v862
      %v864 = vmul.f32 1.0, %v863
      %v865 = vxor.u32 %v856, 2147483648
      %v866 = vmul.f32 %v865, 1.442695
      %v867 = vpow.pop %v866
      %v868 = vadd.f32 %v867, 1.0
      %v869 = vrcp.pop %v868
      %v870 = vmul.f32 1.0, %v869
      %v871 = vtanh.pop %v857
      %v872 = vxor.u32 %v858, 2147483648
      %v873 = vmul.f32 %v872, 1.442695
      %v874 = vpow.pop %v873
      %v875 = vadd.f32 %v874, 1.0
      %v876 = vrcp.pop %v875
      %v877 = vmul.f32 1.0, %v876
      %v878 = vmul.f32 %v870, %v700
      %v879 = vmul.f32 %v864, %v871
      %v880 = vadd.f32 %v878, %v879
      %v881 = vtanh.pop %v880
      %v882 = vmul.f32 %v877, %v881
      %v883 = vpack.c.bf16 %v882, %v882
      %s884 = scalar_lea.vmem %s238, 8
      %885 = vst [vmem:[%s884] sm:$0xf] %v883
      %s886 = scalar_lea.vmem %s223, 48
      %v887 = vld [vmem:[%s886] sm:$0xff]
      %v888 = vld [vmem:[%s886 + $0x8] sm:$0xff]
      %v889 = vunpack.c.l.bf16 %v887
      %v890 = vunpack.c.h.bf16 %v887
      %v891 = vunpack.c.l.bf16 %v888
      %v892 = vunpack.c.h.bf16 %v888
      %893 = vmatprep.subr.mxu0 %v283
      %894 = vmatpush1.msra.mxu0 %v282
      %895 = vmatprep.subr.mxu0 %v287
      %896 = vmatpush1.msra.mxu0 %v286
      %897 = vmatprep.subr.mxu0 %v291
      %898 = vmatpush1.msra.mxu0 %v290
      %899 = vmatprep.subr.mxu0 %v295
      %900 = vmatpush1.msra.mxu0 %v294
      %901 = vmatprep.subr.mxu0 %v299
      %902 = vmatpush1.msra.mxu0 %v298
      %903 = vmatprep.subr.mxu0 %v303
      %904 = vmatpush1.msra.mxu0 %v302
      %905 = vmatprep.subr.mxu0 %v307
      %906 = vmatpush1.msra.mxu0 %v306
      %907 = vmatprep.subr.mxu0 %v311
      %908 = vmatpush1.msra.mxu0 %v310
      %909 = vmatprep.subr.mxu0 %v315
      %910 = vmatpush1.msra.mxu0 %v314
      %911 = vmatprep.subr.mxu0 %v319
      %912 = vmatpush1.msra.mxu0 %v318
      %913 = vmatprep.subr.mxu0 %v323
      %914 = vmatpush1.msra.mxu0 %v322
      %915 = vmatprep.subr.mxu0 %v327
      %916 = vmatpush1.msra.mxu0 %v326
      %917 = vmatprep.subr.mxu0 %v331
      %918 = vmatpush1.msra.mxu0 %v330
      %919 = vmatprep.subr.mxu0 %v335
      %920 = vmatpush1.msra.mxu0 %v334
      %921 = vmatprep.subr.mxu0 %v339
      %922 = vmatpush1.msra.mxu0 %v338
      %923 = vmatprep.subr.mxu0 %v343
      %924 = vmatpush1.msra.mxu0 %v342
      %925 = vmatprep.subr.mxu0 0.0
      %926 = vmatpush1.msra.mxu0 0.0
      %927 = vmatprep.subr.mxu0 0.0
      %928 = vmatpush1.msra.mxu0 0.0
      %929 = vmatprep.subr.mxu0 0.0
      %930 = vmatpush1.msra.mxu0 0.0
      %931 = vmatprep.subr.mxu0 0.0
      %932 = vmatpush1.msra.mxu0 0.0
      %933 = vmatprep.subr.mxu0 0.0
      %934 = vmatpush1.msra.mxu0 0.0
      %935 = vmatprep.subr.mxu0 0.0
      %936 = vmatpush1.msra.mxu0 0.0
      %937 = vmatprep.subr.mxu0 0.0
      %938 = vmatpush1.msra.mxu0 0.0
      %939 = vmatprep.subr.mxu0 0.0
      %940 = vmatpush1.msra.mxu0 0.0
      %941 = vmatprep.subr.mxu0 0.0
      %942 = vmatpush1.msra.mxu0 0.0
      %943 = vmatprep.subr.mxu0 0.0
      %944 = vmatpush1.msra.mxu0 0.0
      %945 = vmatprep.subr.mxu0 0.0
      %946 = vmatpush1.msra.mxu0 0.0
      %947 = vmatprep.subr.mxu0 0.0
      %948 = vmatpush1.msra.mxu0 0.0
      %949 = vmatprep.subr.mxu0 0.0
      %950 = vmatpush1.msra.mxu0 0.0
      %951 = vmatprep.subr.mxu0 0.0
      %952 = vmatpush1.msra.mxu0 0.0
      %953 = vmatprep.subr.mxu0 0.0
      %954 = vmatpush1.msra.mxu0 0.0
      %955 = vmatprep.subr.mxu0 0.0
      %956 = vmatpush1.msra.mxu0 0.0
      %957 = vmatprep.mubr.f32.mxu0 0.0
      %958 = vmatmul.mubr.f32.gmra.mrb[0].mxu0 %v882
      %v959 = vpop.f32.mrb[0].mxu0
      %v960 = vadd.f32 0.0, %v959
      %v961 = vpop.f32.mrb[0].mxu0
      %v962 = vadd.f32 0.0, %v961
      %963 = vdwg.mxu0
      %964 = vmatprep.subr.mxu0 %v285
      %965 = vmatpush1.msra.mxu0 %v284
      %966 = vmatprep.subr.mxu0 %v289
      %967 = vmatpush1.msra.mxu0 %v288
      %968 = vmatprep.subr.mxu0 %v293
      %969 = vmatpush1.msra.mxu0 %v292
      %970 = vmatprep.subr.mxu0 %v297
      %971 = vmatpush1.msra.mxu0 %v296
      %972 = vmatprep.subr.mxu0 %v301
      %973 = vmatpush1.msra.mxu0 %v300
      %974 = vmatprep.subr.mxu0 %v305
      %975 = vmatpush1.msra.mxu0 %v304
      %976 = vmatprep.subr.mxu0 %v309
      %977 = vmatpush1.msra.mxu0 %v308
      %978 = vmatprep.subr.mxu0 %v313
      %979 = vmatpush1.msra.mxu0 %v312
      %980 = vmatprep.subr.mxu0 %v317
      %981 = vmatpush1.msra.mxu0 %v316
      %982 = vmatprep.subr.mxu0 %v321
      %983 = vmatpush1.msra.mxu0 %v320
      %984 = vmatprep.subr.mxu0 %v325
      %985 = vmatpush1.msra.mxu0 %v324
      %986 = vmatprep.subr.mxu0 %v329
      %987 = vmatpush1.msra.mxu0 %v328
      %988 = vmatprep.subr.mxu0 %v333
      %989 = vmatpush1.msra.mxu0 %v332
      %990 = vmatprep.subr.mxu0 %v337
      %991 = vmatpush1.msra.mxu0 %v336
      %992 = vmatprep.subr.mxu0 %v341
      %993 = vmatpush1.msra.mxu0 %v340
      %994 = vmatprep.subr.mxu0 %v345
      %995 = vmatpush1.msra.mxu0 %v344
      %996 = vmatprep.subr.mxu0 0.0
      %997 = vmatpush1.msra.mxu0 0.0
      %998 = vmatprep.subr.mxu0 0.0
      %999 = vmatpush1.msra.mxu0 0.0
      %1000 = vmatprep.subr.mxu0 0.0
      %1001 = vmatpush1.msra.mxu0 0.0
      %1002 = vmatprep.subr.mxu0 0.0
      %1003 = vmatpush1.msra.mxu0 0.0
      %1004 = vmatprep.subr.mxu0 0.0
      %1005 = vmatpush1.msra.mxu0 0.0
      %1006 = vmatprep.subr.mxu0 0.0
      %1007 = vmatpush1.msra.mxu0 0.0
      %1008 = vmatprep.subr.mxu0 0.0
      %1009 = vmatpush1.msra.mxu0 0.0
      %1010 = vmatprep.subr.mxu0 0.0
      %1011 = vmatpush1.msra.mxu0 0.0
      %1012 = vmatprep.subr.mxu0 0.0
      %1013 = vmatpush1.msra.mxu0 0.0
      %1014 = vmatprep.subr.mxu0 0.0
      %1015 = vmatpush1.msra.mxu0 0.0
      %1016 = vmatprep.subr.mxu0 0.0
      %1017 = vmatpush1.msra.mxu0 0.0
      %1018 = vmatprep.subr.mxu0 0.0
      %1019 = vmatpush1.msra.mxu0 0.0
      %1020 = vmatprep.subr.mxu0 0.0
      %1021 = vmatpush1.msra.mxu0 0.0
      %1022 = vmatprep.subr.mxu0 0.0
      %1023 = vmatpush1.msra.mxu0 0.0
      %1024 = vmatprep.subr.mxu0 0.0
      %1025 = vmatpush1.msra.mxu0 0.0
      %1026 = vmatprep.subr.mxu0 0.0
      %1027 = vmatpush1.msra.mxu0 0.0
      %1028 = vmatprep.mubr.f32.mxu0 0.0
      %1029 = vmatmul.mubr.f32.gmra.mrb[0].mxu0 %v882
      %v1030 = vpop.f32.mrb[0].mxu0
      %v1031 = vadd.f32 0.0, %v1030
      %v1032 = vpop.f32.mrb[0].mxu0
      %v1033 = vadd.f32 0.0, %v1032
      %1034 = vdwg.mxu0
      %v1035 = vadd.f32 %v889, %v960
      %v1036 = vadd.f32 %v890, %v962
      %v1037 = vadd.f32 %v891, %v1031
      %v1038 = vadd.f32 %v892, %v1033
      %v1039 = vxor.u32 %v1035, 2147483648
      %v1040 = vmul.f32 %v1039, 1.442695
      %v1041 = vpow.pop %v1040
      %v1042 = vadd.f32 %v1041, 1.0
      %v1043 = vrcp.pop %v1042
      %v1044 = vmul.f32 1.0, %v1043
      %v1045 = vxor.u32 %v1036, 2147483648
      %v1046 = vmul.f32 %v1045, 1.442695
      %v1047 = vpow.pop %v1046
      %v1048 = vadd.f32 %v1047, 1.0
      %v1049 = vrcp.pop %v1048
      %v1050 = vmul.f32 1.0, %v1049
      %v1051 = vtanh.pop %v1037
      %v1052 = vxor.u32 %v1038, 2147483648
      %v1053 = vmul.f32 %v1052, 1.442695
      %v1054 = vpow.pop %v1053
      %v1055 = vadd.f32 %v1054, 1.0
      %v1056 = vrcp.pop %v1055
      %v1057 = vmul.f32 1.0, %v1056
      %v1058 = vmul.f32 %v1050, %v880
      %v1059 = vmul.f32 %v1044, %v1051
      %v1060 = vadd.f32 %v1058, %v1059
      %v1061 = vtanh.pop %v1060
      %v1062 = vmul.f32 %v1057, %v1061
      %v1063 = vpack.c.bf16 %v1062, %v1062
      %s1064 = scalar_lea.vmem %s238, 12
      %1065 = vst [vmem:[%s1064] sm:$0xf] %v1063
      %s1066 = scalar_lea.vmem %s223, 64
      %v1067 = vld [vmem:[%s1066] sm:$0xff]
      %v1068 = vld [vmem:[%s1066 + $0x8] sm:$0xff]
      %v1069 = vunpack.c.l.bf16 %v1067
      %v1070 = vunpack.c.h.bf16 %v1067
      %v1071 = vunpack.c.l.bf16 %v1068
      %v1072 = vunpack.c.h.bf16 %v1068
      %1073 = vmatprep.subr.mxu0 %v283
      %1074 = vmatpush1.msra.mxu0 %v282
      %1075 = vmatprep.subr.mxu0 %v287
      %1076 = vmatpush1.msra.mxu0 %v286
      %1077 = vmatprep.subr.mxu0 %v291
      %1078 = vmatpush1.msra.mxu0 %v290
      %1079 = vmatprep.subr.mxu0 %v295
      %1080 = vmatpush1.msra.mxu0 %v294
      %1081 = vmatprep.subr.mxu0 %v299
      %1082 = vmatpush1.msra.mxu0 %v298
      %1083 = vmatprep.subr.mxu0 %v303
      %1084 = vmatpush1.msra.mxu0 %v302
      %1085 = vmatprep.subr.mxu0 %v307
      %1086 = vmatpush1.msra.mxu0 %v306
      %1087 = vmatprep.subr.mxu0 %v311
      %1088 = vmatpush1.msra.mxu0 %v310
      %1089 = vmatprep.subr.mxu0 %v315
      %1090 = vmatpush1.msra.mxu0 %v314
      %1091 = vmatprep.subr.mxu0 %v319
      %1092 = vmatpush1.msra.mxu0 %v318
      %1093 = vmatprep.subr.mxu0 %v323
      %1094 = vmatpush1.msra.mxu0 %v322
      %1095 = vmatprep.subr.mxu0 %v327
      %1096 = vmatpush1.msra.mxu0 %v326
      %1097 = vmatprep.subr.mxu0 %v331
      %1098 = vmatpush1.msra.mxu0 %v330
      %1099 = vmatprep.subr.mxu0 %v335
      %1100 = vmatpush1.msra.mxu0 %v334
      %1101 = vmatprep.subr.mxu0 %v339
      %1102 = vmatpush1.msra.mxu0 %v338
      %1103 = vmatprep.subr.mxu0 %v343
      %1104 = vmatpush1.msra.mxu0 %v342
      %1105 = vmatprep.subr.mxu0 0.0
      %1106 = vmatpush1.msra.mxu0 0.0
      %1107 = vmatprep.subr.mxu0 0.0
      %1108 = vmatpush1.msra.mxu0 0.0
      %1109 = vmatprep.subr.mxu0 0.0
      %1110 = vmatpush1.msra.mxu0 0.0
      %1111 = vmatprep.subr.mxu0 0.0
      %1112 = vmatpush1.msra.mxu0 0.0
      %1113 = vmatprep.subr.mxu0 0.0
      %1114 = vmatpush1.msra.mxu0 0.0
      %1115 = vmatprep.subr.mxu0 0.0
      %1116 = vmatpush1.msra.mxu0 0.0
      %1117 = vmatprep.subr.mxu0 0.0
      %1118 = vmatpush1.msra.mxu0 0.0
      %1119 = vmatprep.subr.mxu0 0.0
      %1120 = vmatpush1.msra.mxu0 0.0
      %1121 = vmatprep.subr.mxu0 0.0
      %1122 = vmatpush1.msra.mxu0 0.0
      %1123 = vmatprep.subr.mxu0 0.0
      %1124 = vmatpush1.msra.mxu0 0.0
      %1125 = vmatprep.subr.mxu0 0.0
      %1126 = vmatpush1.msra.mxu0 0.0
      %1127 = vmatprep.subr.mxu0 0.0
      %1128 = vmatpush1.msra.mxu0 0.0
      %1129 = vmatprep.subr.mxu0 0.0
      %1130 = vmatpush1.msra.mxu0 0.0
      %1131 = vmatprep.subr.mxu0 0.0
      %1132 = vmatpush1.msra.mxu0 0.0
      %1133 = vmatprep.subr.mxu0 0.0
      %1134 = vmatpush1.msra.mxu0 0.0
      %1135 = vmatprep.subr.mxu0 0.0
      %1136 = vmatpush1.msra.mxu0 0.0
      %1137 = vmatprep.mubr.f32.mxu0 0.0
      %1138 = vmatmul.mubr.f32.gmra.mrb[0].mxu0 %v1062
      %v1139 = vpop.f32.mrb[0].mxu0
      %v1140 = vadd.f32 0.0, %v1139
      %v1141 = vpop.f32.mrb[0].mxu0
      %v1142 = vadd.f32 0.0, %v1141
      %1143 = vdwg.mxu0
      %1144 = vmatprep.subr.mxu0 %v285
      %1145 = vmatpush1.msra.mxu0 %v284
      %1146 = vmatprep.subr.mxu0 %v289
      %1147 = vmatpush1.msra.mxu0 %v288
      %1148 = vmatprep.subr.mxu0 %v293
      %1149 = vmatpush1.msra.mxu0 %v292
      %1150 = vmatprep.subr.mxu0 %v297
      %1151 = vmatpush1.msra.mxu0 %v296
      %1152 = vmatprep.subr.mxu0 %v301
      %1153 = vmatpush1.msra.mxu0 %v300
      %1154 = vmatprep.subr.mxu0 %v305
      %1155 = vmatpush1.msra.mxu0 %v304
      %1156 = vmatprep.subr.mxu0 %v309
      %1157 = vmatpush1.msra.mxu0 %v308
      %1158 = vmatprep.subr.mxu0 %v313
      %1159 = vmatpush1.msra.mxu0 %v312
      %1160 = vmatprep.subr.mxu0 %v317
      %1161 = vmatpush1.msra.mxu0 %v316
      %1162 = vmatprep.subr.mxu0 %v321
      %1163 = vmatpush1.msra.mxu0 %v320
      %1164 = vmatprep.subr.mxu0 %v325
      %1165 = vmatpush1.msra.mxu0 %v324
      %1166 = vmatprep.subr.mxu0 %v329
      %1167 = vmatpush1.msra.mxu0 %v328
      %1168 = vmatprep.subr.mxu0 %v333
      %1169 = vmatpush1.msra.mxu0 %v332
      %1170 = vmatprep.subr.mxu0 %v337
      %1171 = vmatpush1.msra.mxu0 %v336
      %1172 = vmatprep.subr.mxu0 %v341
      %1173 = vmatpush1.msra.mxu0 %v340
      %1174 = vmatprep.subr.mxu0 %v345
      %1175 = vmatpush1.msra.mxu0 %v344
      %1176 = vmatprep.subr.mxu0 0.0
      %1177 = vmatpush1.msra.mxu0 0.0
      %1178 = vmatprep.subr.mxu0 0.0
      %1179 = vmatpush1.msra.mxu0 0.0
      %1180 = vmatprep.subr.mxu0 0.0
      %1181 = vmatpush1.msra.mxu0 0.0
      %1182 = vmatprep.subr.mxu0 0.0
      %1183 = vmatpush1.msra.mxu0 0.0
      %1184 = vmatprep.subr.mxu0 0.0
      %1185 = vmatpush1.msra.mxu0 0.0
      %1186 = vmatprep.subr.mxu0 0.0
      %1187 = vmatpush1.msra.mxu0 0.0
      %1188 = vmatprep.subr.mxu0 0.0
      %1189 = vmatpush1.msra.mxu0 0.0
      %1190 = vmatprep.subr.mxu0 0.0
      %1191 = vmatpush1.msra.mxu0 0.0
      %1192 = vmatprep.subr.mxu0 0.0
      %1193 = vmatpush1.msra.mxu0 0.0
      %1194 = vmatprep.subr.mxu0 0.0
      %1195 = vmatpush1.msra.mxu0 0.0
      %1196 = vmatprep.subr.mxu0 0.0
      %1197 = vmatpush1.msra.mxu0 0.0
      %1198 = vmatprep.subr.mxu0 0.0
      %1199 = vmatpush1.msra.mxu0 0.0
      %1200 = vmatprep.subr.mxu0 0.0
      %1201 = vmatpush1.msra.mxu0 0.0
      %1202 = vmatprep.subr.mxu0 0.0
      %1203 = vmatpush1.msra.mxu0 0.0
      %1204 = vmatprep.subr.mxu0 0.0
      %1205 = vmatpush1.msra.mxu0 0.0
      %1206 = vmatprep.subr.mxu0 0.0
      %1207 = vmatpush1.msra.mxu0 0.0
      %1208 = vmatprep.mubr.f32.mxu0 0.0
      %1209 = vmatmul.mubr.f32.gmra.mrb[0].mxu0 %v1062
      %v1210 = vpop.f32.mrb[0].mxu0
      %v1211 = vadd.f32 0.0, %v1210
      %v1212 = vpop.f32.mrb[0].mxu0
      %v1213 = vadd.f32 0.0, %v1212
      %1214 = vdwg.mxu0
      %v1215 = vadd.f32 %v1069, %v1140
      %v1216 = vadd.f32 %v1070, %v1142
      %v1217 = vadd.f32 %v1071, %v1211
      %v1218 = vadd.f32 %v1072, %v1213
      %v1219 = vxor.u32 %v1215, 2147483648
      %v1220 = vmul.f32 %v1219, 1.442695
      %v1221 = vpow.pop %v1220
      %v1222 = vadd.f32 %v1221, 1.0
      %v1223 = vrcp.pop %v1222
      %v1224 = vmul.f32 1.0, %v1223
      %v1225 = vxor.u32 %v1216, 2147483648
      %v1226 = vmul.f32 %v1225, 1.442695
      %v1227 = vpow.pop %v1226
      %v1228 = vadd.f32 %v1227, 1.0
      %v1229 = vrcp.pop %v1228
      %v1230 = vmul.f32 1.0, %v1229
      %v1231 = vtanh.pop %v1217
      %v1232 = vxor.u32 %v1218, 2147483648
      %v1233 = vmul.f32 %v1232, 1.442695
      %v1234 = vpow.pop %v1233
      %v1235 = vadd.f32 %v1234, 1.0
      %v1236 = vrcp.pop %v1235
      %v1237 = vmul.f32 1.0, %v1236
      %v1238 = vmul.f32 %v1230, %v1060
      %v1239 = vmul.f32 %v1224, %v1231
      %v1240 = vadd.f32 %v1238, %v1239
      %v1241 = vtanh.pop %v1240
      %v1242 = vmul.f32 %v1237, %v1241
      %v1243 = vpack.c.bf16 %v1242, %v1242
      %s1244 = scalar_lea.vmem %s238, 16
      %1245 = vst [vmem:[%s1244] sm:$0xf] %v1243
      %s1246 = scalar_lea.vmem %s223, 80
      %v1247 = vld [vmem:[%s1246] sm:$0xff]
      %v1248 = vld [vmem:[%s1246 + $0x8] sm:$0xff]
      %v1249 = vunpack.c.l.bf16 %v1247
      %v1250 = vunpack.c.h.bf16 %v1247
      %v1251 = vunpack.c.l.bf16 %v1248
      %v1252 = vunpack.c.h.bf16 %v1248
      %1253 = vmatprep.subr.mxu0 %v283
      %1254 = vmatpush1.msra.mxu0 %v282
      %1255 = vmatprep.subr.mxu0 %v287
      %1256 = vmatpush1.msra.mxu0 %v286
      %1257 = vmatprep.subr.mxu0 %v291
      %1258 = vmatpush1.msra.mxu0 %v290
      %1259 = vmatprep.subr.mxu0 %v295
      %1260 = vmatpush1.msra.mxu0 %v294
      %1261 = vmatprep.subr.mxu0 %v299
      %1262 = vmatpush1.msra.mxu0 %v298
      %1263 = vmatprep.subr.mxu0 %v303
      %1264 = vmatpush1.msra.mxu0 %v302
      %1265 = vmatprep.subr.mxu0 %v307
      %1266 = vmatpush1.msra.mxu0 %v306
      %1267 = vmatprep.subr.mxu0 %v311
      %1268 = vmatpush1.msra.mxu0 %v310
      %1269 = vmatprep.subr.mxu0 %v315
      %1270 = vmatpush1.msra.mxu0 %v314
      %1271 = vmatprep.subr.mxu0 %v319
      %1272 = vmatpush1.msra.mxu0 %v318
      %1273 = vmatprep.subr.mxu0 %v323
      %1274 = vmatpush1.msra.mxu0 %v322
      %1275 = vmatprep.subr.mxu0 %v327
      %1276 = vmatpush1.msra.mxu0 %v326
      %1277 = vmatprep.subr.mxu0 %v331
      %1278 = vmatpush1.msra.mxu0 %v330
      %1279 = vmatprep.subr.mxu0 %v335
      %1280 = vmatpush1.msra.mxu0 %v334
      %1281 = vmatprep.subr.mxu0 %v339
      %1282 = vmatpush1.msra.mxu0 %v338
      %1283 = vmatprep.subr.mxu0 %v343
      %1284 = vmatpush1.msra.mxu0 %v342
      %1285 = vmatprep.subr.mxu0 0.0
      %1286 = vmatpush1.msra.mxu0 0.0
      %1287 = vmatprep.subr.mxu0 0.0
      %1288 = vmatpush1.msra.mxu0 0.0
      %1289 = vmatprep.subr.mxu0 0.0
      %1290 = vmatpush1.msra.mxu0 0.0
      %1291 = vmatprep.subr.mxu0 0.0
      %1292 = vmatpush1.msra.mxu0 0.0
      %1293 = vmatprep.subr.mxu0 0.0
      %1294 = vmatpush1.msra.mxu0 0.0
      %1295 = vmatprep.subr.mxu0 0.0
      %1296 = vmatpush1.msra.mxu0 0.0
      %1297 = vmatprep.subr.mxu0 0.0
      %1298 = vmatpush1.msra.mxu0 0.0
      %1299 = vmatprep.subr.mxu0 0.0
      %1300 = vmatpush1.msra.mxu0 0.0
      %1301 = vmatprep.subr.mxu0 0.0
      %1302 = vmatpush1.msra.mxu0 0.0
      %1303 = vmatprep.subr.mxu0 0.0
      %1304 = vmatpush1.msra.mxu0 0.0
      %1305 = vmatprep.subr.mxu0 0.0
      %1306 = vmatpush1.msra.mxu0 0.0
      %1307 = vmatprep.subr.mxu0 0.0
      %1308 = vmatpush1.msra.mxu0 0.0
      %1309 = vmatprep.subr.mxu0 0.0
      %1310 = vmatpush1.msra.mxu0 0.0
      %1311 = vmatprep.subr.mxu0 0.0
      %1312 = vmatpush1.msra.mxu0 0.0
      %1313 = vmatprep.subr.mxu0 0.0
      %1314 = vmatpush1.msra.mxu0 0.0
      %1315 = vmatprep.subr.mxu0 0.0
      %1316 = vmatpush1.msra.mxu0 0.0
      %1317 = vmatprep.mubr.f32.mxu0 0.0
      %1318 = vmatmul.mubr.f32.gmra.mrb[0].mxu0 %v1242
      %v1319 = vpop.f32.mrb[0].mxu0
      %v1320 = vadd.f32 0.0, %v1319
      %v1321 = vpop.f32.mrb[0].mxu0
      %v1322 = vadd.f32 0.0, %v1321
      %1323 = vdwg.mxu0
      %1324 = vmatprep.subr.mxu0 %v285
      %1325 = vmatpush1.msra.mxu0 %v284
      %1326 = vmatprep.subr.mxu0 %v289
      %1327 = vmatpush1.msra.mxu0 %v288
      %1328 = vmatprep.subr.mxu0 %v293
      %1329 = vmatpush1.msra.mxu0 %v292
      %1330 = vmatprep.subr.mxu0 %v297
      %1331 = vmatpush1.msra.mxu0 %v296
      %1332 = vmatprep.subr.mxu0 %v301
      %1333 = vmatpush1.msra.mxu0 %v300
      %1334 = vmatprep.subr.mxu0 %v305
      %1335 = vmatpush1.msra.mxu0 %v304
      %1336 = vmatprep.subr.mxu0 %v309
      %1337 = vmatpush1.msra.mxu0 %v308
      %1338 = vmatprep.subr.mxu0 %v313
      %1339 = vmatpush1.msra.mxu0 %v312
      %1340 = vmatprep.subr.mxu0 %v317
      %1341 = vmatpush1.msra.mxu0 %v316
      %1342 = vmatprep.subr.mxu0 %v321
      %1343 = vmatpush1.msra.mxu0 %v320
      %1344 = vmatprep.subr.mxu0 %v325
      %1345 = vmatpush1.msra.mxu0 %v324
      %1346 = vmatprep.subr.mxu0 %v329
      %1347 = vmatpush1.msra.mxu0 %v328
      %1348 = vmatprep.subr.mxu0 %v333
      %1349 = vmatpush1.msra.mxu0 %v332
      %1350 = vmatprep.subr.mxu0 %v337
      %1351 = vmatpush1.msra.mxu0 %v336
      %1352 = vmatprep.subr.mxu0 %v341
      %1353 = vmatpush1.msra.mxu0 %v340
      %1354 = vmatprep.subr.mxu0 %v345
      %1355 = vmatpush1.msra.mxu0 %v344
      %1356 = vmatprep.subr.mxu0 0.0
      %1357 = vmatpush1.msra.mxu0 0.0
      %1358 = vmatprep.subr.mxu0 0.0
      %1359 = vmatpush1.msra.mxu0 0.0
      %1360 = vmatprep.subr.mxu0 0.0
      %1361 = vmatpush1.msra.mxu0 0.0
      %1362 = vmatprep.subr.mxu0 0.0
      %1363 = vmatpush1.msra.mxu0 0.0
      %1364 = vmatprep.subr.mxu0 0.0
      %1365 = vmatpush1.msra.mxu0 0.0
      %1366 = vmatprep.subr.mxu0 0.0
      %1367 = vmatpush1.msra.mxu0 0.0
      %1368 = vmatprep.subr.mxu0 0.0
      %1369 = vmatpush1.msra.mxu0 0.0
      %1370 = vmatprep.subr.mxu0 0.0
      %1371 = vmatpush1.msra.mxu0 0.0
      %1372 = vmatprep.subr.mxu0 0.0
      %1373 = vmatpush1.msra.mxu0 0.0
      %1374 = vmatprep.subr.mxu0 0.0
      %1375 = vmatpush1.msra.mxu0 0.0
      %1376 = vmatprep.subr.mxu0 0.0
      %1377 = vmatpush1.msra.mxu0 0.0
      %1378 = vmatprep.subr.mxu0 0.0
      %1379 = vmatpush1.msra.mxu0 0.0
      %1380 = vmatprep.subr.mxu0 0.0
      %1381 = vmatpush1.msra.mxu0 0.0
      %1382 = vmatprep.subr.mxu0 0.0
      %1383 = vmatpush1.msra.mxu0 0.0
      %1384 = vmatprep.subr.mxu0 0.0
      %1385 = vmatpush1.msra.mxu0 0.0
      %1386 = vmatprep.subr.mxu0 0.0
      %1387 = vmatpush1.msra.mxu0 0.0
      %1388 = vmatprep.mubr.f32.mxu0 0.0
      %1389 = vmatmul.mubr.f32.gmra.mrb[0].mxu0 %v1242
      %v1390 = vpop.f32.mrb[0].mxu0
      %v1391 = vadd.f32 0.0, %v1390
      %v1392 = vpop.f32.mrb[0].mxu0
      %v1393 = vadd.f32 0.0, %v1392
      %1394 = vdwg.mxu0
      %v1395 = vadd.f32 %v1249, %v1320
      %v1396 = vadd.f32 %v1250, %v1322
      %v1397 = vadd.f32 %v1251, %v1391
      %v1398 = vadd.f32 %v1252, %v1393
      %v1399 = vxor.u32 %v1395, 2147483648
      %v1400 = vmul.f32 %v1399, 1.442695
      %v1401 = vpow.pop %v1400
      %v1402 = vadd.f32 %v1401, 1.0
      %v1403 = vrcp.pop %v1402
      %v1404 = vmul.f32 1.0, %v1403
      %v1405 = vxor.u32 %v1396, 2147483648
      %v1406 = vmul.f32 %v1405, 1.442695
      %v1407 = vpow.pop %v1406
      %v1408 = vadd.f32 %v1407, 1.0
      %v1409 = vrcp.pop %v1408
      %v1410 = vmul.f32 1.0, %v1409
      %v1411 = vtanh.pop %v1397
      %v1412 = vxor.u32 %v1398, 2147483648
      %v1413 = vmul.f32 %v1412, 1.442695
      %v1414 = vpow.pop %v1413
      %v1415 = vadd.f32 %v1414, 1.0
      %v1416 = vrcp.pop %v1415
      %v1417 = vmul.f32 1.0, %v1416
      %v1418 = vmul.f32 %v1410, %v1240
      %v1419 = vmul.f32 %v1404, %v1411
      %v1420 = vadd.f32 %v1418, %v1419
      %v1421 = vtanh.pop %v1420
      %v1422 = vmul.f32 %v1417, %v1421
      %v1423 = vpack.c.bf16 %v1422, %v1422
      %s1424 = scalar_lea.vmem %s238, 20
      %1425 = vst [vmem:[%s1424] sm:$0xf] %v1423
      %s1426 = scalar_lea.vmem %s223, 96
      %v1427 = vld [vmem:[%s1426] sm:$0xff]
      %v1428 = vld [vmem:[%s1426 + $0x8] sm:$0xff]
      %v1429 = vunpack.c.l.bf16 %v1427
      %v1430 = vunpack.c.h.bf16 %v1427
      %v1431 = vunpack.c.l.bf16 %v1428
      %v1432 = vunpack.c.h.bf16 %v1428
      %1433 = vmatprep.subr.mxu0 %v283
      %1434 = vmatpush1.msra.mxu0 %v282
      %1435 = vmatprep.subr.mxu0 %v287
      %1436 = vmatpush1.msra.mxu0 %v286
      %1437 = vmatprep.subr.mxu0 %v291
      %1438 = vmatpush1.msra.mxu0 %v290
      %1439 = vmatprep.subr.mxu0 %v295
      %1440 = vmatpush1.msra.mxu0 %v294
      %1441 = vmatprep.subr.mxu0 %v299
      %1442 = vmatpush1.msra.mxu0 %v298
      %1443 = vmatprep.subr.mxu0 %v303
      %1444 = vmatpush1.msra.mxu0 %v302
      %1445 = vmatprep.subr.mxu0 %v307
      %1446 = vmatpush1.msra.mxu0 %v306
      %1447 = vmatprep.subr.mxu0 %v311
      %1448 = vmatpush1.msra.mxu0 %v310
      %1449 = vmatprep.subr.mxu0 %v315
      %1450 = vmatpush1.msra.mxu0 %v314
      %1451 = vmatprep.subr.mxu0 %v319
      %1452 = vmatpush1.msra.mxu0 %v318
      %1453 = vmatprep.subr.mxu0 %v323
      %1454 = vmatpush1.msra.mxu0 %v322
      %1455 = vmatprep.subr.mxu0 %v327
      %1456 = vmatpush1.msra.mxu0 %v326
      %1457 = vmatprep.subr.mxu0 %v331
      %1458 = vmatpush1.msra.mxu0 %v330
      %1459 = vmatprep.subr.mxu0 %v335
      %1460 = vmatpush1.msra.mxu0 %v334
      %1461 = vmatprep.subr.mxu0 %v339
      %1462 = vmatpush1.msra.mxu0 %v338
      %1463 = vmatprep.subr.mxu0 %v343
      %1464 = vmatpush1.msra.mxu0 %v342
      %1465 = vmatprep.subr.mxu0 0.0
      %1466 = vmatpush1.msra.mxu0 0.0
      %1467 = vmatprep.subr.mxu0 0.0
      %1468 = vmatpush1.msra.mxu0 0.0
      %1469 = vmatprep.subr.mxu0 0.0
      %1470 = vmatpush1.msra.mxu0 0.0
      %1471 = vmatprep.subr.mxu0 0.0
      %1472 = vmatpush1.msra.mxu0 0.0
      %1473 = vmatprep.subr.mxu0 0.0
      %1474 = vmatpush1.msra.mxu0 0.0
      %1475 = vmatprep.subr.mxu0 0.0
      %1476 = vmatpush1.msra.mxu0 0.0
      %1477 = vmatprep.subr.mxu0 0.0
      %1478 = vmatpush1.msra.mxu0 0.0
      %1479 = vmatprep.subr.mxu0 0.0
      %1480 = vmatpush1.msra.mxu0 0.0
      %1481 = vmatprep.subr.mxu0 0.0
      %1482 = vmatpush1.msra.mxu0 0.0
      %1483 = vmatprep.subr.mxu0 0.0
      %1484 = vmatpush1.msra.mxu0 0.0
      %1485 = vmatprep.subr.mxu0 0.0
      %1486 = vmatpush1.msra.mxu0 0.0
      %1487 = vmatprep.subr.mxu0 0.0
      %1488 = vmatpush1.msra.mxu0 0.0
      %1489 = vmatprep.subr.mxu0 0.0
      %1490 = vmatpush1.msra.mxu0 0.0
      %1491 = vmatprep.subr.mxu0 0.0
      %1492 = vmatpush1.msra.mxu0 0.0
      %1493 = vmatprep.subr.mxu0 0.0
      %1494 = vmatpush1.msra.mxu0 0.0
      %1495 = vmatprep.subr.mxu0 0.0
      %1496 = vmatpush1.msra.mxu0 0.0
      %1497 = vmatprep.mubr.f32.mxu0 0.0
      %1498 = vmatmul.mubr.f32.gmra.mrb[0].mxu0 %v1422
      %v1499 = vpop.f32.mrb[0].mxu0
      %v1500 = vadd.f32 0.0, %v1499
      %v1501 = vpop.f32.mrb[0].mxu0
      %v1502 = vadd.f32 0.0, %v1501
      %1503 = vdwg.mxu0
      %1504 = vmatprep.subr.mxu0 %v285
      %1505 = vmatpush1.msra.mxu0 %v284
      %1506 = vmatprep.subr.mxu0 %v289
      %1507 = vmatpush1.msra.mxu0 %v288
      %1508 = vmatprep.subr.mxu0 %v293
      %1509 = vmatpush1.msra.mxu0 %v292
      %1510 = vmatprep.subr.mxu0 %v297
      %1511 = vmatpush1.msra.mxu0 %v296
      %1512 = vmatprep.subr.mxu0 %v301
      %1513 = vmatpush1.msra.mxu0 %v300
      %1514 = vmatprep.subr.mxu0 %v305
      %1515 = vmatpush1.msra.mxu0 %v304
      %1516 = vmatprep.subr.mxu0 %v309
      %1517 = vmatpush1.msra.mxu0 %v308
      %1518 = vmatprep.subr.mxu0 %v313
      %1519 = vmatpush1.msra.mxu0 %v312
      %1520 = vmatprep.subr.mxu0 %v317
      %1521 = vmatpush1.msra.mxu0 %v316
      %1522 = vmatprep.subr.mxu0 %v321
      %1523 = vmatpush1.msra.mxu0 %v320
      %1524 = vmatprep.subr.mxu0 %v325
      %1525 = vmatpush1.msra.mxu0 %v324
      %1526 = vmatprep.subr.mxu0 %v329
      %1527 = vmatpush1.msra.mxu0 %v328
      %1528 = vmatprep.subr.mxu0 %v333
      %1529 = vmatpush1.msra.mxu0 %v332
      %1530 = vmatprep.subr.mxu0 %v337
      %1531 = vmatpush1.msra.mxu0 %v336
      %1532 = vmatprep.subr.mxu0 %v341
      %1533 = vmatpush1.msra.mxu0 %v340
      %1534 = vmatprep.subr.mxu0 %v345
      %1535 = vmatpush1.msra.mxu0 %v344
      %1536 = vmatprep.subr.mxu0 0.0
      %1537 = vmatpush1.msra.mxu0 0.0
      %1538 = vmatprep.subr.mxu0 0.0
      %1539 = vmatpush1.msra.mxu0 0.0
      %1540 = vmatprep.subr.mxu0 0.0
      %1541 = vmatpush1.msra.mxu0 0.0
      %1542 = vmatprep.subr.mxu0 0.0
      %1543 = vmatpush1.msra.mxu0 0.0
      %1544 = vmatprep.subr.mxu0 0.0
      %1545 = vmatpush1.msra.mxu0 0.0
      %1546 = vmatprep.subr.mxu0 0.0
      %1547 = vmatpush1.msra.mxu0 0.0
      %1548 = vmatprep.subr.mxu0 0.0
      %1549 = vmatpush1.msra.mxu0 0.0
      %1550 = vmatprep.subr.mxu0 0.0
      %1551 = vmatpush1.msra.mxu0 0.0
      %1552 = vmatprep.subr.mxu0 0.0
      %1553 = vmatpush1.msra.mxu0 0.0
      %1554 = vmatprep.subr.mxu0 0.0
      %1555 = vmatpush1.msra.mxu0 0.0
      %1556 = vmatprep.subr.mxu0 0.0
      %1557 = vmatpush1.msra.mxu0 0.0
      %1558 = vmatprep.subr.mxu0 0.0
      %1559 = vmatpush1.msra.mxu0 0.0
      %1560 = vmatprep.subr.mxu0 0.0
      %1561 = vmatpush1.msra.mxu0 0.0
      %1562 = vmatprep.subr.mxu0 0.0
      %1563 = vmatpush1.msra.mxu0 0.0
      %1564 = vmatprep.subr.mxu0 0.0
      %1565 = vmatpush1.msra.mxu0 0.0
      %1566 = vmatprep.subr.mxu0 0.0
      %1567 = vmatpush1.msra.mxu0 0.0
      %1568 = vmatprep.mubr.f32.mxu0 0.0
      %1569 = vmatmul.mubr.f32.gmra.mrb[0].mxu0 %v1422
      %v1570 = vpop.f32.mrb[0].mxu0
      %v1571 = vadd.f32 0.0, %v1570
      %v1572 = vpop.f32.mrb[0].mxu0
      %v1573 = vadd.f32 0.0, %v1572
      %1574 = vdwg.mxu0
      %v1575 = vadd.f32 %v1429, %v1500
      %v1576 = vadd.f32 %v1430, %v1502
      %v1577 = vadd.f32 %v1431, %v1571
      %v1578 = vadd.f32 %v1432, %v1573
      %v1579 = vxor.u32 %v1575, 2147483648
      %v1580 = vmul.f32 %v1579, 1.442695
      %v1581 = vpow.pop %v1580
      %v1582 = vadd.f32 %v1581, 1.0
      %v1583 = vrcp.pop %v1582
      %v1584 = vmul.f32 1.0, %v1583
      %v1585 = vxor.u32 %v1576, 2147483648
      %v1586 = vmul.f32 %v1585, 1.442695
      %v1587 = vpow.pop %v1586
      %v1588 = vadd.f32 %v1587, 1.0
      %v1589 = vrcp.pop %v1588
      %v1590 = vmul.f32 1.0, %v1589
      %v1591 = vtanh.pop %v1577
      %v1592 = vxor.u32 %v1578, 2147483648
      %v1593 = vmul.f32 %v1592, 1.442695
      %v1594 = vpow.pop %v1593
      %v1595 = vadd.f32 %v1594, 1.0
      %v1596 = vrcp.pop %v1595
      %v1597 = vmul.f32 1.0, %v1596
      %v1598 = vmul.f32 %v1590, %v1420
      %v1599 = vmul.f32 %v1584, %v1591
      %v1600 = vadd.f32 %v1598, %v1599
      %v1601 = vtanh.pop %v1600
      %v1602 = vmul.f32 %v1597, %v1601
      %v1603 = vpack.c.bf16 %v1602, %v1602
      %s1604 = scalar_lea.vmem %s238, 24
      %1605 = vst [vmem:[%s1604] sm:$0xf] %v1603
      %s1606 = scalar_lea.vmem %s223, 112
      %v1607 = vld [vmem:[%s1606] sm:$0xff]
      %v1608 = vld [vmem:[%s1606 + $0x8] sm:$0xff]
      %v1609 = vunpack.c.l.bf16 %v1607
      %v1610 = vunpack.c.h.bf16 %v1607
      %v1611 = vunpack.c.l.bf16 %v1608
      %v1612 = vunpack.c.h.bf16 %v1608
      %1613 = vmatprep.subr.mxu0 %v283
      %1614 = vmatpush1.msra.mxu0 %v282
      %1615 = vmatprep.subr.mxu0 %v287
      %1616 = vmatpush1.msra.mxu0 %v286
      %1617 = vmatprep.subr.mxu0 %v291
      %1618 = vmatpush1.msra.mxu0 %v290
      %1619 = vmatprep.subr.mxu0 %v295
      %1620 = vmatpush1.msra.mxu0 %v294
      %1621 = vmatprep.subr.mxu0 %v299
      %1622 = vmatpush1.msra.mxu0 %v298
      %1623 = vmatprep.subr.mxu0 %v303
      %1624 = vmatpush1.msra.mxu0 %v302
      %1625 = vmatprep.subr.mxu0 %v307
      %1626 = vmatpush1.msra.mxu0 %v306
      %1627 = vmatprep.subr.mxu0 %v311
      %1628 = vmatpush1.msra.mxu0 %v310
      %1629 = vmatprep.subr.mxu0 %v315
      %1630 = vmatpush1.msra.mxu0 %v314
      %1631 = vmatprep.subr.mxu0 %v319
      %1632 = vmatpush1.msra.mxu0 %v318
      %1633 = vmatprep.subr.mxu0 %v323
      %1634 = vmatpush1.msra.mxu0 %v322
      %1635 = vmatprep.subr.mxu0 %v327
      %1636 = vmatpush1.msra.mxu0 %v326
      %1637 = vmatprep.subr.mxu0 %v331
      %1638 = vmatpush1.msra.mxu0 %v330
      %1639 = vmatprep.subr.mxu0 %v335
      %1640 = vmatpush1.msra.mxu0 %v334
      %1641 = vmatprep.subr.mxu0 %v339
      %1642 = vmatpush1.msra.mxu0 %v338
      %1643 = vmatprep.subr.mxu0 %v343
      %1644 = vmatpush1.msra.mxu0 %v342
      %1645 = vmatprep.subr.mxu0 0.0
      %1646 = vmatpush1.msra.mxu0 0.0
      %1647 = vmatprep.subr.mxu0 0.0
      %1648 = vmatpush1.msra.mxu0 0.0
      %1649 = vmatprep.subr.mxu0 0.0
      %1650 = vmatpush1.msra.mxu0 0.0
      %1651 = vmatprep.subr.mxu0 0.0
      %1652 = vmatpush1.msra.mxu0 0.0
      %1653 = vmatprep.subr.mxu0 0.0
      %1654 = vmatpush1.msra.mxu0 0.0
      %1655 = vmatprep.subr.mxu0 0.0
      %1656 = vmatpush1.msra.mxu0 0.0
      %1657 = vmatprep.subr.mxu0 0.0
      %1658 = vmatpush1.msra.mxu0 0.0
      %1659 = vmatprep.subr.mxu0 0.0
      %1660 = vmatpush1.msra.mxu0 0.0
      %1661 = vmatprep.subr.mxu0 0.0
      %1662 = vmatpush1.msra.mxu0 0.0
      %1663 = vmatprep.subr.mxu0 0.0
      %1664 = vmatpush1.msra.mxu0 0.0
      %1665 = vmatprep.subr.mxu0 0.0
      %1666 = vmatpush1.msra.mxu0 0.0
      %1667 = vmatprep.subr.mxu0 0.0
      %1668 = vmatpush1.msra.mxu0 0.0
      %1669 = vmatprep.subr.mxu0 0.0
      %1670 = vmatpush1.msra.mxu0 0.0
      %1671 = vmatprep.subr.mxu0 0.0
      %1672 = vmatpush1.msra.mxu0 0.0
      %1673 = vmatprep.subr.mxu0 0.0
      %1674 = vmatpush1.msra.mxu0 0.0
      %1675 = vmatprep.subr.mxu0 0.0
      %1676 = vmatpush1.msra.mxu0 0.0
      %1677 = vmatprep.mubr.f32.mxu0 0.0
      %1678 = vmatmul.mubr.f32.gmra.mrb[0].mxu0 %v1602
      %v1679 = vpop.f32.mrb[0].mxu0
      %v1680 = vadd.f32 0.0, %v1679
      %v1681 = vpop.f32.mrb[0].mxu0
      %v1682 = vadd.f32 0.0, %v1681
      %1683 = vdwg.mxu0
      %1684 = vmatprep.subr.mxu0 %v285
      %1685 = vmatpush1.msra.mxu0 %v284
      %1686 = vmatprep.subr.mxu0 %v289
      %1687 = vmatpush1.msra.mxu0 %v288
      %1688 = vmatprep.subr.mxu0 %v293
      %1689 = vmatpush1.msra.mxu0 %v292
      %1690 = vmatprep.subr.mxu0 %v297
      %1691 = vmatpush1.msra.mxu0 %v296
      %1692 = vmatprep.subr.mxu0 %v301
      %1693 = vmatpush1.msra.mxu0 %v300
      %1694 = vmatprep.subr.mxu0 %v305
      %1695 = vmatpush1.msra.mxu0 %v304
      %1696 = vmatprep.subr.mxu0 %v309
      %1697 = vmatpush1.msra.mxu0 %v308
      %1698 = vmatprep.subr.mxu0 %v313
      %1699 = vmatpush1.msra.mxu0 %v312
      %1700 = vmatprep.subr.mxu0 %v317
      %1701 = vmatpush1.msra.mxu0 %v316
      %1702 = vmatprep.subr.mxu0 %v321
      %1703 = vmatpush1.msra.mxu0 %v320
      %1704 = vmatprep.subr.mxu0 %v325
      %1705 = vmatpush1.msra.mxu0 %v324
      %1706 = vmatprep.subr.mxu0 %v329
      %1707 = vmatpush1.msra.mxu0 %v328
      %1708 = vmatprep.subr.mxu0 %v333
      %1709 = vmatpush1.msra.mxu0 %v332
      %1710 = vmatprep.subr.mxu0 %v337
      %1711 = vmatpush1.msra.mxu0 %v336
      %1712 = vmatprep.subr.mxu0 %v341
      %1713 = vmatpush1.msra.mxu0 %v340
      %1714 = vmatprep.subr.mxu0 %v345
      %1715 = vmatpush1.msra.mxu0 %v344
      %1716 = vmatprep.subr.mxu0 0.0
      %1717 = vmatpush1.msra.mxu0 0.0
      %1718 = vmatprep.subr.mxu0 0.0
      %1719 = vmatpush1.msra.mxu0 0.0
      %1720 = vmatprep.subr.mxu0 0.0
      %1721 = vmatpush1.msra.mxu0 0.0
      %1722 = vmatprep.subr.mxu0 0.0
      %1723 = vmatpush1.msra.mxu0 0.0
      %1724 = vmatprep.subr.mxu0 0.0
      %1725 = vmatpush1.msra.mxu0 0.0
      %1726 = vmatprep.subr.mxu0 0.0
      %1727 = vmatpush1.msra.mxu0 0.0
      %1728 = vmatprep.subr.mxu0 0.0
      %1729 = vmatpush1.msra.mxu0 0.0
      %1730 = vmatprep.subr.mxu0 0.0
      %1731 = vmatpush1.msra.mxu0 0.0
      %1732 = vmatprep.subr.mxu0 0.0
      %1733 = vmatpush1.msra.mxu0 0.0
      %1734 = vmatprep.subr.mxu0 0.0
      %1735 = vmatpush1.msra.mxu0 0.0
      %1736 = vmatprep.subr.mxu0 0.0
      %1737 = vmatpush1.msra.mxu0 0.0
      %1738 = vmatprep.subr.mxu0 0.0
      %1739 = vmatpush1.msra.mxu0 0.0
      %1740 = vmatprep.subr.mxu0 0.0
      %1741 = vmatpush1.msra.mxu0 0.0
      %1742 = vmatprep.subr.mxu0 0.0
      %1743 = vmatpush1.msra.mxu0 0.0
      %1744 = vmatprep.subr.mxu0 0.0
      %1745 = vmatpush1.msra.mxu0 0.0
      %1746 = vmatprep.subr.mxu0 0.0
      %1747 = vmatpush1.msra.mxu0 0.0
      %1748 = vmatprep.mubr.f32.mxu0 0.0
      %1749 = vmatmul.mubr.f32.gmra.mrb[0].mxu0 %v1602
      %v1750 = vpop.f32.mrb[0].mxu0
      %v1751 = vadd.f32 0.0, %v1750
      %v1752 = vpop.f32.mrb[0].mxu0
      %v1753 = vadd.f32 0.0, %v1752
      %1754 = vdwg.mxu0
      %v1755 = vadd.f32 %v1609, %v1680
      %v1756 = vadd.f32 %v1610, %v1682
      %v1757 = vadd.f32 %v1611, %v1751
      %v1758 = vadd.f32 %v1612, %v1753
      %v1759 = vxor.u32 %v1755, 2147483648
      %v1760 = vmul.f32 %v1759, 1.442695
      %v1761 = vpow.pop %v1760
      %v1762 = vadd.f32 %v1761, 1.0
      %v1763 = vrcp.pop %v1762
      %v1764 = vmul.f32 1.0, %v1763
      %v1765 = vxor.u32 %v1756, 2147483648
      %v1766 = vmul.f32 %v1765, 1.442695
      %v1767 = vpow.pop %v1766
      %v1768 = vadd.f32 %v1767, 1.0
      %v1769 = vrcp.pop %v1768
      %v1770 = vmul.f32 1.0, %v1769
      %v1771 = vtanh.pop %v1757
      %v1772 = vxor.u32 %v1758, 2147483648
      %v1773 = vmul.f32 %v1772, 1.442695
      %v1774 = vpow.pop %v1773
      %v1775 = vadd.f32 %v1774, 1.0
      %v1776 = vrcp.pop %v1775
      %v1777 = vmul.f32 1.0, %v1776
      %v1778 = vmul.f32 %v1770, %v1600
      %v1779 = vmul.f32 %v1764, %v1771
      %v1780 = vadd.f32 %v1778, %v1779
      %v1781 = vtanh.pop %v1780
      %v1782 = vmul.f32 %v1777, %v1781
      %v1783 = vpack.c.bf16 %v1782, %v1782
      %s1784 = scalar_lea.vmem %s238, 28
      %1785 = vst [vmem:[%s1784] sm:$0xf] %v1783
      %1786 = vst [vmem:[#allocation2] sm:$0xff] %v1782
      %1787 = vst [vmem:[#allocation3] sm:$0xff] %v1780
      // Predicated region
      $region33: #{rnn_model_forward.3} parent=27 // pred_check
        %p1788 = pneg %p244
      $region34: #{rnn_model_forward.3} parent=27 // pred_check_branch
        %1790 = sbr.rel (%p1788) target = $region36
      $region35: #{rnn_model_forward.3} parent=27 // pred_region
        %1791 = vst [vmem:[%s243] sm:$0xff] %v1782
      $region36: #{rnn_model_forward.3} parent=27 // pred_fallthru
        _
      %s1792 = smul.u32 8, %s20
      %p1793 = scmp.lt.s32.totalorder %s19, 1
      %s1794 = scalar_select %p1793, %s19, 1
      %p1795 = scmp.lt.s32.totalorder %s1792, 7
      %s1796 = scalar_select %p1795, %s1792, 7
      %s1797 = smul.addr %s1794, 8
      %s1798 = sadd.s32 %s1796, %s1797
      %s1799 = smul.addr %s1798, 4
      %s1800 = scalar_lea.vmem %s2, %s1799
      %p1801 = scmp.lt.s32.totalorder %s19, 1
      %s1802 = scalar_select %p1801, %s19, 1
      %s1803 = smul.addr %s1802, 8
      %s1804 = scalar_lea.vmem %s3, %s1803
      // Predicated region
      $region37: #{rnn_model_forward.3} parent=27 // pred_check
        %p1805 = pneg %p101
      $region38: #{rnn_model_forward.3} parent=27 // pred_check_branch
        %1807 = sbr.rel (%p1805) target = $region40
      $region39: #{rnn_model_forward.3} parent=27 // pred_region
        %s1808 = smul.u32 8, %s20
      $region40: #{rnn_model_forward.3} parent=27 // pred_fallthru
        _
      // Predicated region
      $region41: #{rnn_model_forward.3} parent=27 // pred_check
        %p1809 = pneg %p127
      $region42: #{rnn_model_forward.3} parent=27 // pred_check_branch
        %1811 = sbr.rel (%p1809) target = $region44
      $region43: #{rnn_model_forward.3} parent=27 // pred_region
        _
      $region44: #{rnn_model_forward.3} parent=27 // pred_fallthru
        _
    $region28: #{rnn_model_forward.3} parent=5 // pred_fallthru
      _
    %p1812 = scmp.le.s32.totalorder 2, %s10
    // Predicated region
    $region45: #{rnn_model_forward.3} parent=5 // pred_check
      %p1813 = pneg %p1812
    $region46: #{rnn_model_forward.3} parent=5 // pred_check_branch
      %1815 = sbr.rel (%p1813) target = $region48
    $region47: #{rnn_model_forward.3} parent=5 // pred_region
      %s1816 = ssub.s32 %s10, 2
      // Predicated region
      $region49: #{rnn_model_forward.3} parent=47 // pred_check
        %p1817 = pneg %p107
      $region50: #{rnn_model_forward.3} parent=47 // pred_check_branch
        %1819 = sbr.rel (%p1817) target = $region52
      $region51: #{rnn_model_forward.3} parent=47 // pred_region
        %s1820 = smul.u32 8, %s22
        %p1821 = scmp.lt.s32.totalorder %s21, 1
        %s1822 = scalar_select %p1821, %s21, 1
        %p1823 = scmp.lt.s32.totalorder %s1820, 7
        %s1824 = scalar_select %p1823, %s1820, 7
        %s1825 = smul.addr %s1822, 8
        %s1826 = sadd.s32 %s1824, %s1825
        %s1827 = smul.addr %s1826, 4
        %s1828 = scalar_lea.vmem %s2, %s1827
      $region52: #{rnn_model_forward.3} parent=47 // pred_fallthru
        _
      // Predicated region
      $region53: #{rnn_model_forward.3} parent=47 // pred_check
        %p1829 = pneg %p133
      $region54: #{rnn_model_forward.3} parent=47 // pred_check_branch
        %1831 = sbr.rel (%p1829) target = $region56
      $region55: #{rnn_model_forward.3} parent=47 // pred_region
        %p1832 = scmp.lt.s32.totalorder %s21, 1
        %s1833 = scalar_select %p1832, %s21, 1
        %s1834 = smul.addr %s1833, 8
        %s1835 = scalar_lea.vmem %s3, %s1834
      $region56: #{rnn_model_forward.3} parent=47 // pred_fallthru
        _
    $region48: #{rnn_model_forward.3} parent=5 // pred_fallthru
      _
  $region6: #{rnn_model_forward.3} parent=0 // loop_footer
    %s14 = sadd.s32 1, %s10
  $region7: #{rnn_model_forward.3} parent=0 // loop_footer_branch
    %9 = sbr.rel target = $region3
  $region8: #{rnn_model_forward.3} parent=0 // loop_exit
    _

// kernel: rnn_model_forward.4
$region0: #{rnn_model_forward.4}
  #allocation0 [shape = 'u32[]', space=smem, size = 0x4, offset = 0x4, fixed_abs, tag = 'smem constant byte address 0x4 - core index']
  #allocation1 [shape = 'u32[144,128]{1,0:T(1,128)}', space=vmem, size = 0x12000, scoped, tag = 'internal scratch']
  #allocation2 [shape = 'f32[8,128]{1,0:T(8,128)}', space=vmem, size = 0x1000, scoped, tag = 'scratch operand']
  #allocation3 [shape = 'f32[8,128]{1,0:T(8,128)}', space=vmem, size = 0x1000, scoped, tag = 'scratch operand']
  %s0 = inlined_call_operand.vmem [shape: bf16[2,8,8,512], index: 0, kind: input, shape index: {}]
  %s1 = inlined_call_operand.vmem [shape: bf16[2,128,512], index: 1, kind: input, shape index: {}]
  %s2 = inlined_call_operand.hbm [shape: bf16[2,8,8,128], index: 2, kind: output, shape index: {0}]
  %s3 = inlined_call_operand.vmem [shape: f32[2,8,128], index: 3, kind: output, shape index: {1}]
  %4 = xla_tuple %s2, %s3
  %s5 = sld [smem:[#allocation0]]
  $region57: #{rnn_model_forward.4} parent=0
    _
  %s7 = ssub.s32 1, %s5
  %s8 = scalar_select 0, %s7, %s5
  $region1: #{rnn_model_forward.4} parent=0
    #allocation4 [shape = 'u8[32768]{0}', space=vmem, size = 0x8000, scoped, tag = 'output window, operand 0']
    #allocation5 [shape = 's32[2]{0}', space=sflag, size = 0x8, scoped, tag = 'scoped memory for rnn_model_forward.4']
    %9 = vsyncpa [#allocation5], 0
    %s10 = scalar_lea.sflag [#allocation5], 1
    %11 = vsyncpa %s10, 0
    loop: start=0, step=1, limit=4
    $region2: #{rnn_model_forward.4} parent=1 // loop_pre_header
      _
    $region3: #{rnn_model_forward.4} parent=1 // loop_header
      %s13 = sphi 0, %s17
      %p14 = scmp.ge.s32.totalorder %s13, 4
      %s20 = sphi 0, %s32
      %s21 = sphi 0, %s28
      %s22 = sphi 0, %s20
      %s23 = sphi 0, %s21
      %s24 = sphi 0, %s22
      %s25 = sphi 0, %s23
      %s37 = sphi 0, %s39
      %s40 = sphi 0, %s37
      %s41 = sphi 0, %s40
      %s57 = sphi 0, %s41
      %s63 = sphi 0, %s65
      %s66 = sphi 0, %s63
      %s67 = sphi 0, %s66
      %s83 = sphi 0, %s67
      %s91 = sphi 0, %s93
      %s94 = sphi 0, %s91
      %s95 = sphi 0, %s94
      %s111 = sphi 0, %s95
      %s117 = sphi 0, %s119
      %s120 = sphi 0, %s117
      %s121 = sphi 0, %s120
      %s137 = sphi 0, %s121
    $region4: #{rnn_model_forward.4} parent=1 // loop_header_branch
      %16 = sbr.rel (%p14) target = $region8
    $region5: #{rnn_model_forward.4} parent=1 // loop_body
      %s18 = ssub.s32 %s13, 1
      %s19 = ssub.s32 %s13, 2
      %s26 = sadd.s32 1, %s21
      %p27 = scmp.ge.s32.totalorder %s26, 1
      %s28 = scalar_select %p27, 0, %s26
      %s29 = sadd.s32 1, %s20
      %s30 = scalar_select %p27, %s29, %s20
      %p31 = scmp.ge.s32.totalorder %s30, 2
      %s32 = scalar_select %p31, 0, %s30
      %s33 = ssub.s32 %s20, %s32
      %s34 = ssub.s32 %s21, %s28
      %s35 = sor.u32 %s33, %s34
      %p36 = scmp.eq.s32.totalorder %s35, 0
      %s38 = sadd.s32 %s37, 1
      %s39 = scalar_select %p36, %s37, %s38
      %p42 = pneg %p36
      %p43 = scmp.eq.s32.totalorder %s13, 1
      %p44 = por %p42, %p43
      %p45 = scmp.ne.s32.totalorder %s37, %s40
      %p46 = scmp.eq.s32.totalorder %s13, 0
      %p47 = por %p45, %p46
      %p48 = scmp.ne.s32.totalorder %s37, %s40
      %p49 = scmp.eq.s32.totalorder %s18, 1
      %p50 = por %p48, %p49
      %p51 = scmp.ne.s32.totalorder %s40, %s41
      %p52 = scmp.eq.s32.totalorder %s18, 0
      %p53 = por %p51, %p52
      %p54 = scmp.ne.s32.totalorder %s40, %s41
      %p55 = scmp.eq.s32.totalorder %s19, 1
      %p56 = por %p54, %p55
      %p58 = scmp.ne.s32.totalorder %s41, %s57
      %p59 = scmp.eq.s32.totalorder %s19, 0
      %p60 = por %p58, %p59
      %s61 = ssub.s32 %s20, %s32
      %p62 = scmp.eq.s32.totalorder %s61, 0
      %s64 = sadd.s32 %s63, 1
      %s65 = scalar_select %p62, %s63, %s64
      %p68 = pneg %p62
      %p69 = scmp.eq.s32.totalorder %s13, 1
      %p70 = por %p68, %p69
      %p71 = scmp.ne.s32.totalorder %s63, %s66
      %p72 = scmp.eq.s32.totalorder %s13, 0
      %p73 = por %p71, %p72
      %p74 = scmp.ne.s32.totalorder %s63, %s66
      %p75 = scmp.eq.s32.totalorder %s18, 1
      %p76 = por %p74, %p75
      %p77 = scmp.ne.s32.totalorder %s66, %s67
      %p78 = scmp.eq.s32.totalorder %s18, 0
      %p79 = por %p77, %p78
      %p80 = scmp.ne.s32.totalorder %s66, %s67
      %p81 = scmp.eq.s32.totalorder %s19, 1
      %p82 = por %p80, %p81
      %p84 = scmp.ne.s32.totalorder %s67, %s83
      %p85 = scmp.eq.s32.totalorder %s19, 0
      %p86 = por %p84, %p85
      %s87 = ssub.s32 %s20, %s32
      %s88 = ssub.s32 %s21, %s28
      %s89 = sor.u32 %s87, %s88
      %p90 = scmp.eq.s32.totalorder %s89, 0
      %s92 = sadd.s32 %s91, 1
      %s93 = scalar_select %p90, %s91, %s92
      %p96 = pneg %p90
      %p97 = scmp.eq.s32.totalorder %s13, 1
      %p98 = por %p96, %p97
      %p99 = scmp.ne.s32.totalorder %s91, %s94
      %p100 = scmp.eq.s32.totalorder %s13, 0
      %p101 = por %p99, %p100
      %p102 = scmp.ne.s32.totalorder %s91, %s94
      %p103 = scmp.eq.s32.totalorder %s18, 1
      %p104 = por %p102, %p103
      %p105 = scmp.ne.s32.totalorder %s94, %s95
      %p106 = scmp.eq.s32.totalorder %s18, 0
      %p107 = por %p105, %p106
      %p108 = scmp.ne.s32.totalorder %s94, %s95
      %p109 = scmp.eq.s32.totalorder %s19, 1
      %p110 = por %p108, %p109
      %p112 = scmp.ne.s32.totalorder %s95, %s111
      %p113 = scmp.eq.s32.totalorder %s19, 0
      %p114 = por %p112, %p113
      %s115 = ssub.s32 %s20, %s32
      %p116 = scmp.eq.s32.totalorder %s115, 0
      %s118 = sadd.s32 %s117, 1
      %s119 = scalar_select %p116, %s117, %s118
      %p122 = pneg %p116
      %p123 = scmp.eq.s32.totalorder %s13, 1
      %p124 = por %p122, %p123
      %p125 = scmp.ne.s32.totalorder %s117, %s120
      %p126 = scmp.eq.s32.totalorder %s13, 0
      %p127 = por %p125, %p126
      %p128 = scmp.ne.s32.totalorder %s117, %s120
      %p129 = scmp.eq.s32.totalorder %s18, 1
      %p130 = por %p128, %p129
      %p131 = scmp.ne.s32.totalorder %s120, %s121
      %p132 = scmp.eq.s32.totalorder %s18, 0
      %p133 = por %p131, %p132
      %p134 = scmp.ne.s32.totalorder %s120, %s121
      %p135 = scmp.eq.s32.totalorder %s19, 1
      %p136 = por %p134, %p135
      %p138 = scmp.ne.s32.totalorder %s121, %s137
      %p139 = scmp.eq.s32.totalorder %s19, 0
      %p140 = por %p138, %p139
      %p141 = scmp.le.s32.totalorder 1, %s13
      %p142 = scmp.lt.s32.totalorder %s13, 3
      %p143 = pnand %p141, %p142
      %p144 = pneg %p143
      // Predicated region
      $region9: #{rnn_model_forward.4} parent=5 // pred_check
        _
      $region10: #{rnn_model_forward.4} parent=5 // pred_check_branch
        %146 = sbr.rel (%p143) target = $region12
      $region11: #{rnn_model_forward.4} parent=5 // pred_region
        %s147 = ssub.s32 %s13, 1
      $region12: #{rnn_model_forward.4} parent=5 // pred_fallthru
        _
      %p148 = scmp.lt.s32.totalorder %s13, 2
      // Predicated region
      $region13: #{rnn_model_forward.4} parent=5 // pred_check
        %p149 = pneg %p148
      $region14: #{rnn_model_forward.4} parent=5 // pred_check_branch
        %151 = sbr.rel (%p149) target = $region16
      $region15: #{rnn_model_forward.4} parent=5 // pred_region
        // Predicated region
        $region17: #{rnn_model_forward.4} parent=15 // pred_check
          %p152 = pneg %p47
        $region18: #{rnn_model_forward.4} parent=15 // pred_check_branch
          %154 = sbr.rel (%p152) target = $region20
        $region19: #{rnn_model_forward.4} parent=15 // pred_region
          %s155 = smul.u32 8, %s21
          %p156 = scmp.lt.s32.totalorder %s20, 1
          %s157 = scalar_select %p156, %s20, 1
          %p158 = scmp.lt.s32.totalorder %s155, 7
          %s159 = scalar_select %p158, %s155, 7
          %s160 = smul.addr %s159, 4
          %s161 = smul.addr %s157, 32
          %s162 = sadd.s32 %s160, %s161
          %s163 = smul.addr %s162, 4
          %s164 = scalar_lea.vmem %s0, %s163
          %s165 = smul.u32 8, %s21
        $region20: #{rnn_model_forward.4} parent=15 // pred_fallthru
          _
        // Predicated region
        $region21: #{rnn_model_forward.4} parent=15 // pred_check
          %p166 = pneg %p73
        $region22: #{rnn_model_forward.4} parent=15 // pred_check_branch
          %168 = sbr.rel (%p166) target = $region24
        $region23: #{rnn_model_forward.4} parent=15 // pred_region
          %p169 = scmp.lt.s32.totalorder %s20, 1
          %s170 = scalar_select %p169, %s20, 1
          %s171 = smul.addr %s170, 64
          %s172 = smul.addr %s171, 4
          %s173 = scalar_lea.vmem %s1, %s172
        $region24: #{rnn_model_forward.4} parent=15 // pred_fallthru
          _
      $region16: #{rnn_model_forward.4} parent=5 // pred_fallthru
        _
      %p174 = scmp.le.s32.totalorder 1, %s13
      %p175 = scmp.lt.s32.totalorder %s13, 3
      %p176 = pnand %p174, %p175
      %p177 = pneg %p176
      // Predicated region
      $region25: #{rnn_model_forward.4} parent=5 // pred_check
        _
      $region26: #{rnn_model_forward.4} parent=5 // pred_check_branch
        %179 = sbr.rel (%p176) target = $region28
      $region27: #{rnn_model_forward.4} parent=5 // pred_region
        %s180 = ssub.s32 %s13, 1
        %s181 = smul.u32 8, %s23
        %p182 = scmp.lt.s32.totalorder %s22, 1
        %s183 = scalar_select %p182, %s22, 1
        %p184 = scmp.lt.s32.totalorder %s181, 7
        %s185 = scalar_select %p184, %s181, 7
        %s186 = smul.addr %s185, 4
        %s187 = smul.addr %s183, 32
        %s188 = sadd.s32 %s186, %s187
        %s189 = smul.addr %s188, 4
        %s190 = scalar_lea.vmem %s0, %s189
        %p191 = pneg %p53
        %p192 = pneg %p50
        %p193 = scmp.lt.s32.totalorder %s22, 1
        %s194 = scalar_select %p193, %s22, 1
        %s195 = smul.addr %s194, 64
        %s196 = smul.addr %s195, 4
        %s197 = scalar_lea.vmem %s1, %s196
        %p198 = pneg %p79
        %p199 = pneg %p76
        %p200 = pneg %p107
        %p201 = pneg %p104
        %s202 = sand.u32 %s94, 1
        %s203 = scalar_lea.sflag [#allocation5], %s202
        %s204 = sand.u32 %s94, 1
        %s205 = smul.addr %s204, 32
        %s206 = scalar_lea.vmem [#allocation4], %s205
        %p207 = pneg %p133
        %p208 = pneg %p130
        %p209 = scmp.lt.s32.totalorder %s22, 1
        %s210 = scalar_select %p209, %s22, 1
        %s211 = smul.addr %s210, 8
        %s212 = scalar_lea.vmem %s3, %s211
        %s213 = smul.u32 8, %s23
        %p214 = scmp.lt.s32.totalorder %s22, 1
        %s215 = scalar_select %p214, %s22, 1
        %p216 = scmp.lt.s32.totalorder %s213, 7
        %s217 = scalar_select %p216, %s213, 7
        %s218 = smul.addr %s217, 4
        %s219 = smul.addr %s215, 32
        %s220 = sadd.s32 %s218, %s219
        %s221 = smul.addr %s220, 4
        %s222 = scalar_lea.vmem %s0, %s221
        %s223 = smul.u32 8, %s23
        %p224 = scmp.lt.s32.totalorder %s22, 1
        %s225 = scalar_select %p224, %s22, 1
        %s226 = smul.addr %s225, 64
        %s227 = smul.addr %s226, 4
        %s228 = scalar_lea.vmem %s1, %s227
        %s229 = smul.u32 8, %s23
        %p230 = scmp.lt.s32.totalorder %s22, 1
        %s231 = scalar_select %p230, %s22, 1
        %s232 = smul.addr %s231, 8
        %s233 = scalar_lea.vmem %s3, %s232
        %p234 = scmp.eq.s32.totalorder %s23, 0
        // Predicated region
        $region29: #{rnn_model_forward.4} parent=27 // pred_check
          %p235 = pneg %p234
        $region30: #{rnn_model_forward.4} parent=27 // pred_check_branch
          %237 = sbr.rel (%p235) target = $region32
        $region31: #{rnn_model_forward.4} parent=27 // pred_region
          %238 = vst [vmem:[#allocation2] sm:$0xff] 0.0
          %239 = vst [vmem:[#allocation3] sm:$0xff] 0.0
        $region32: #{rnn_model_forward.4} parent=27 // pred_fallthru
          _
        %v240 = vld [vmem:[%s228] sm:$0xff]
        %v241 = vld [vmem:[%s228 + $0x8] sm:$0xff]
        %v242 = vld [vmem:[%s228 + $0x10] sm:$0xff]
        %v243 = vld [vmem:[%s228 + $0x18] sm:$0xff]
        %v244 = vld [vmem:[%s228 + $0x20] sm:$0xff]
        %v245 = vld [vmem:[%s228 + $0x28] sm:$0xff]
        %v246 = vld [vmem:[%s228 + $0x30] sm:$0xff]
        %v247 = vld [vmem:[%s228 + $0x38] sm:$0xff]
        %v248 = vld [vmem:[%s228 + $0x40] sm:$0xff]
        %v249 = vld [vmem:[%s228 + $0x48] sm:$0xff]
        %v250 = vld [vmem:[%s228 + $0x50] sm:$0xff]
        %v251 = vld [vmem:[%s228 + $0x58] sm:$0xff]
        %v252 = vld [vmem:[%s228 + $0x60] sm:$0xff]
        %v253 = vld [vmem:[%s228 + $0x68] sm:$0xff]
        %v254 = vld [vmem:[%s228 + $0x70] sm:$0xff]
        %v255 = vld [vmem:[%s228 + $0x78] sm:$0xff]
        %v256 = vld [vmem:[%s228 + $0x80] sm:$0xff]
        %v257 = vld [vmem:[%s228 + $0x88] sm:$0xff]
        %v258 = vld [vmem:[%s228 + $0x90] sm:$0xff]
        %v259 = vld [vmem:[%s228 + $0x98] sm:$0xff]
        %v260 = vld [vmem:[%s228 + $0xa0] sm:$0xff]
        %v261 = vld [vmem:[%s228 + $0xa8] sm:$0xff]
        %v262 = vld [vmem:[%s228 + $0xb0] sm:$0xff]
        %v263 = vld [vmem:[%s228 + $0xb8] sm:$0xff]
        %v264 = vld [vmem:[%s228 + $0xc0] sm:$0xff]
        %v265 = vld [vmem:[%s228 + $0xc8] sm:$0xff]
        %v266 = vld [vmem:[%s228 + $0xd0] sm:$0xff]
        %v267 = vld [vmem:[%s228 + $0xd8] sm:$0xff]
        %v268 = vld [vmem:[%s228 + $0xe0] sm:$0xff]
        %v269 = vld [vmem:[%s228 + $0xe8] sm:$0xff]
        %v270 = vld [vmem:[%s228 + $0xf0] sm:$0xff]
        %v271 = vld [vmem:[%s228 + $0xf8] sm:$0xff]
        %v272 = vunpack.c.l.bf16 %v240
        %v273 = vunpack.c.h.bf16 %v240
        %v274 = vunpack.c.l.bf16 %v241
        %v275 = vunpack.c.h.bf16 %v241
        %v276 = vunpack.c.l.bf16 %v242
        %v277 = vunpack.c.h.bf16 %v242
        %v278 = vunpack.c.l.bf16 %v243
        %v279 = vunpack.c.h.bf16 %v243
        %v280 = vunpack.c.l.bf16 %v244
        %v281 = vunpack.c.h.bf16 %v244
        %v282 = vunpack.c.l.bf16 %v245
        %v283 = vunpack.c.h.bf16 %v245
        %v284 = vunpack.c.l.bf16 %v246
        %v285 = vunpack.c.h.bf16 %v246
        %v286 = vunpack.c.l.bf16 %v247
        %v287 = vunpack.c.h.bf16 %v247
        %v288 = vunpack.c.l.bf16 %v248
        %v289 = vunpack.c.h.bf16 %v248
        %v290 = vunpack.c.l.bf16 %v249
        %v291 = vunpack.c.h.bf16 %v249
        %v292 = vunpack.c.l.bf16 %v250
        %v293 = vunpack.c.h.bf16 %v250
        %v294 = vunpack.c.l.bf16 %v251
        %v295 = vunpack.c.h.bf16 %v251
        %v296 = vunpack.c.l.bf16 %v252
        %v297 = vunpack.c.h.bf16 %v252
        %v298 = vunpack.c.l.bf16 %v253
        %v299 = vunpack.c.h.bf16 %v253
        %v300 = vunpack.c.l.bf16 %v254
        %v301 = vunpack.c.h.bf16 %v254
        %v302 = vunpack.c.l.bf16 %v255
        %v303 = vunpack.c.h.bf16 %v255
        %v304 = vunpack.c.l.bf16 %v256
        %v305 = vunpack.c.h.bf16 %v256
        %v306 = vunpack.c.l.bf16 %v257
        %v307 = vunpack.c.h.bf16 %v257
        %v308 = vunpack.c.l.bf16 %v258
        %v309 = vunpack.c.h.bf16 %v258
        %v310 = vunpack.c.l.bf16 %v259
        %v311 = vunpack.c.h.bf16 %v259
        %v312 = vunpack.c.l.bf16 %v260
        %v313 = vunpack.c.h.bf16 %v260
        %v314 = vunpack.c.l.bf16 %v261
        %v315 = vunpack.c.h.bf16 %v261
        %v316 = vunpack.c.l.bf16 %v262
        %v317 = vunpack.c.h.bf16 %v262
        %v318 = vunpack.c.l.bf16 %v263
        %v319 = vunpack.c.h.bf16 %v263
        %v320 = vunpack.c.l.bf16 %v264
        %v321 = vunpack.c.h.bf16 %v264
        %v322 = vunpack.c.l.bf16 %v265
        %v323 = vunpack.c.h.bf16 %v265
        %v324 = vunpack.c.l.bf16 %v266
        %v325 = vunpack.c.h.bf16 %v266
        %v326 = vunpack.c.l.bf16 %v267
        %v327 = vunpack.c.h.bf16 %v267
        %v328 = vunpack.c.l.bf16 %v268
        %v329 = vunpack.c.h.bf16 %v268
        %v330 = vunpack.c.l.bf16 %v269
        %v331 = vunpack.c.h.bf16 %v269
        %v332 = vunpack.c.l.bf16 %v270
        %v333 = vunpack.c.h.bf16 %v270
        %v334 = vunpack.c.l.bf16 %v271
        %v335 = vunpack.c.h.bf16 %v271
        %v336 = vld [vmem:[#allocation2] sm:$0xff]
        %v337 = vld [vmem:[#allocation3] sm:$0xff]
        %v338 = vld [vmem:[%s222] sm:$0xff]
        %v339 = vld [vmem:[%s222 + $0x8] sm:$0xff]
        %v340 = vunpack.c.l.bf16 %v338
        %v341 = vunpack.c.h.bf16 %v338
        %v342 = vunpack.c.l.bf16 %v339
        %v343 = vunpack.c.h.bf16 %v339
        %344 = vmatprep.subr.mxu0 %v273
        %345 = vmatpush1.msra.mxu0 %v272
        %346 = vmatprep.subr.mxu0 %v277
        %347 = vmatpush1.msra.mxu0 %v276
        %348 = vmatprep.subr.mxu0 %v281
        %349 = vmatpush1.msra.mxu0 %v280
        %350 = vmatprep.subr.mxu0 %v285
        %351 = vmatpush1.msra.mxu0 %v284
        %352 = vmatprep.subr.mxu0 %v289
        %353 = vmatpush1.msra.mxu0 %v288
        %354 = vmatprep.subr.mxu0 %v293
        %355 = vmatpush1.msra.mxu0 %v292
        %356 = vmatprep.subr.mxu0 %v297
        %357 = vmatpush1.msra.mxu0 %v296
        %358 = vmatprep.subr.mxu0 %v301
        %359 = vmatpush1.msra.mxu0 %v300
        %360 = vmatprep.subr.mxu0 %v305
        %361 = vmatpush1.msra.mxu0 %v304
        %362 = vmatprep.subr.mxu0 %v309
        %363 = vmatpush1.msra.mxu0 %v308
        %364 = vmatprep.subr.mxu0 %v313
        %365 = vmatpush1.msra.mxu0 %v312
        %366 = vmatprep.subr.mxu0 %v317
        %367 = vmatpush1.msra.mxu0 %v316
        %368 = vmatprep.subr.mxu0 %v321
        %369 = vmatpush1.msra.mxu0 %v320
        %370 = vmatprep.subr.mxu0 %v325
        %371 = vmatpush1.msra.mxu0 %v324
        %372 = vmatprep.subr.mxu0 %v329
        %373 = vmatpush1.msra.mxu0 %v328
        %374 = vmatprep.subr.mxu0 %v333
        %375 = vmatpush1.msra.mxu0 %v332
        %376 = vmatprep.subr.mxu0 0.0
        %377 = vmatpush1.msra.mxu0 0.0
        %378 = vmatprep.subr.mxu0 0.0
        %379 = vmatpush1.msra.mxu0 0.0
        %380 = vmatprep.subr.mxu0 0.0
        %381 = vmatpush1.msra.mxu0 0.0
        %382 = vmatprep.subr.mxu0 0.0
        %383 = vmatpush1.msra.mxu0 0.0
        %384 = vmatprep.subr.mxu0 0.0
        %385 = vmatpush1.msra.mxu0 0.0
        %386 = vmatprep.subr.mxu0 0.0
        %387 = vmatpush1.msra.mxu0 0.0
        %388 = vmatprep.subr.mxu0 0.0
        %389 = vmatpush1.msra.mxu0 0.0
        %390 = vmatprep.subr.mxu0 0.0
        %391 = vmatpush1.msra.mxu0 0.0
        %392 = vmatprep.subr.mxu0 0.0
        %393 = vmatpush1.msra.mxu0 0.0
        %394 = vmatprep.subr.mxu0 0.0
        %395 = vmatpush1.msra.mxu0 0.0
        %396 = vmatprep.subr.mxu0 0.0
        %397 = vmatpush1.msra.mxu0 0.0
        %398 = vmatprep.subr.mxu0 0.0
        %399 = vmatpush1.msra.mxu0 0.0
        %400 = vmatprep.subr.mxu0 0.0
        %401 = vmatpush1.msra.mxu0 0.0
        %402 = vmatprep.subr.mxu0 0.0
        %403 = vmatpush1.msra.mxu0 0.0
        %404 = vmatprep.subr.mxu0 0.0
        %405 = vmatpush1.msra.mxu0 0.0
        %406 = vmatprep.subr.mxu0 0.0
        %407 = vmatpush1.msra.mxu0 0.0
        %408 = vmatprep.mubr.f32.mxu0 0.0
        %409 = vmatmul.mubr.f32.gmra.mrb[0].mxu0 %v336
        %v410 = vpop.f32.mrb[0].mxu0
        %v411 = vadd.f32 0.0, %v410
        %v412 = vpop.f32.mrb[0].mxu0
        %v413 = vadd.f32 0.0, %v412
        %414 = vdwg.mxu0
        %415 = vmatprep.subr.mxu0 %v275
        %416 = vmatpush1.msra.mxu0 %v274
        %417 = vmatprep.subr.mxu0 %v279
        %418 = vmatpush1.msra.mxu0 %v278
        %419 = vmatprep.subr.mxu0 %v283
        %420 = vmatpush1.msra.mxu0 %v282
        %421 = vmatprep.subr.mxu0 %v287
        %422 = vmatpush1.msra.mxu0 %v286
        %423 = vmatprep.subr.mxu0 %v291
        %424 = vmatpush1.msra.mxu0 %v290
        %425 = vmatprep.subr.mxu0 %v295
        %426 = vmatpush1.msra.mxu0 %v294
        %427 = vmatprep.subr.mxu0 %v299
        %428 = vmatpush1.msra.mxu0 %v298
        %429 = vmatprep.subr.mxu0 %v303
        %430 = vmatpush1.msra.mxu0 %v302
        %431 = vmatprep.subr.mxu0 %v307
        %432 = vmatpush1.msra.mxu0 %v306
        %433 = vmatprep.subr.mxu0 %v311
        %434 = vmatpush1.msra.mxu0 %v310
        %435 = vmatprep.subr.mxu0 %v315
        %436 = vmatpush1.msra.mxu0 %v314
        %437 = vmatprep.subr.mxu0 %v319
        %438 = vmatpush1.msra.mxu0 %v318
        %439 = vmatprep.subr.mxu0 %v323
        %440 = vmatpush1.msra.mxu0 %v322
        %441 = vmatprep.subr.mxu0 %v327
        %442 = vmatpush1.msra.mxu0 %v326
        %443 = vmatprep.subr.mxu0 %v331
        %444 = vmatpush1.msra.mxu0 %v330
        %445 = vmatprep.subr.mxu0 %v335
        %446 = vmatpush1.msra.mxu0 %v334
        %447 = vmatprep.subr.mxu0 0.0
        %448 = vmatpush1.msra.mxu0 0.0
        %449 = vmatprep.subr.mxu0 0.0
        %450 = vmatpush1.msra.mxu0 0.0
        %451 = vmatprep.subr.mxu0 0.0
        %452 = vmatpush1.msra.mxu0 0.0
        %453 = vmatprep.subr.mxu0 0.0
        %454 = vmatpush1.msra.mxu0 0.0
        %455 = vmatprep.subr.mxu0 0.0
        %456 = vmatpush1.msra.mxu0 0.0
        %457 = vmatprep.subr.mxu0 0.0
        %458 = vmatpush1.msra.mxu0 0.0
        %459 = vmatprep.subr.mxu0 0.0
        %460 = vmatpush1.msra.mxu0 0.0
        %461 = vmatprep.subr.mxu0 0.0
        %462 = vmatpush1.msra.mxu0 0.0
        %463 = vmatprep.subr.mxu0 0.0
        %464 = vmatpush1.msra.mxu0 0.0
        %465 = vmatprep.subr.mxu0 0.0
        %466 = vmatpush1.msra.mxu0 0.0
        %467 = vmatprep.subr.mxu0 0.0
        %468 = vmatpush1.msra.mxu0 0.0
        %469 = vmatprep.subr.mxu0 0.0
        %470 = vmatpush1.msra.mxu0 0.0
        %471 = vmatprep.subr.mxu0 0.0
        %472 = vmatpush1.msra.mxu0 0.0
        %473 = vmatprep.subr.mxu0 0.0
        %474 = vmatpush1.msra.mxu0 0.0
        %475 = vmatprep.subr.mxu0 0.0
        %476 = vmatpush1.msra.mxu0 0.0
        %477 = vmatprep.subr.mxu0 0.0
        %478 = vmatpush1.msra.mxu0 0.0
        %479 = vmatprep.mubr.f32.mxu0 0.0
        %480 = vmatmul.mubr.f32.gmra.mrb[0].mxu0 %v336
        %v481 = vpop.f32.mrb[0].mxu0
        %v482 = vadd.f32 0.0, %v481
        %v483 = vpop.f32.mrb[0].mxu0
        %v484 = vadd.f32 0.0, %v483
        %485 = vdwg.mxu0
        %v486 = vadd.f32 %v340, %v411
        %v487 = vadd.f32 %v341, %v413
        %v488 = vadd.f32 %v342, %v482
        %v489 = vadd.f32 %v343, %v484
        %v490 = vxor.u32 %v486, 2147483648
        %v491 = vmul.f32 %v490, 1.442695
        %v492 = vpow.pop %v491
        %v493 = vadd.f32 %v492, 1.0
        %v494 = vrcp.pop %v493
        %v495 = vmul.f32 1.0, %v494
        %v496 = vxor.u32 %v487, 2147483648
        %v497 = vmul.f32 %v496, 1.442695
        %v498 = vpow.pop %v497
        %v499 = vadd.f32 %v498, 1.0
        %v500 = vrcp.pop %v499
        %v501 = vmul.f32 1.0, %v500
        %v502 = vtanh.pop %v488
        %v503 = vxor.u32 %v489, 2147483648
        %v504 = vmul.f32 %v503, 1.442695
        %v505 = vpow.pop %v504
        %v506 = vadd.f32 %v505, 1.0
        %v507 = vrcp.pop %v506
        %v508 = vmul.f32 1.0, %v507
        %v509 = vmul.f32 %v501, %v337
        %v510 = vmul.f32 %v495, %v502
        %v511 = vadd.f32 %v509, %v510
        %v512 = vtanh.pop %v511
        %v513 = vmul.f32 %v508, %v512
        %v514 = vpack.c.bf16 %v513, %v513
        %515 = vst [vmem:[%s206] sm:$0xf] %v514
        %s516 = scalar_lea.vmem %s222, 16
        %v517 = vld [vmem:[%s516] sm:$0xff]
        %v518 = vld [vmem:[%s516 + $0x8] sm:$0xff]
        %v519 = vunpack.c.l.bf16 %v517
        %v520 = vunpack.c.h.bf16 %v517
        %v521 = vunpack.c.l.bf16 %v518
        %v522 = vunpack.c.h.bf16 %v518
        %523 = vmatprep.subr.mxu0 %v273
        %524 = vmatpush1.msra.mxu0 %v272
        %525 = vmatprep.subr.mxu0 %v277
        %526 = vmatpush1.msra.mxu0 %v276
        %527 = vmatprep.subr.mxu0 %v281
        %528 = vmatpush1.msra.mxu0 %v280
        %529 = vmatprep.subr.mxu0 %v285
        %530 = vmatpush1.msra.mxu0 %v284
        %531 = vmatprep.subr.mxu0 %v289
        %532 = vmatpush1.msra.mxu0 %v288
        %533 = vmatprep.subr.mxu0 %v293
        %534 = vmatpush1.msra.mxu0 %v292
        %535 = vmatprep.subr.mxu0 %v297
        %536 = vmatpush1.msra.mxu0 %v296
        %537 = vmatprep.subr.mxu0 %v301
        %538 = vmatpush1.msra.mxu0 %v300
        %539 = vmatprep.subr.mxu0 %v305
        %540 = vmatpush1.msra.mxu0 %v304
        %541 = vmatprep.subr.mxu0 %v309
        %542 = vmatpush1.msra.mxu0 %v308
        %543 = vmatprep.subr.mxu0 %v313
        %544 = vmatpush1.msra.mxu0 %v312
        %545 = vmatprep.subr.mxu0 %v317
        %546 = vmatpush1.msra.mxu0 %v316
        %547 = vmatprep.subr.mxu0 %v321
        %548 = vmatpush1.msra.mxu0 %v320
        %549 = vmatprep.subr.mxu0 %v325
        %550 = vmatpush1.msra.mxu0 %v324
        %551 = vmatprep.subr.mxu0 %v329
        %552 = vmatpush1.msra.mxu0 %v328
        %553 = vmatprep.subr.mxu0 %v333
        %554 = vmatpush1.msra.mxu0 %v332
        %555 = vmatprep.subr.mxu0 0.0
        %556 = vmatpush1.msra.mxu0 0.0
        %557 = vmatprep.subr.mxu0 0.0
        %558 = vmatpush1.msra.mxu0 0.0
        %559 = vmatprep.subr.mxu0 0.0
        %560 = vmatpush1.msra.mxu0 0.0
        %561 = vmatprep.subr.mxu0 0.0
        %562 = vmatpush1.msra.mxu0 0.0
        %563 = vmatprep.subr.mxu0 0.0
        %564 = vmatpush1.msra.mxu0 0.0
        %565 = vmatprep.subr.mxu0 0.0
        %566 = vmatpush1.msra.mxu0 0.0
        %567 = vmatprep.subr.mxu0 0.0
        %568 = vmatpush1.msra.mxu0 0.0
        %569 = vmatprep.subr.mxu0 0.0
        %570 = vmatpush1.msra.mxu0 0.0
        %571 = vmatprep.subr.mxu0 0.0
        %572 = vmatpush1.msra.mxu0 0.0
        %573 = vmatprep.subr.mxu0 0.0
        %574 = vmatpush1.msra.mxu0 0.0
        %575 = vmatprep.subr.mxu0 0.0
        %576 = vmatpush1.msra.mxu0 0.0
        %577 = vmatprep.subr.mxu0 0.0
        %578 = vmatpush1.msra.mxu0 0.0
        %579 = vmatprep.subr.mxu0 0.0
        %580 = vmatpush1.msra.mxu0 0.0
        %581 = vmatprep.subr.mxu0 0.0
        %582 = vmatpush1.msra.mxu0 0.0
        %583 = vmatprep.subr.mxu0 0.0
        %584 = vmatpush1.msra.mxu0 0.0
        %585 = vmatprep.subr.mxu0 0.0
        %586 = vmatpush1.msra.mxu0 0.0
        %587 = vmatprep.mubr.f32.mxu0 0.0
        %588 = vmatmul.mubr.f32.gmra.mrb[0].mxu0 %v513
        %v589 = vpop.f32.mrb[0].mxu0
        %v590 = vadd.f32 0.0, %v589
        %v591 = vpop.f32.mrb[0].mxu0
        %v592 = vadd.f32 0.0, %v591
        %593 = vdwg.mxu0
        %594 = vmatprep.subr.mxu0 %v275
        %595 = vmatpush1.msra.mxu0 %v274
        %596 = vmatprep.subr.mxu0 %v279
        %597 = vmatpush1.msra.mxu0 %v278
        %598 = vmatprep.subr.mxu0 %v283
        %599 = vmatpush1.msra.mxu0 %v282
        %600 = vmatprep.subr.mxu0 %v287
        %601 = vmatpush1.msra.mxu0 %v286
        %602 = vmatprep.subr.mxu0 %v291
        %603 = vmatpush1.msra.mxu0 %v290
        %604 = vmatprep.subr.mxu0 %v295
        %605 = vmatpush1.msra.mxu0 %v294
        %606 = vmatprep.subr.mxu0 %v299
        %607 = vmatpush1.msra.mxu0 %v298
        %608 = vmatprep.subr.mxu0 %v303
        %609 = vmatpush1.msra.mxu0 %v302
        %610 = vmatprep.subr.mxu0 %v307
        %611 = vmatpush1.msra.mxu0 %v306
        %612 = vmatprep.subr.mxu0 %v311
        %613 = vmatpush1.msra.mxu0 %v310
        %614 = vmatprep.subr.mxu0 %v315
        %615 = vmatpush1.msra.mxu0 %v314
        %616 = vmatprep.subr.mxu0 %v319
        %617 = vmatpush1.msra.mxu0 %v318
        %618 = vmatprep.subr.mxu0 %v323
        %619 = vmatpush1.msra.mxu0 %v322
        %620 = vmatprep.subr.mxu0 %v327
        %621 = vmatpush1.msra.mxu0 %v326
        %622 = vmatprep.subr.mxu0 %v331
        %623 = vmatpush1.msra.mxu0 %v330
        %624 = vmatprep.subr.mxu0 %v335
        %625 = vmatpush1.msra.mxu0 %v334
        %626 = vmatprep.subr.mxu0 0.0
        %627 = vmatpush1.msra.mxu0 0.0
        %628 = vmatprep.subr.mxu0 0.0
        %629 = vmatpush1.msra.mxu0 0.0
        %630 = vmatprep.subr.mxu0 0.0
        %631 = vmatpush1.msra.mxu0 0.0
        %632 = vmatprep.subr.mxu0 0.0
        %633 = vmatpush1.msra.mxu0 0.0
        %634 = vmatprep.subr.mxu0 0.0
        %635 = vmatpush1.msra.mxu0 0.0
        %636 = vmatprep.subr.mxu0 0.0
        %637 = vmatpush1.msra.mxu0 0.0
        %638 = vmatprep.subr.mxu0 0.0
        %639 = vmatpush1.msra.mxu0 0.0
        %640 = vmatprep.subr.mxu0 0.0
        %641 = vmatpush1.msra.mxu0 0.0
        %642 = vmatprep.subr.mxu0 0.0
        %643 = vmatpush1.msra.mxu0 0.0
        %644 = vmatprep.subr.mxu0 0.0
        %645 = vmatpush1.msra.mxu0 0.0
        %646 = vmatprep.subr.mxu0 0.0
        %647 = vmatpush1.msra.mxu0 0.0
        %648 = vmatprep.subr.mxu0 0.0
        %649 = vmatpush1.msra.mxu0 0.0
        %650 = vmatprep.subr.mxu0 0.0
        %651 = vmatpush1.msra.mxu0 0.0
        %652 = vmatprep.subr.mxu0 0.0
        %653 = vmatpush1.msra.mxu0 0.0
        %654 = vmatprep.subr.mxu0 0.0
        %655 = vmatpush1.msra.mxu0 0.0
        %656 = vmatprep.subr.mxu0 0.0
        %657 = vmatpush1.msra.mxu0 0.0
        %658 = vmatprep.mubr.f32.mxu0 0.0
        %659 = vmatmul.mubr.f32.gmra.mrb[0].mxu0 %v513
        %v660 = vpop.f32.mrb[0].mxu0
        %v661 = vadd.f32 0.0, %v660
        %v662 = vpop.f32.mrb[0].mxu0
        %v663 = vadd.f32 0.0, %v662
        %664 = vdwg.mxu0
        %v665 = vadd.f32 %v519, %v590
        %v666 = vadd.f32 %v520, %v592
        %v667 = vadd.f32 %v521, %v661
        %v668 = vadd.f32 %v522, %v663
        %v669 = vxor.u32 %v665, 2147483648
        %v670 = vmul.f32 %v669, 1.442695
        %v671 = vpow.pop %v670
        %v672 = vadd.f32 %v671, 1.0
        %v673 = vrcp.pop %v672
        %v674 = vmul.f32 1.0, %v673
        %v675 = vxor.u32 %v666, 2147483648
        %v676 = vmul.f32 %v675, 1.442695
        %v677 = vpow.pop %v676
        %v678 = vadd.f32 %v677, 1.0
        %v679 = vrcp.pop %v678
        %v680 = vmul.f32 1.0, %v679
        %v681 = vtanh.pop %v667
        %v682 = vxor.u32 %v668, 2147483648
        %v683 = vmul.f32 %v682, 1.442695
        %v684 = vpow.pop %v683
        %v685 = vadd.f32 %v684, 1.0
        %v686 = vrcp.pop %v685
        %v687 = vmul.f32 1.0, %v686
        %v688 = vmul.f32 %v680, %v511
        %v689 = vmul.f32 %v674, %v681
        %v690 = vadd.f32 %v688, %v689
        %v691 = vtanh.pop %v690
        %v692 = vmul.f32 %v687, %v691
        %v693 = vpack.c.bf16 %v692, %v692
        %s694 = scalar_lea.vmem %s206, 4 [#allocation4]
        %695 = vst [vmem:[%s694] sm:$0xf] %v693
        %s696 = scalar_lea.vmem %s222, 32
        %v697 = vld [vmem:[%s696] sm:$0xff]
        %v698 = vld [vmem:[%s696 + $0x8] sm:$0xff]
        %v699 = vunpack.c.l.bf16 %v697
        %v700 = vunpack.c.h.bf16 %v697
        %v701 = vunpack.c.l.bf16 %v698
        %v702 = vunpack.c.h.bf16 %v698
        %703 = vmatprep.subr.mxu0 %v273
        %704 = vmatpush1.msra.mxu0 %v272
        %705 = vmatprep.subr.mxu0 %v277
        %706 = vmatpush1.msra.mxu0 %v276
        %707 = vmatprep.subr.mxu0 %v281
        %708 = vmatpush1.msra.mxu0 %v280
        %709 = vmatprep.subr.mxu0 %v285
        %710 = vmatpush1.msra.mxu0 %v284
        %711 = vmatprep.subr.mxu0 %v289
        %712 = vmatpush1.msra.mxu0 %v288
        %713 = vmatprep.subr.mxu0 %v293
        %714 = vmatpush1.msra.mxu0 %v292
        %715 = vmatprep.subr.mxu0 %v297
        %716 = vmatpush1.msra.mxu0 %v296
        %717 = vmatprep.subr.mxu0 %v301
        %718 = vmatpush1.msra.mxu0 %v300
        %719 = vmatprep.subr.mxu0 %v305
        %720 = vmatpush1.msra.mxu0 %v304
        %721 = vmatprep.subr.mxu0 %v309
        %722 = vmatpush1.msra.mxu0 %v308
        %723 = vmatprep.subr.mxu0 %v313
        %724 = vmatpush1.msra.mxu0 %v312
        %725 = vmatprep.subr.mxu0 %v317
        %726 = vmatpush1.msra.mxu0 %v316
        %727 = vmatprep.subr.mxu0 %v321
        %728 = vmatpush1.msra.mxu0 %v320
        %729 = vmatprep.subr.mxu0 %v325
        %730 = vmatpush1.msra.mxu0 %v324
        %731 = vmatprep.subr.mxu0 %v329
        %732 = vmatpush1.msra.mxu0 %v328
        %733 = vmatprep.subr.mxu0 %v333
        %734 = vmatpush1.msra.mxu0 %v332
        %735 = vmatprep.subr.mxu0 0.0
        %736 = vmatpush1.msra.mxu0 0.0
        %737 = vmatprep.subr.mxu0 0.0
        %738 = vmatpush1.msra.mxu0 0.0
        %739 = vmatprep.subr.mxu0 0.0
        %740 = vmatpush1.msra.mxu0 0.0
        %741 = vmatprep.subr.mxu0 0.0
        %742 = vmatpush1.msra.mxu0 0.0
        %743 = vmatprep.subr.mxu0 0.0
        %744 = vmatpush1.msra.mxu0 0.0
        %745 = vmatprep.subr.mxu0 0.0
        %746 = vmatpush1.msra.mxu0 0.0
        %747 = vmatprep.subr.mxu0 0.0
        %748 = vmatpush1.msra.mxu0 0.0
        %749 = vmatprep.subr.mxu0 0.0
        %750 = vmatpush1.msra.mxu0 0.0
        %751 = vmatprep.subr.mxu0 0.0
        %752 = vmatpush1.msra.mxu0 0.0
        %753 = vmatprep.subr.mxu0 0.0
        %754 = vmatpush1.msra.mxu0 0.0
        %755 = vmatprep.subr.mxu0 0.0
        %756 = vmatpush1.msra.mxu0 0.0
        %757 = vmatprep.subr.mxu0 0.0
        %758 = vmatpush1.msra.mxu0 0.0
        %759 = vmatprep.subr.mxu0 0.0
        %760 = vmatpush1.msra.mxu0 0.0
        %761 = vmatprep.subr.mxu0 0.0
        %762 = vmatpush1.msra.mxu0 0.0
        %763 = vmatprep.subr.mxu0 0.0
        %764 = vmatpush1.msra.mxu0 0.0
        %765 = vmatprep.subr.mxu0 0.0
        %766 = vmatpush1.msra.mxu0 0.0
        %767 = vmatprep.mubr.f32.mxu0 0.0
        %768 = vmatmul.mubr.f32.gmra.mrb[0].mxu0 %v692
        %v769 = vpop.f32.mrb[0].mxu0
        %v770 = vadd.f32 0.0, %v769
        %v771 = vpop.f32.mrb[0].mxu0
        %v772 = vadd.f32 0.0, %v771
        %773 = vdwg.mxu0
        %774 = vmatprep.subr.mxu0 %v275
        %775 = vmatpush1.msra.mxu0 %v274
        %776 = vmatprep.subr.mxu0 %v279
        %777 = vmatpush1.msra.mxu0 %v278
        %778 = vmatprep.subr.mxu0 %v283
        %779 = vmatpush1.msra.mxu0 %v282
        %780 = vmatprep.subr.mxu0 %v287
        %781 = vmatpush1.msra.mxu0 %v286
        %782 = vmatprep.subr.mxu0 %v291
        %783 = vmatpush1.msra.mxu0 %v290
        %784 = vmatprep.subr.mxu0 %v295
        %785 = vmatpush1.msra.mxu0 %v294
        %786 = vmatprep.subr.mxu0 %v299
        %787 = vmatpush1.msra.mxu0 %v298
        %788 = vmatprep.subr.mxu0 %v303
        %789 = vmatpush1.msra.mxu0 %v302
        %790 = vmatprep.subr.mxu0 %v307
        %791 = vmatpush1.msra.mxu0 %v306
        %792 = vmatprep.subr.mxu0 %v311
        %793 = vmatpush1.msra.mxu0 %v310
        %794 = vmatprep.subr.mxu0 %v315
        %795 = vmatpush1.msra.mxu0 %v314
        %796 = vmatprep.subr.mxu0 %v319
        %797 = vmatpush1.msra.mxu0 %v318
        %798 = vmatprep.subr.mxu0 %v323
        %799 = vmatpush1.msra.mxu0 %v322
        %800 = vmatprep.subr.mxu0 %v327
        %801 = vmatpush1.msra.mxu0 %v326
        %802 = vmatprep.subr.mxu0 %v331
        %803 = vmatpush1.msra.mxu0 %v330
        %804 = vmatprep.subr.mxu0 %v335
        %805 = vmatpush1.msra.mxu0 %v334
        %806 = vmatprep.subr.mxu0 0.0
        %807 = vmatpush1.msra.mxu0 0.0
        %808 = vmatprep.subr.mxu0 0.0
        %809 = vmatpush1.msra.mxu0 0.0
        %810 = vmatprep.subr.mxu0 0.0
        %811 = vmatpush1.msra.mxu0 0.0
        %812 = vmatprep.subr.mxu0 0.0
        %813 = vmatpush1.msra.mxu0 0.0
        %814 = vmatprep.subr.mxu0 0.0
        %815 = vmatpush1.msra.mxu0 0.0
        %816 = vmatprep.subr.mxu0 0.0
        %817 = vmatpush1.msra.mxu0 0.0
        %818 = vmatprep.subr.mxu0 0.0
        %819 = vmatpush1.msra.mxu0 0.0
        %820 = vmatprep.subr.mxu0 0.0
        %821 = vmatpush1.msra.mxu0 0.0
        %822 = vmatprep.subr.mxu0 0.0
        %823 = vmatpush1.msra.mxu0 0.0
        %824 = vmatprep.subr.mxu0 0.0
        %825 = vmatpush1.msra.mxu0 0.0
        %826 = vmatprep.subr.mxu0 0.0
        %827 = vmatpush1.msra.mxu0 0.0
        %828 = vmatprep.subr.mxu0 0.0
        %829 = vmatpush1.msra.mxu0 0.0
        %830 = vmatprep.subr.mxu0 0.0
        %831 = vmatpush1.msra.mxu0 0.0
        %832 = vmatprep.subr.mxu0 0.0
        %833 = vmatpush1.msra.mxu0 0.0
        %834 = vmatprep.subr.mxu0 0.0
        %835 = vmatpush1.msra.mxu0 0.0
        %836 = vmatprep.subr.mxu0 0.0
        %837 = vmatpush1.msra.mxu0 0.0
        %838 = vmatprep.mubr.f32.mxu0 0.0
        %839 = vmatmul.mubr.f32.gmra.mrb[0].mxu0 %v692
        %v840 = vpop.f32.mrb[0].mxu0
        %v841 = vadd.f32 0.0, %v840
        %v842 = vpop.f32.mrb[0].mxu0
        %v843 = vadd.f32 0.0, %v842
        %844 = vdwg.mxu0
        %v845 = vadd.f32 %v699, %v770
        %v846 = vadd.f32 %v700, %v772
        %v847 = vadd.f32 %v701, %v841
        %v848 = vadd.f32 %v702, %v843
        %v849 = vxor.u32 %v845, 2147483648
        %v850 = vmul.f32 %v849, 1.442695
        %v851 = vpow.pop %v850
        %v852 = vadd.f32 %v851, 1.0
        %v853 = vrcp.pop %v852
        %v854 = vmul.f32 1.0, %v853
        %v855 = vxor.u32 %v846, 2147483648
        %v856 = vmul.f32 %v855, 1.442695
        %v857 = vpow.pop %v856
        %v858 = vadd.f32 %v857, 1.0
        %v859 = vrcp.pop %v858
        %v860 = vmul.f32 1.0, %v859
        %v861 = vtanh.pop %v847
        %v862 = vxor.u32 %v848, 2147483648
        %v863 = vmul.f32 %v862, 1.442695
        %v864 = vpow.pop %v863
        %v865 = vadd.f32 %v864, 1.0
        %v866 = vrcp.pop %v865
        %v867 = vmul.f32 1.0, %v866
        %v868 = vmul.f32 %v860, %v690
        %v869 = vmul.f32 %v854, %v861
        %v870 = vadd.f32 %v868, %v869
        %v871 = vtanh.pop %v870
        %v872 = vmul.f32 %v867, %v871
        %v873 = vpack.c.bf16 %v872, %v872
        %s874 = scalar_lea.vmem %s206, 8 [#allocation4]
        %875 = vst [vmem:[%s874] sm:$0xf] %v873
        %s876 = scalar_lea.vmem %s222, 48
        %v877 = vld [vmem:[%s876] sm:$0xff]
        %v878 = vld [vmem:[%s876 + $0x8] sm:$0xff]
        %v879 = vunpack.c.l.bf16 %v877
        %v880 = vunpack.c.h.bf16 %v877
        %v881 = vunpack.c.l.bf16 %v878
        %v882 = vunpack.c.h.bf16 %v878
        %883 = vmatprep.subr.mxu0 %v273
        %884 = vmatpush1.msra.mxu0 %v272
        %885 = vmatprep.subr.mxu0 %v277
        %886 = vmatpush1.msra.mxu0 %v276
        %887 = vmatprep.subr.mxu0 %v281
        %888 = vmatpush1.msra.mxu0 %v280
        %889 = vmatprep.subr.mxu0 %v285
        %890 = vmatpush1.msra.mxu0 %v284
        %891 = vmatprep.subr.mxu0 %v289
        %892 = vmatpush1.msra.mxu0 %v288
        %893 = vmatprep.subr.mxu0 %v293
        %894 = vmatpush1.msra.mxu0 %v292
        %895 = vmatprep.subr.mxu0 %v297
        %896 = vmatpush1.msra.mxu0 %v296
        %897 = vmatprep.subr.mxu0 %v301
        %898 = vmatpush1.msra.mxu0 %v300
        %899 = vmatprep.subr.mxu0 %v305
        %900 = vmatpush1.msra.mxu0 %v304
        %901 = vmatprep.subr.mxu0 %v309
        %902 = vmatpush1.msra.mxu0 %v308
        %903 = vmatprep.subr.mxu0 %v313
        %904 = vmatpush1.msra.mxu0 %v312
        %905 = vmatprep.subr.mxu0 %v317
        %906 = vmatpush1.msra.mxu0 %v316
        %907 = vmatprep.subr.mxu0 %v321
        %908 = vmatpush1.msra.mxu0 %v320
        %909 = vmatprep.subr.mxu0 %v325
        %910 = vmatpush1.msra.mxu0 %v324
        %911 = vmatprep.subr.mxu0 %v329
        %912 = vmatpush1.msra.mxu0 %v328
        %913 = vmatprep.subr.mxu0 %v333
        %914 = vmatpush1.msra.mxu0 %v332
        %915 = vmatprep.subr.mxu0 0.0
        %916 = vmatpush1.msra.mxu0 0.0
        %917 = vmatprep.subr.mxu0 0.0
        %918 = vmatpush1.msra.mxu0 0.0
        %919 = vmatprep.subr.mxu0 0.0
        %920 = vmatpush1.msra.mxu0 0.0
        %921 = vmatprep.subr.mxu0 0.0
        %922 = vmatpush1.msra.mxu0 0.0
        %923 = vmatprep.subr.mxu0 0.0
        %924 = vmatpush1.msra.mxu0 0.0
        %925 = vmatprep.subr.mxu0 0.0
        %926 = vmatpush1.msra.mxu0 0.0
        %927 = vmatprep.subr.mxu0 0.0
        %928 = vmatpush1.msra.mxu0 0.0
        %929 = vmatprep.subr.mxu0 0.0
        %930 = vmatpush1.msra.mxu0 0.0
        %931 = vmatprep.subr.mxu0 0.0
        %932 = vmatpush1.msra.mxu0 0.0
        %933 = vmatprep.subr.mxu0 0.0
        %934 = vmatpush1.msra.mxu0 0.0
        %935 = vmatprep.subr.mxu0 0.0
        %936 = vmatpush1.msra.mxu0 0.0
        %937 = vmatprep.subr.mxu0 0.0
        %938 = vmatpush1.msra.mxu0 0.0
        %939 = vmatprep.subr.mxu0 0.0
        %940 = vmatpush1.msra.mxu0 0.0
        %941 = vmatprep.subr.mxu0 0.0
        %942 = vmatpush1.msra.mxu0 0.0
        %943 = vmatprep.subr.mxu0 0.0
        %944 = vmatpush1.msra.mxu0 0.0
        %945 = vmatprep.subr.mxu0 0.0
        %946 = vmatpush1.msra.mxu0 0.0
        %947 = vmatprep.mubr.f32.mxu0 0.0
        %948 = vmatmul.mubr.f32.gmra.mrb[0].mxu0 %v872
        %v949 = vpop.f32.mrb[0].mxu0
        %v950 = vadd.f32 0.0, %v949
        %v951 = vpop.f32.mrb[0].mxu0
        %v952 = vadd.f32 0.0, %v951
        %953 = vdwg.mxu0
        %954 = vmatprep.subr.mxu0 %v275
        %955 = vmatpush1.msra.mxu0 %v274
        %956 = vmatprep.subr.mxu0 %v279
        %957 = vmatpush1.msra.mxu0 %v278
        %958 = vmatprep.subr.mxu0 %v283
        %959 = vmatpush1.msra.mxu0 %v282
        %960 = vmatprep.subr.mxu0 %v287
        %961 = vmatpush1.msra.mxu0 %v286
        %962 = vmatprep.subr.mxu0 %v291
        %963 = vmatpush1.msra.mxu0 %v290
        %964 = vmatprep.subr.mxu0 %v295
        %965 = vmatpush1.msra.mxu0 %v294
        %966 = vmatprep.subr.mxu0 %v299
        %967 = vmatpush1.msra.mxu0 %v298
        %968 = vmatprep.subr.mxu0 %v303
        %969 = vmatpush1.msra.mxu0 %v302
        %970 = vmatprep.subr.mxu0 %v307
        %971 = vmatpush1.msra.mxu0 %v306
        %972 = vmatprep.subr.mxu0 %v311
        %973 = vmatpush1.msra.mxu0 %v310
        %974 = vmatprep.subr.mxu0 %v315
        %975 = vmatpush1.msra.mxu0 %v314
        %976 = vmatprep.subr.mxu0 %v319
        %977 = vmatpush1.msra.mxu0 %v318
        %978 = vmatprep.subr.mxu0 %v323
        %979 = vmatpush1.msra.mxu0 %v322
        %980 = vmatprep.subr.mxu0 %v327
        %981 = vmatpush1.msra.mxu0 %v326
        %982 = vmatprep.subr.mxu0 %v331
        %983 = vmatpush1.msra.mxu0 %v330
        %984 = vmatprep.subr.mxu0 %v335
        %985 = vmatpush1.msra.mxu0 %v334
        %986 = vmatprep.subr.mxu0 0.0
        %987 = vmatpush1.msra.mxu0 0.0
        %988 = vmatprep.subr.mxu0 0.0
        %989 = vmatpush1.msra.mxu0 0.0
        %990 = vmatprep.subr.mxu0 0.0
        %991 = vmatpush1.msra.mxu0 0.0
        %992 = vmatprep.subr.mxu0 0.0
        %993 = vmatpush1.msra.mxu0 0.0
        %994 = vmatprep.subr.mxu0 0.0
        %995 = vmatpush1.msra.mxu0 0.0
        %996 = vmatprep.subr.mxu0 0.0
        %997 = vmatpush1.msra.mxu0 0.0
        %998 = vmatprep.subr.mxu0 0.0
        %999 = vmatpush1.msra.mxu0 0.0
        %1000 = vmatprep.subr.mxu0 0.0
        %1001 = vmatpush1.msra.mxu0 0.0
        %1002 = vmatprep.subr.mxu0 0.0
        %1003 = vmatpush1.msra.mxu0 0.0
        %1004 = vmatprep.subr.mxu0 0.0
        %1005 = vmatpush1.msra.mxu0 0.0
        %1006 = vmatprep.subr.mxu0 0.0
        %1007 = vmatpush1.msra.mxu0 0.0
        %1008 = vmatprep.subr.mxu0 0.0
        %1009 = vmatpush1.msra.mxu0 0.0
        %1010 = vmatprep.subr.mxu0 0.0
        %1011 = vmatpush1.msra.mxu0 0.0
        %1012 = vmatprep.subr.mxu0 0.0
        %1013 = vmatpush1.msra.mxu0 0.0
        %1014 = vmatprep.subr.mxu0 0.0
        %1015 = vmatpush1.msra.mxu0 0.0
        %1016 = vmatprep.subr.mxu0 0.0
        %1017 = vmatpush1.msra.mxu0 0.0
        %1018 = vmatprep.mubr.f32.mxu0 0.0
        %1019 = vmatmul.mubr.f32.gmra.mrb[0].mxu0 %v872
        %v1020 = vpop.f32.mrb[0].mxu0
        %v1021 = vadd.f32 0.0, %v1020
        %v1022 = vpop.f32.mrb[0].mxu0
        %v1023 = vadd.f32 0.0, %v1022
        %1024 = vdwg.mxu0
        %v1025 = vadd.f32 %v879, %v950
        %v1026 = vadd.f32 %v880, %v952
        %v1027 = vadd.f32 %v881, %v1021
        %v1028 = vadd.f32 %v882, %v1023
        %v1029 = vxor.u32 %v1025, 2147483648
        %v1030 = vmul.f32 %v1029, 1.442695
        %v1031 = vpow.pop %v1030
        %v1032 = vadd.f32 %v1031, 1.0
        %v1033 = vrcp.pop %v1032
        %v1034 = vmul.f32 1.0, %v1033
        %v1035 = vxor.u32 %v1026, 2147483648
        %v1036 = vmul.f32 %v1035, 1.442695
        %v1037 = vpow.pop %v1036
        %v1038 = vadd.f32 %v1037, 1.0
        %v1039 = vrcp.pop %v1038
        %v1040 = vmul.f32 1.0, %v1039
        %v1041 = vtanh.pop %v1027
        %v1042 = vxor.u32 %v1028, 2147483648
        %v1043 = vmul.f32 %v1042, 1.442695
        %v1044 = vpow.pop %v1043
        %v1045 = vadd.f32 %v1044, 1.0
        %v1046 = vrcp.pop %v1045
        %v1047 = vmul.f32 1.0, %v1046
        %v1048 = vmul.f32 %v1040, %v870
        %v1049 = vmul.f32 %v1034, %v1041
        %v1050 = vadd.f32 %v1048, %v1049
        %v1051 = vtanh.pop %v1050
        %v1052 = vmul.f32 %v1047, %v1051
        %v1053 = vpack.c.bf16 %v1052, %v1052
        %s1054 = scalar_lea.vmem %s206, 12 [#allocation4]
        %1055 = vst [vmem:[%s1054] sm:$0xf] %v1053
        %s1056 = scalar_lea.vmem %s222, 64
        %v1057 = vld [vmem:[%s1056] sm:$0xff]
        %v1058 = vld [vmem:[%s1056 + $0x8] sm:$0xff]
        %v1059 = vunpack.c.l.bf16 %v1057
        %v1060 = vunpack.c.h.bf16 %v1057
        %v1061 = vunpack.c.l.bf16 %v1058
        %v1062 = vunpack.c.h.bf16 %v1058
        %1063 = vmatprep.subr.mxu0 %v273
        %1064 = vmatpush1.msra.mxu0 %v272
        %1065 = vmatprep.subr.mxu0 %v277
        %1066 = vmatpush1.msra.mxu0 %v276
        %1067 = vmatprep.subr.mxu0 %v281
        %1068 = vmatpush1.msra.mxu0 %v280
        %1069 = vmatprep.subr.mxu0 %v285
        %1070 = vmatpush1.msra.mxu0 %v284
        %1071 = vmatprep.subr.mxu0 %v289
        %1072 = vmatpush1.msra.mxu0 %v288
        %1073 = vmatprep.subr.mxu0 %v293
        %1074 = vmatpush1.msra.mxu0 %v292
        %1075 = vmatprep.subr.mxu0 %v297
        %1076 = vmatpush1.msra.mxu0 %v296
        %1077 = vmatprep.subr.mxu0 %v301
        %1078 = vmatpush1.msra.mxu0 %v300
        %1079 = vmatprep.subr.mxu0 %v305
        %1080 = vmatpush1.msra.mxu0 %v304
        %1081 = vmatprep.subr.mxu0 %v309
        %1082 = vmatpush1.msra.mxu0 %v308
        %1083 = vmatprep.subr.mxu0 %v313
        %1084 = vmatpush1.msra.mxu0 %v312
        %1085 = vmatprep.subr.mxu0 %v317
        %1086 = vmatpush1.msra.mxu0 %v316
        %1087 = vmatprep.subr.mxu0 %v321
        %1088 = vmatpush1.msra.mxu0 %v320
        %1089 = vmatprep.subr.mxu0 %v325
        %1090 = vmatpush1.msra.mxu0 %v324
        %1091 = vmatprep.subr.mxu0 %v329
        %1092 = vmatpush1.msra.mxu0 %v328
        %1093 = vmatprep.subr.mxu0 %v333
        %1094 = vmatpush1.msra.mxu0 %v332
        %1095 = vmatprep.subr.mxu0 0.0
        %1096 = vmatpush1.msra.mxu0 0.0
        %1097 = vmatprep.subr.mxu0 0.0
        %1098 = vmatpush1.msra.mxu0 0.0
        %1099 = vmatprep.subr.mxu0 0.0
        %1100 = vmatpush1.msra.mxu0 0.0
        %1101 = vmatprep.subr.mxu0 0.0
        %1102 = vmatpush1.msra.mxu0 0.0
        %1103 = vmatprep.subr.mxu0 0.0
        %1104 = vmatpush1.msra.mxu0 0.0
        %1105 = vmatprep.subr.mxu0 0.0
        %1106 = vmatpush1.msra.mxu0 0.0
        %1107 = vmatprep.subr.mxu0 0.0
        %1108 = vmatpush1.msra.mxu0 0.0
        %1109 = vmatprep.subr.mxu0 0.0
        %1110 = vmatpush1.msra.mxu0 0.0
        %1111 = vmatprep.subr.mxu0 0.0
        %1112 = vmatpush1.msra.mxu0 0.0
        %1113 = vmatprep.subr.mxu0 0.0
        %1114 = vmatpush1.msra.mxu0 0.0
        %1115 = vmatprep.subr.mxu0 0.0
        %1116 = vmatpush1.msra.mxu0 0.0
        %1117 = vmatprep.subr.mxu0 0.0
        %1118 = vmatpush1.msra.mxu0 0.0
        %1119 = vmatprep.subr.mxu0 0.0
        %1120 = vmatpush1.msra.mxu0 0.0
        %1121 = vmatprep.subr.mxu0 0.0
        %1122 = vmatpush1.msra.mxu0 0.0
        %1123 = vmatprep.subr.mxu0 0.0
        %1124 = vmatpush1.msra.mxu0 0.0
        %1125 = vmatprep.subr.mxu0 0.0
        %1126 = vmatpush1.msra.mxu0 0.0
        %1127 = vmatprep.mubr.f32.mxu0 0.0
        %1128 = vmatmul.mubr.f32.gmra.mrb[0].mxu0 %v1052
        %v1129 = vpop.f32.mrb[0].mxu0
        %v1130 = vadd.f32 0.0, %v1129
        %v1131 = vpop.f32.mrb[0].mxu0
        %v1132 = vadd.f32 0.0, %v1131
        %1133 = vdwg.mxu0
        %1134 = vmatprep.subr.mxu0 %v275
        %1135 = vmatpush1.msra.mxu0 %v274
        %1136 = vmatprep.subr.mxu0 %v279
        %1137 = vmatpush1.msra.mxu0 %v278
        %1138 = vmatprep.subr.mxu0 %v283
        %1139 = vmatpush1.msra.mxu0 %v282
        %1140 = vmatprep.subr.mxu0 %v287
        %1141 = vmatpush1.msra.mxu0 %v286
        %1142 = vmatprep.subr.mxu0 %v291
        %1143 = vmatpush1.msra.mxu0 %v290
        %1144 = vmatprep.subr.mxu0 %v295
        %1145 = vmatpush1.msra.mxu0 %v294
        %1146 = vmatprep.subr.mxu0 %v299
        %1147 = vmatpush1.msra.mxu0 %v298
        %1148 = vmatprep.subr.mxu0 %v303
        %1149 = vmatpush1.msra.mxu0 %v302
        %1150 = vmatprep.subr.mxu0 %v307
        %1151 = vmatpush1.msra.mxu0 %v306
        %1152 = vmatprep.subr.mxu0 %v311
        %1153 = vmatpush1.msra.mxu0 %v310
        %1154 = vmatprep.subr.mxu0 %v315
        %1155 = vmatpush1.msra.mxu0 %v314
        %1156 = vmatprep.subr.mxu0 %v319
        %1157 = vmatpush1.msra.mxu0 %v318
        %1158 = vmatprep.subr.mxu0 %v323
        %1159 = vmatpush1.msra.mxu0 %v322
        %1160 = vmatprep.subr.mxu0 %v327
        %1161 = vmatpush1.msra.mxu0 %v326
        %1162 = vmatprep.subr.mxu0 %v331
        %1163 = vmatpush1.msra.mxu0 %v330
        %1164 = vmatprep.subr.mxu0 %v335
        %1165 = vmatpush1.msra.mxu0 %v334
        %1166 = vmatprep.subr.mxu0 0.0
        %1167 = vmatpush1.msra.mxu0 0.0
        %1168 = vmatprep.subr.mxu0 0.0
        %1169 = vmatpush1.msra.mxu0 0.0
        %1170 = vmatprep.subr.mxu0 0.0
        %1171 = vmatpush1.msra.mxu0 0.0
        %1172 = vmatprep.subr.mxu0 0.0
        %1173 = vmatpush1.msra.mxu0 0.0
        %1174 = vmatprep.subr.mxu0 0.0
        %1175 = vmatpush1.msra.mxu0 0.0
        %1176 = vmatprep.subr.mxu0 0.0
        %1177 = vmatpush1.msra.mxu0 0.0
        %1178 = vmatprep.subr.mxu0 0.0
        %1179 = vmatpush1.msra.mxu0 0.0
        %1180 = vmatprep.subr.mxu0 0.0
        %1181 = vmatpush1.msra.mxu0 0.0
        %1182 = vmatprep.subr.mxu0 0.0
        %1183 = vmatpush1.msra.mxu0 0.0
        %1184 = vmatprep.subr.mxu0 0.0
        %1185 = vmatpush1.msra.mxu0 0.0
        %1186 = vmatprep.subr.mxu0 0.0
        %1187 = vmatpush1.msra.mxu0 0.0
        %1188 = vmatprep.subr.mxu0 0.0
        %1189 = vmatpush1.msra.mxu0 0.0
        %1190 = vmatprep.subr.mxu0 0.0
        %1191 = vmatpush1.msra.mxu0 0.0
        %1192 = vmatprep.subr.mxu0 0.0
        %1193 = vmatpush1.msra.mxu0 0.0
        %1194 = vmatprep.subr.mxu0 0.0
        %1195 = vmatpush1.msra.mxu0 0.0
        %1196 = vmatprep.subr.mxu0 0.0
        %1197 = vmatpush1.msra.mxu0 0.0
        %1198 = vmatprep.mubr.f32.mxu0 0.0
        %1199 = vmatmul.mubr.f32.gmra.mrb[0].mxu0 %v1052
        %v1200 = vpop.f32.mrb[0].mxu0
        %v1201 = vadd.f32 0.0, %v1200
        %v1202 = vpop.f32.mrb[0].mxu0
        %v1203 = vadd.f32 0.0, %v1202
        %1204 = vdwg.mxu0
        %v1205 = vadd.f32 %v1059, %v1130
        %v1206 = vadd.f32 %v1060, %v1132
        %v1207 = vadd.f32 %v1061, %v1201
        %v1208 = vadd.f32 %v1062, %v1203
        %v1209 = vxor.u32 %v1205, 2147483648
        %v1210 = vmul.f32 %v1209, 1.442695
        %v1211 = vpow.pop %v1210
        %v1212 = vadd.f32 %v1211, 1.0
        %v1213 = vrcp.pop %v1212
        %v1214 = vmul.f32 1.0, %v1213
        %v1215 = vxor.u32 %v1206, 2147483648
        %v1216 = vmul.f32 %v1215, 1.442695
        %v1217 = vpow.pop %v1216
        %v1218 = vadd.f32 %v1217, 1.0
        %v1219 = vrcp.pop %v1218
        %v1220 = vmul.f32 1.0, %v1219
        %v1221 = vtanh.pop %v1207
        %v1222 = vxor.u32 %v1208, 2147483648
        %v1223 = vmul.f32 %v1222, 1.442695
        %v1224 = vpow.pop %v1223
        %v1225 = vadd.f32 %v1224, 1.0
        %v1226 = vrcp.pop %v1225
        %v1227 = vmul.f32 1.0, %v1226
        %v1228 = vmul.f32 %v1220, %v1050
        %v1229 = vmul.f32 %v1214, %v1221
        %v1230 = vadd.f32 %v1228, %v1229
        %v1231 = vtanh.pop %v1230
        %v1232 = vmul.f32 %v1227, %v1231
        %v1233 = vpack.c.bf16 %v1232, %v1232
        %s1234 = scalar_lea.vmem %s206, 16 [#allocation4]
        %1235 = vst [vmem:[%s1234] sm:$0xf] %v1233
        %s1236 = scalar_lea.vmem %s222, 80
        %v1237 = vld [vmem:[%s1236] sm:$0xff]
        %v1238 = vld [vmem:[%s1236 + $0x8] sm:$0xff]
        %v1239 = vunpack.c.l.bf16 %v1237
        %v1240 = vunpack.c.h.bf16 %v1237
        %v1241 = vunpack.c.l.bf16 %v1238
        %v1242 = vunpack.c.h.bf16 %v1238
        %1243 = vmatprep.subr.mxu0 %v273
        %1244 = vmatpush1.msra.mxu0 %v272
        %1245 = vmatprep.subr.mxu0 %v277
        %1246 = vmatpush1.msra.mxu0 %v276
        %1247 = vmatprep.subr.mxu0 %v281
        %1248 = vmatpush1.msra.mxu0 %v280
        %1249 = vmatprep.subr.mxu0 %v285
        %1250 = vmatpush1.msra.mxu0 %v284
        %1251 = vmatprep.subr.mxu0 %v289
        %1252 = vmatpush1.msra.mxu0 %v288
        %1253 = vmatprep.subr.mxu0 %v293
        %1254 = vmatpush1.msra.mxu0 %v292
        %1255 = vmatprep.subr.mxu0 %v297
        %1256 = vmatpush1.msra.mxu0 %v296
        %1257 = vmatprep.subr.mxu0 %v301
        %1258 = vmatpush1.msra.mxu0 %v300
        %1259 = vmatprep.subr.mxu0 %v305
        %1260 = vmatpush1.msra.mxu0 %v304
        %1261 = vmatprep.subr.mxu0 %v309
        %1262 = vmatpush1.msra.mxu0 %v308
        %1263 = vmatprep.subr.mxu0 %v313
        %1264 = vmatpush1.msra.mxu0 %v312
        %1265 = vmatprep.subr.mxu0 %v317
        %1266 = vmatpush1.msra.mxu0 %v316
        %1267 = vmatprep.subr.mxu0 %v321
        %1268 = vmatpush1.msra.mxu0 %v320
        %1269 = vmatprep.subr.mxu0 %v325
        %1270 = vmatpush1.msra.mxu0 %v324
        %1271 = vmatprep.subr.mxu0 %v329
        %1272 = vmatpush1.msra.mxu0 %v328
        %1273 = vmatprep.subr.mxu0 %v333
        %1274 = vmatpush1.msra.mxu0 %v332
        %1275 = vmatprep.subr.mxu0 0.0
        %1276 = vmatpush1.msra.mxu0 0.0
        %1277 = vmatprep.subr.mxu0 0.0
        %1278 = vmatpush1.msra.mxu0 0.0
        %1279 = vmatprep.subr.mxu0 0.0
        %1280 = vmatpush1.msra.mxu0 0.0
        %1281 = vmatprep.subr.mxu0 0.0
        %1282 = vmatpush1.msra.mxu0 0.0
        %1283 = vmatprep.subr.mxu0 0.0
        %1284 = vmatpush1.msra.mxu0 0.0
        %1285 = vmatprep.subr.mxu0 0.0
        %1286 = vmatpush1.msra.mxu0 0.0
        %1287 = vmatprep.subr.mxu0 0.0
        %1288 = vmatpush1.msra.mxu0 0.0
        %1289 = vmatprep.subr.mxu0 0.0
        %1290 = vmatpush1.msra.mxu0 0.0
        %1291 = vmatprep.subr.mxu0 0.0
        %1292 = vmatpush1.msra.mxu0 0.0
        %1293 = vmatprep.subr.mxu0 0.0
        %1294 = vmatpush1.msra.mxu0 0.0
        %1295 = vmatprep.subr.mxu0 0.0
        %1296 = vmatpush1.msra.mxu0 0.0
        %1297 = vmatprep.subr.mxu0 0.0
        %1298 = vmatpush1.msra.mxu0 0.0
        %1299 = vmatprep.subr.mxu0 0.0
        %1300 = vmatpush1.msra.mxu0 0.0
        %1301 = vmatprep.subr.mxu0 0.0
        %1302 = vmatpush1.msra.mxu0 0.0
        %1303 = vmatprep.subr.mxu0 0.0
        %1304 = vmatpush1.msra.mxu0 0.0
        %1305 = vmatprep.subr.mxu0 0.0
        %1306 = vmatpush1.msra.mxu0 0.0
        %1307 = vmatprep.mubr.f32.mxu0 0.0
        %1308 = vmatmul.mubr.f32.gmra.mrb[0].mxu0 %v1232
        %v1309 = vpop.f32.mrb[0].mxu0
        %v1310 = vadd.f32 0.0, %v1309
        %v1311 = vpop.f32.mrb[0].mxu0
        %v1312 = vadd.f32 0.0, %v1311
        %1313 = vdwg.mxu0
        %1314 = vmatprep.subr.mxu0 %v275
        %1315 = vmatpush1.msra.mxu0 %v274
        %1316 = vmatprep.subr.mxu0 %v279
        %1317 = vmatpush1.msra.mxu0 %v278
        %1318 = vmatprep.subr.mxu0 %v283
        %1319 = vmatpush1.msra.mxu0 %v282
        %1320 = vmatprep.subr.mxu0 %v287
        %1321 = vmatpush1.msra.mxu0 %v286
        %1322 = vmatprep.subr.mxu0 %v291
        %1323 = vmatpush1.msra.mxu0 %v290
        %1324 = vmatprep.subr.mxu0 %v295
        %1325 = vmatpush1.msra.mxu0 %v294
        %1326 = vmatprep.subr.mxu0 %v299
        %1327 = vmatpush1.msra.mxu0 %v298
        %1328 = vmatprep.subr.mxu0 %v303
        %1329 = vmatpush1.msra.mxu0 %v302
        %1330 = vmatprep.subr.mxu0 %v307
        %1331 = vmatpush1.msra.mxu0 %v306
        %1332 = vmatprep.subr.mxu0 %v311
        %1333 = vmatpush1.msra.mxu0 %v310
        %1334 = vmatprep.subr.mxu0 %v315
        %1335 = vmatpush1.msra.mxu0 %v314
        %1336 = vmatprep.subr.mxu0 %v319
        %1337 = vmatpush1.msra.mxu0 %v318
        %1338 = vmatprep.subr.mxu0 %v323
        %1339 = vmatpush1.msra.mxu0 %v322
        %1340 = vmatprep.subr.mxu0 %v327
        %1341 = vmatpush1.msra.mxu0 %v326
        %1342 = vmatprep.subr.mxu0 %v331
        %1343 = vmatpush1.msra.mxu0 %v330
        %1344 = vmatprep.subr.mxu0 %v335
        %1345 = vmatpush1.msra.mxu0 %v334
        %1346 = vmatprep.subr.mxu0 0.0
        %1347 = vmatpush1.msra.mxu0 0.0
        %1348 = vmatprep.subr.mxu0 0.0
        %1349 = vmatpush1.msra.mxu0 0.0
        %1350 = vmatprep.subr.mxu0 0.0
        %1351 = vmatpush1.msra.mxu0 0.0
        %1352 = vmatprep.subr.mxu0 0.0
        %1353 = vmatpush1.msra.mxu0 0.0
        %1354 = vmatprep.subr.mxu0 0.0
        %1355 = vmatpush1.msra.mxu0 0.0
        %1356 = vmatprep.subr.mxu0 0.0
        %1357 = vmatpush1.msra.mxu0 0.0
        %1358 = vmatprep.subr.mxu0 0.0
        %1359 = vmatpush1.msra.mxu0 0.0
        %1360 = vmatprep.subr.mxu0 0.0
        %1361 = vmatpush1.msra.mxu0 0.0
        %1362 = vmatprep.subr.mxu0 0.0
        %1363 = vmatpush1.msra.mxu0 0.0
        %1364 = vmatprep.subr.mxu0 0.0
        %1365 = vmatpush1.msra.mxu0 0.0
        %1366 = vmatprep.subr.mxu0 0.0
        %1367 = vmatpush1.msra.mxu0 0.0
        %1368 = vmatprep.subr.mxu0 0.0
        %1369 = vmatpush1.msra.mxu0 0.0
        %1370 = vmatprep.subr.mxu0 0.0
        %1371 = vmatpush1.msra.mxu0 0.0
        %1372 = vmatprep.subr.mxu0 0.0
        %1373 = vmatpush1.msra.mxu0 0.0
        %1374 = vmatprep.subr.mxu0 0.0
        %1375 = vmatpush1.msra.mxu0 0.0
        %1376 = vmatprep.subr.mxu0 0.0
        %1377 = vmatpush1.msra.mxu0 0.0
        %1378 = vmatprep.mubr.f32.mxu0 0.0
        %1379 = vmatmul.mubr.f32.gmra.mrb[0].mxu0 %v1232
        %v1380 = vpop.f32.mrb[0].mxu0
        %v1381 = vadd.f32 0.0, %v1380
        %v1382 = vpop.f32.mrb[0].mxu0
        %v1383 = vadd.f32 0.0, %v1382
        %1384 = vdwg.mxu0
        %v1385 = vadd.f32 %v1239, %v1310
        %v1386 = vadd.f32 %v1240, %v1312
        %v1387 = vadd.f32 %v1241, %v1381
        %v1388 = vadd.f32 %v1242, %v1383
        %v1389 = vxor.u32 %v1385, 2147483648
        %v1390 = vmul.f32 %v1389, 1.442695
        %v1391 = vpow.pop %v1390
        %v1392 = vadd.f32 %v1391, 1.0
        %v1393 = vrcp.pop %v1392
        %v1394 = vmul.f32 1.0, %v1393
        %v1395 = vxor.u32 %v1386, 2147483648
        %v1396 = vmul.f32 %v1395, 1.442695
        %v1397 = vpow.pop %v1396
        %v1398 = vadd.f32 %v1397, 1.0
        %v1399 = vrcp.pop %v1398
        %v1400 = vmul.f32 1.0, %v1399
        %v1401 = vtanh.pop %v1387
        %v1402 = vxor.u32 %v1388, 2147483648
        %v1403 = vmul.f32 %v1402, 1.442695
        %v1404 = vpow.pop %v1403
        %v1405 = vadd.f32 %v1404, 1.0
        %v1406 = vrcp.pop %v1405
        %v1407 = vmul.f32 1.0, %v1406
        %v1408 = vmul.f32 %v1400, %v1230
        %v1409 = vmul.f32 %v1394, %v1401
        %v1410 = vadd.f32 %v1408, %v1409
        %v1411 = vtanh.pop %v1410
        %v1412 = vmul.f32 %v1407, %v1411
        %v1413 = vpack.c.bf16 %v1412, %v1412
        %s1414 = scalar_lea.vmem %s206, 20 [#allocation4]
        %1415 = vst [vmem:[%s1414] sm:$0xf] %v1413
        %s1416 = scalar_lea.vmem %s222, 96
        %v1417 = vld [vmem:[%s1416] sm:$0xff]
        %v1418 = vld [vmem:[%s1416 + $0x8] sm:$0xff]
        %v1419 = vunpack.c.l.bf16 %v1417
        %v1420 = vunpack.c.h.bf16 %v1417
        %v1421 = vunpack.c.l.bf16 %v1418
        %v1422 = vunpack.c.h.bf16 %v1418
        %1423 = vmatprep.subr.mxu0 %v273
        %1424 = vmatpush1.msra.mxu0 %v272
        %1425 = vmatprep.subr.mxu0 %v277
        %1426 = vmatpush1.msra.mxu0 %v276
        %1427 = vmatprep.subr.mxu0 %v281
        %1428 = vmatpush1.msra.mxu0 %v280
        %1429 = vmatprep.subr.mxu0 %v285
        %1430 = vmatpush1.msra.mxu0 %v284
        %1431 = vmatprep.subr.mxu0 %v289
        %1432 = vmatpush1.msra.mxu0 %v288
        %1433 = vmatprep.subr.mxu0 %v293
        %1434 = vmatpush1.msra.mxu0 %v292
        %1435 = vmatprep.subr.mxu0 %v297
        %1436 = vmatpush1.msra.mxu0 %v296
        %1437 = vmatprep.subr.mxu0 %v301
        %1438 = vmatpush1.msra.mxu0 %v300
        %1439 = vmatprep.subr.mxu0 %v305
        %1440 = vmatpush1.msra.mxu0 %v304
        %1441 = vmatprep.subr.mxu0 %v309
        %1442 = vmatpush1.msra.mxu0 %v308
        %1443 = vmatprep.subr.mxu0 %v313
        %1444 = vmatpush1.msra.mxu0 %v312
        %1445 = vmatprep.subr.mxu0 %v317
        %1446 = vmatpush1.msra.mxu0 %v316
        %1447 = vmatprep.subr.mxu0 %v321
        %1448 = vmatpush1.msra.mxu0 %v320
        %1449 = vmatprep.subr.mxu0 %v325
        %1450 = vmatpush1.msra.mxu0 %v324
        %1451 = vmatprep.subr.mxu0 %v329
        %1452 = vmatpush1.msra.mxu0 %v328
        %1453 = vmatprep.subr.mxu0 %v333
        %1454 = vmatpush1.msra.mxu0 %v332
        %1455 = vmatprep.subr.mxu0 0.0
        %1456 = vmatpush1.msra.mxu0 0.0
        %1457 = vmatprep.subr.mxu0 0.0
        %1458 = vmatpush1.msra.mxu0 0.0
        %1459 = vmatprep.subr.mxu0 0.0
        %1460 = vmatpush1.msra.mxu0 0.0
        %1461 = vmatprep.subr.mxu0 0.0
        %1462 = vmatpush1.msra.mxu0 0.0
        %1463 = vmatprep.subr.mxu0 0.0
        %1464 = vmatpush1.msra.mxu0 0.0
        %1465 = vmatprep.subr.mxu0 0.0
        %1466 = vmatpush1.msra.mxu0 0.0
        %1467 = vmatprep.subr.mxu0 0.0
        %1468 = vmatpush1.msra.mxu0 0.0
        %1469 = vmatprep.subr.mxu0 0.0
        %1470 = vmatpush1.msra.mxu0 0.0
        %1471 = vmatprep.subr.mxu0 0.0
        %1472 = vmatpush1.msra.mxu0 0.0
        %1473 = vmatprep.subr.mxu0 0.0
        %1474 = vmatpush1.msra.mxu0 0.0
        %1475 = vmatprep.subr.mxu0 0.0
        %1476 = vmatpush1.msra.mxu0 0.0
        %1477 = vmatprep.subr.mxu0 0.0
        %1478 = vmatpush1.msra.mxu0 0.0
        %1479 = vmatprep.subr.mxu0 0.0
        %1480 = vmatpush1.msra.mxu0 0.0
        %1481 = vmatprep.subr.mxu0 0.0
        %1482 = vmatpush1.msra.mxu0 0.0
        %1483 = vmatprep.subr.mxu0 0.0
        %1484 = vmatpush1.msra.mxu0 0.0
        %1485 = vmatprep.subr.mxu0 0.0
        %1486 = vmatpush1.msra.mxu0 0.0
        %1487 = vmatprep.mubr.f32.mxu0 0.0
        %1488 = vmatmul.mubr.f32.gmra.mrb[0].mxu0 %v1412
        %v1489 = vpop.f32.mrb[0].mxu0
        %v1490 = vadd.f32 0.0, %v1489
        %v1491 = vpop.f32.mrb[0].mxu0
        %v1492 = vadd.f32 0.0, %v1491
        %1493 = vdwg.mxu0
        %1494 = vmatprep.subr.mxu0 %v275
        %1495 = vmatpush1.msra.mxu0 %v274
        %1496 = vmatprep.subr.mxu0 %v279
        %1497 = vmatpush1.msra.mxu0 %v278
        %1498 = vmatprep.subr.mxu0 %v283
        %1499 = vmatpush1.msra.mxu0 %v282
        %1500 = vmatprep.subr.mxu0 %v287
        %1501 = vmatpush1.msra.mxu0 %v286
        %1502 = vmatprep.subr.mxu0 %v291
        %1503 = vmatpush1.msra.mxu0 %v290
        %1504 = vmatprep.subr.mxu0 %v295
        %1505 = vmatpush1.msra.mxu0 %v294
        %1506 = vmatprep.subr.mxu0 %v299
        %1507 = vmatpush1.msra.mxu0 %v298
        %1508 = vmatprep.subr.mxu0 %v303
        %1509 = vmatpush1.msra.mxu0 %v302
        %1510 = vmatprep.subr.mxu0 %v307
        %1511 = vmatpush1.msra.mxu0 %v306
        %1512 = vmatprep.subr.mxu0 %v311
        %1513 = vmatpush1.msra.mxu0 %v310
        %1514 = vmatprep.subr.mxu0 %v315
        %1515 = vmatpush1.msra.mxu0 %v314
        %1516 = vmatprep.subr.mxu0 %v319
        %1517 = vmatpush1.msra.mxu0 %v318
        %1518 = vmatprep.subr.mxu0 %v323
        %1519 = vmatpush1.msra.mxu0 %v322
        %1520 = vmatprep.subr.mxu0 %v327
        %1521 = vmatpush1.msra.mxu0 %v326
        %1522 = vmatprep.subr.mxu0 %v331
        %1523 = vmatpush1.msra.mxu0 %v330
        %1524 = vmatprep.subr.mxu0 %v335
        %1525 = vmatpush1.msra.mxu0 %v334
        %1526 = vmatprep.subr.mxu0 0.0
        %1527 = vmatpush1.msra.mxu0 0.0
        %1528 = vmatprep.subr.mxu0 0.0
        %1529 = vmatpush1.msra.mxu0 0.0
        %1530 = vmatprep.subr.mxu0 0.0
        %1531 = vmatpush1.msra.mxu0 0.0
        %1532 = vmatprep.subr.mxu0 0.0
        %1533 = vmatpush1.msra.mxu0 0.0
        %1534 = vmatprep.subr.mxu0 0.0
        %1535 = vmatpush1.msra.mxu0 0.0
        %1536 = vmatprep.subr.mxu0 0.0
        %1537 = vmatpush1.msra.mxu0 0.0
        %1538 = vmatprep.subr.mxu0 0.0
        %1539 = vmatpush1.msra.mxu0 0.0
        %1540 = vmatprep.subr.mxu0 0.0
        %1541 = vmatpush1.msra.mxu0 0.0
        %1542 = vmatprep.subr.mxu0 0.0
        %1543 = vmatpush1.msra.mxu0 0.0
        %1544 = vmatprep.subr.mxu0 0.0
        %1545 = vmatpush1.msra.mxu0 0.0
        %1546 = vmatprep.subr.mxu0 0.0
        %1547 = vmatpush1.msra.mxu0 0.0
        %1548 = vmatprep.subr.mxu0 0.0
        %1549 = vmatpush1.msra.mxu0 0.0
        %1550 = vmatprep.subr.mxu0 0.0
        %1551 = vmatpush1.msra.mxu0 0.0
        %1552 = vmatprep.subr.mxu0 0.0
        %1553 = vmatpush1.msra.mxu0 0.0
        %1554 = vmatprep.subr.mxu0 0.0
        %1555 = vmatpush1.msra.mxu0 0.0
        %1556 = vmatprep.subr.mxu0 0.0
        %1557 = vmatpush1.msra.mxu0 0.0
        %1558 = vmatprep.mubr.f32.mxu0 0.0
        %1559 = vmatmul.mubr.f32.gmra.mrb[0].mxu0 %v1412
        %v1560 = vpop.f32.mrb[0].mxu0
        %v1561 = vadd.f32 0.0, %v1560
        %v1562 = vpop.f32.mrb[0].mxu0
        %v1563 = vadd.f32 0.0, %v1562
        %1564 = vdwg.mxu0
        %v1565 = vadd.f32 %v1419, %v1490
        %v1566 = vadd.f32 %v1420, %v1492
        %v1567 = vadd.f32 %v1421, %v1561
        %v1568 = vadd.f32 %v1422, %v1563
        %v1569 = vxor.u32 %v1565, 2147483648
        %v1570 = vmul.f32 %v1569, 1.442695
        %v1571 = vpow.pop %v1570
        %v1572 = vadd.f32 %v1571, 1.0
        %v1573 = vrcp.pop %v1572
        %v1574 = vmul.f32 1.0, %v1573
        %v1575 = vxor.u32 %v1566, 2147483648
        %v1576 = vmul.f32 %v1575, 1.442695
        %v1577 = vpow.pop %v1576
        %v1578 = vadd.f32 %v1577, 1.0
        %v1579 = vrcp.pop %v1578
        %v1580 = vmul.f32 1.0, %v1579
        %v1581 = vtanh.pop %v1567
        %v1582 = vxor.u32 %v1568, 2147483648
        %v1583 = vmul.f32 %v1582, 1.442695
        %v1584 = vpow.pop %v1583
        %v1585 = vadd.f32 %v1584, 1.0
        %v1586 = vrcp.pop %v1585
        %v1587 = vmul.f32 1.0, %v1586
        %v1588 = vmul.f32 %v1580, %v1410
        %v1589 = vmul.f32 %v1574, %v1581
        %v1590 = vadd.f32 %v1588, %v1589
        %v1591 = vtanh.pop %v1590
        %v1592 = vmul.f32 %v1587, %v1591
        %v1593 = vpack.c.bf16 %v1592, %v1592
        %s1594 = scalar_lea.vmem %s206, 24 [#allocation4]
        %1595 = vst [vmem:[%s1594] sm:$0xf] %v1593
        %s1596 = scalar_lea.vmem %s222, 112
        %v1597 = vld [vmem:[%s1596] sm:$0xff]
        %v1598 = vld [vmem:[%s1596 + $0x8] sm:$0xff]
        %v1599 = vunpack.c.l.bf16 %v1597
        %v1600 = vunpack.c.h.bf16 %v1597
        %v1601 = vunpack.c.l.bf16 %v1598
        %v1602 = vunpack.c.h.bf16 %v1598
        %1603 = vmatprep.subr.mxu0 %v273
        %1604 = vmatpush1.msra.mxu0 %v272
        %1605 = vmatprep.subr.mxu0 %v277
        %1606 = vmatpush1.msra.mxu0 %v276
        %1607 = vmatprep.subr.mxu0 %v281
        %1608 = vmatpush1.msra.mxu0 %v280
        %1609 = vmatprep.subr.mxu0 %v285
        %1610 = vmatpush1.msra.mxu0 %v284
        %1611 = vmatprep.subr.mxu0 %v289
        %1612 = vmatpush1.msra.mxu0 %v288
        %1613 = vmatprep.subr.mxu0 %v293
        %1614 = vmatpush1.msra.mxu0 %v292
        %1615 = vmatprep.subr.mxu0 %v297
        %1616 = vmatpush1.msra.mxu0 %v296
        %1617 = vmatprep.subr.mxu0 %v301
        %1618 = vmatpush1.msra.mxu0 %v300
        %1619 = vmatprep.subr.mxu0 %v305
        %1620 = vmatpush1.msra.mxu0 %v304
        %1621 = vmatprep.subr.mxu0 %v309
        %1622 = vmatpush1.msra.mxu0 %v308
        %1623 = vmatprep.subr.mxu0 %v313
        %1624 = vmatpush1.msra.mxu0 %v312
        %1625 = vmatprep.subr.mxu0 %v317
        %1626 = vmatpush1.msra.mxu0 %v316
        %1627 = vmatprep.subr.mxu0 %v321
        %1628 = vmatpush1.msra.mxu0 %v320
        %1629 = vmatprep.subr.mxu0 %v325
        %1630 = vmatpush1.msra.mxu0 %v324
        %1631 = vmatprep.subr.mxu0 %v329
        %1632 = vmatpush1.msra.mxu0 %v328
        %1633 = vmatprep.subr.mxu0 %v333
        %1634 = vmatpush1.msra.mxu0 %v332
        %1635 = vmatprep.subr.mxu0 0.0
        %1636 = vmatpush1.msra.mxu0 0.0
        %1637 = vmatprep.subr.mxu0 0.0
        %1638 = vmatpush1.msra.mxu0 0.0
        %1639 = vmatprep.subr.mxu0 0.0
        %1640 = vmatpush1.msra.mxu0 0.0
        %1641 = vmatprep.subr.mxu0 0.0
        %1642 = vmatpush1.msra.mxu0 0.0
        %1643 = vmatprep.subr.mxu0 0.0
        %1644 = vmatpush1.msra.mxu0 0.0
        %1645 = vmatprep.subr.mxu0 0.0
        %1646 = vmatpush1.msra.mxu0 0.0
        %1647 = vmatprep.subr.mxu0 0.0
        %1648 = vmatpush1.msra.mxu0 0.0
        %1649 = vmatprep.subr.mxu0 0.0
        %1650 = vmatpush1.msra.mxu0 0.0
        %1651 = vmatprep.subr.mxu0 0.0
        %1652 = vmatpush1.msra.mxu0 0.0
        %1653 = vmatprep.subr.mxu0 0.0
        %1654 = vmatpush1.msra.mxu0 0.0
        %1655 = vmatprep.subr.mxu0 0.0
        %1656 = vmatpush1.msra.mxu0 0.0
        %1657 = vmatprep.subr.mxu0 0.0
        %1658 = vmatpush1.msra.mxu0 0.0
        %1659 = vmatprep.subr.mxu0 0.0
        %1660 = vmatpush1.msra.mxu0 0.0
        %1661 = vmatprep.subr.mxu0 0.0
        %1662 = vmatpush1.msra.mxu0 0.0
        %1663 = vmatprep.subr.mxu0 0.0
        %1664 = vmatpush1.msra.mxu0 0.0
        %1665 = vmatprep.subr.mxu0 0.0
        %1666 = vmatpush1.msra.mxu0 0.0
        %1667 = vmatprep.mubr.f32.mxu0 0.0
        %1668 = vmatmul.mubr.f32.gmra.mrb[0].mxu0 %v1592
        %v1669 = vpop.f32.mrb[0].mxu0
        %v1670 = vadd.f32 0.0, %v1669
        %v1671 = vpop.f32.mrb[0].mxu0
        %v1672 = vadd.f32 0.0, %v1671
        %1673 = vdwg.mxu0
        %1674 = vmatprep.subr.mxu0 %v275
        %1675 = vmatpush1.msra.mxu0 %v274
        %1676 = vmatprep.subr.mxu0 %v279
        %1677 = vmatpush1.msra.mxu0 %v278
        %1678 = vmatprep.subr.mxu0 %v283
        %1679 = vmatpush1.msra.mxu0 %v282
        %1680 = vmatprep.subr.mxu0 %v287
        %1681 = vmatpush1.msra.mxu0 %v286
        %1682 = vmatprep.subr.mxu0 %v291
        %1683 = vmatpush1.msra.mxu0 %v290
        %1684 = vmatprep.subr.mxu0 %v295
        %1685 = vmatpush1.msra.mxu0 %v294
        %1686 = vmatprep.subr.mxu0 %v299
        %1687 = vmatpush1.msra.mxu0 %v298
        %1688 = vmatprep.subr.mxu0 %v303
        %1689 = vmatpush1.msra.mxu0 %v302
        %1690 = vmatprep.subr.mxu0 %v307
        %1691 = vmatpush1.msra.mxu0 %v306
        %1692 = vmatprep.subr.mxu0 %v311
        %1693 = vmatpush1.msra.mxu0 %v310
        %1694 = vmatprep.subr.mxu0 %v315
        %1695 = vmatpush1.msra.mxu0 %v314
        %1696 = vmatprep.subr.mxu0 %v319
        %1697 = vmatpush1.msra.mxu0 %v318
        %1698 = vmatprep.subr.mxu0 %v323
        %1699 = vmatpush1.msra.mxu0 %v322
        %1700 = vmatprep.subr.mxu0 %v327
        %1701 = vmatpush1.msra.mxu0 %v326
        %1702 = vmatprep.subr.mxu0 %v331
        %1703 = vmatpush1.msra.mxu0 %v330
        %1704 = vmatprep.subr.mxu0 %v335
        %1705 = vmatpush1.msra.mxu0 %v334
        %1706 = vmatprep.subr.mxu0 0.0
        %1707 = vmatpush1.msra.mxu0 0.0
        %1708 = vmatprep.subr.mxu0 0.0
        %1709 = vmatpush1.msra.mxu0 0.0
        %1710 = vmatprep.subr.mxu0 0.0
        %1711 = vmatpush1.msra.mxu0 0.0
        %1712 = vmatprep.subr.mxu0 0.0
        %1713 = vmatpush1.msra.mxu0 0.0
        %1714 = vmatprep.subr.mxu0 0.0
        %1715 = vmatpush1.msra.mxu0 0.0
        %1716 = vmatprep.subr.mxu0 0.0
        %1717 = vmatpush1.msra.mxu0 0.0
        %1718 = vmatprep.subr.mxu0 0.0
        %1719 = vmatpush1.msra.mxu0 0.0
        %1720 = vmatprep.subr.mxu0 0.0
        %1721 = vmatpush1.msra.mxu0 0.0
        %1722 = vmatprep.subr.mxu0 0.0
        %1723 = vmatpush1.msra.mxu0 0.0
        %1724 = vmatprep.subr.mxu0 0.0
        %1725 = vmatpush1.msra.mxu0 0.0
        %1726 = vmatprep.subr.mxu0 0.0
        %1727 = vmatpush1.msra.mxu0 0.0
        %1728 = vmatprep.subr.mxu0 0.0
        %1729 = vmatpush1.msra.mxu0 0.0
        %1730 = vmatprep.subr.mxu0 0.0
        %1731 = vmatpush1.msra.mxu0 0.0
        %1732 = vmatprep.subr.mxu0 0.0
        %1733 = vmatpush1.msra.mxu0 0.0
        %1734 = vmatprep.subr.mxu0 0.0
        %1735 = vmatpush1.msra.mxu0 0.0
        %1736 = vmatprep.subr.mxu0 0.0
        %1737 = vmatpush1.msra.mxu0 0.0
        %1738 = vmatprep.mubr.f32.mxu0 0.0
        %1739 = vmatmul.mubr.f32.gmra.mrb[0].mxu0 %v1592
        %v1740 = vpop.f32.mrb[0].mxu0
        %v1741 = vadd.f32 0.0, %v1740
        %v1742 = vpop.f32.mrb[0].mxu0
        %v1743 = vadd.f32 0.0, %v1742
        %1744 = vdwg.mxu0
        %v1745 = vadd.f32 %v1599, %v1670
        %v1746 = vadd.f32 %v1600, %v1672
        %v1747 = vadd.f32 %v1601, %v1741
        %v1748 = vadd.f32 %v1602, %v1743
        %v1749 = vxor.u32 %v1745, 2147483648
        %v1750 = vmul.f32 %v1749, 1.442695
        %v1751 = vpow.pop %v1750
        %v1752 = vadd.f32 %v1751, 1.0
        %v1753 = vrcp.pop %v1752
        %v1754 = vmul.f32 1.0, %v1753
        %v1755 = vxor.u32 %v1746, 2147483648
        %v1756 = vmul.f32 %v1755, 1.442695
        %v1757 = vpow.pop %v1756
        %v1758 = vadd.f32 %v1757, 1.0
        %v1759 = vrcp.pop %v1758
        %v1760 = vmul.f32 1.0, %v1759
        %v1761 = vtanh.pop %v1747
        %v1762 = vxor.u32 %v1748, 2147483648
        %v1763 = vmul.f32 %v1762, 1.442695
        %v1764 = vpow.pop %v1763
        %v1765 = vadd.f32 %v1764, 1.0
        %v1766 = vrcp.pop %v1765
        %v1767 = vmul.f32 1.0, %v1766
        %v1768 = vmul.f32 %v1760, %v1590
        %v1769 = vmul.f32 %v1754, %v1761
        %v1770 = vadd.f32 %v1768, %v1769
        %v1771 = vtanh.pop %v1770
        %v1772 = vmul.f32 %v1767, %v1771
        %v1773 = vpack.c.bf16 %v1772, %v1772
        %s1774 = scalar_lea.vmem %s206, 28 [#allocation4]
        %1775 = vst [vmem:[%s1774] sm:$0xf] %v1773
        %1776 = vst [vmem:[#allocation2] sm:$0xff] %v1772
        %1777 = vst [vmem:[#allocation3] sm:$0xff] %v1770
        // Predicated region
        $region33: #{rnn_model_forward.4} parent=27 // pred_check
          %p1778 = pneg %p234
        $region34: #{rnn_model_forward.4} parent=27 // pred_check_branch
          %1780 = sbr.rel (%p1778) target = $region36
        $region35: #{rnn_model_forward.4} parent=27 // pred_region
          %1781 = vst [vmem:[%s233] sm:$0xff] %v1772
        $region36: #{rnn_model_forward.4} parent=27 // pred_fallthru
          _
        %s1782 = sand.u32 %s94, 1
        %s1783 = scalar_lea.sflag [#allocation5], %s1782
        %s1784 = sand.u32 %s94, 1
        %s1785 = smul.addr %s1784, 32
        %s1786 = scalar_lea.vmem [#allocation4], %s1785
        %p1787 = scmp.lt.s32.totalorder %s22, 1
        %s1788 = scalar_select %p1787, %s22, 1
        %s1789 = smul.addr %s1788, 8
        %s1790 = scalar_lea.vmem %s3, %s1789
        // Predicated region
        $region37: #{rnn_model_forward.4} parent=27 // pred_check
          %p1791 = pneg %p104
        $region38: #{rnn_model_forward.4} parent=27 // pred_check_branch
          %1793 = sbr.rel (%p1791) target = $region40
        $region39: #{rnn_model_forward.4} parent=27 // pred_region
          %s1794 = smul.u32 8, %s23
          %s1796 = ssub.s32 512, 512
          %1797 = vsyncadd %s1783, %s1796
          %s1798 = smul.addr %s22, 8
          %s1799 = sadd.s32 %s1794, %s1798
          %s1800 = smul.addr %s1799, 64
          %s1801 = scalar_lea.hbm %s2, %s1800
          %s1802 = sshll.u32 %s1786, 4
          %s1803 = int_to_ptr.vmem [resolvable:$true] %s1802
          %1808 = dma.vmem_to_hbm [thread:$0]  %s1803, 512, %s1801, %s1783, 64, 64, 4
        $region40: #{rnn_model_forward.4} parent=27 // pred_fallthru
          _
        // Predicated region
        $region41: #{rnn_model_forward.4} parent=27 // pred_check
          %p1809 = pneg %p130
        $region42: #{rnn_model_forward.4} parent=27 // pred_check_branch
          %1811 = sbr.rel (%p1809) target = $region44
        $region43: #{rnn_model_forward.4} parent=27 // pred_region
          _
        $region44: #{rnn_model_forward.4} parent=27 // pred_fallthru
          _
      $region28: #{rnn_model_forward.4} parent=5 // pred_fallthru
        _
      %p1812 = scmp.le.s32.totalorder 2, %s13
      // Predicated region
      $region45: #{rnn_model_forward.4} parent=5 // pred_check
        %p1813 = pneg %p1812
      $region46: #{rnn_model_forward.4} parent=5 // pred_check_branch
        %1815 = sbr.rel (%p1813) target = $region48
      $region47: #{rnn_model_forward.4} parent=5 // pred_region
        %s1816 = ssub.s32 %s13, 2
        // Predicated region
        $region49: #{rnn_model_forward.4} parent=47 // pred_check
          %p1817 = pneg %p110
        $region50: #{rnn_model_forward.4} parent=47 // pred_check_branch
          %1819 = sbr.rel (%p1817) target = $region52
        $region51: #{rnn_model_forward.4} parent=47 // pred_region
          %s1820 = sand.u32 %s95, 1
          %s1821 = scalar_lea.sflag [#allocation5], %s1820
          %s1822 = sand.u32 %s95, 1
          %s1823 = smul.addr %s1822, 32
          %s1824 = scalar_lea.vmem [#allocation4], %s1823
          %1825 = dma.done %s1821, 512
        $region52: #{rnn_model_forward.4} parent=47 // pred_fallthru
          _
        // Predicated region
        $region53: #{rnn_model_forward.4} parent=47 // pred_check
          %p1826 = pneg %p136
        $region54: #{rnn_model_forward.4} parent=47 // pred_check_branch
          %1828 = sbr.rel (%p1826) target = $region56
        $region55: #{rnn_model_forward.4} parent=47 // pred_region
          %p1829 = scmp.lt.s32.totalorder %s24, 1
          %s1830 = scalar_select %p1829, %s24, 1
          %s1831 = smul.addr %s1830, 8
          %s1832 = scalar_lea.vmem %s3, %s1831
        $region56: #{rnn_model_forward.4} parent=47 // pred_fallthru
          _
      $region48: #{rnn_model_forward.4} parent=5 // pred_fallthru
        _
    $region6: #{rnn_model_forward.4} parent=1 // loop_footer
      %s17 = sadd.s32 1, %s13
    $region7: #{rnn_model_forward.4} parent=1 // loop_footer_branch
      %12 = sbr.rel target = $region3
    $region8: #{rnn_model_forward.4} parent=1 // loop_exit
      _
    %1833 = vsyncpa [#allocation5], 1
    %s1834 = scalar_lea.sflag [#allocation5], 1
    %1835 = vsyncpa %s1834, 1

</llo_original>
